<compile_context>
chip_gen: v7x
topology: tpu7x:2x2x1
jax: 0.10.0
libtpu: 0.0.40
codegen_flags: <defaults>
</compile_context>

<pallas_src>
import functools
import math

import jax
import jax.numpy as jnp
from jax.experimental import pallas as pl
from jax.experimental.pallas import tpu as pltpu

LN_EPS = 1e-5
BN_EPS = 1e-5
_VMEM_LIMIT = 48 * 1024 * 1024     # leaves headroom under v7x's 64 MiB physical VMEM


def _compiler_params(n_axes=1):
    return pltpu.CompilerParams(
        dimension_semantics=("parallel",) * n_axes,
        vmem_limit_bytes=_VMEM_LIMIT)


def _pick_tile(m, target=256):
    """Largest multiple-of-8 divisor of m that is <= target (else m itself)."""
    if m <= target:
        return m
    for cand in range(target - target % 8, 7, -8):
        if m % cand == 0:
            return cand
    return m


def _const_spec(shape):
    return pl.BlockSpec(shape, lambda *_: (0,) * len(shape))


# --------------------------------------------------------------------------
# in-kernel math helpers
# --------------------------------------------------------------------------
def _bf16(x):
    return x.astype(jnp.bfloat16)


def _layernorm(x, gamma, beta):
    mu = jnp.mean(x, axis=-1, keepdims=True)
    var = jnp.mean(jnp.square(x - mu), axis=-1, keepdims=True)
    return (x - mu) * jax.lax.rsqrt(var + LN_EPS) * gamma + beta


def _erf(x):
    # TODO(synk): exact nn.GELU needs erf; the Abramowitz&Stegun 7.1.26
    # polynomial (|err| < 1.5e-7) stands in so the GELU stays inside the
    # kernel with guaranteed Mosaic lowering.
    p = 0.3275911
    a1, a2, a3, a4, a5 = (0.254829592, -0.284496736, 1.421413741,
                          -1.453152027, 1.061405429)
    ax = jnp.abs(x)
    t = 1.0 / (1.0 + p * ax)
    poly = ((((a5 * t + a4) * t + a3) * t + a2) * t + a1) * t
    y = 1.0 - poly * jnp.exp(-ax * ax)
    return jnp.where(x >= 0.0, y, -y)


def _gelu(x):
    return 0.5 * x * (1.0 + _erf(x * (1.0 / math.sqrt(2.0))))


def _silu(x):
    return x * jax.nn.sigmoid(x)


def _relative_shift(pos):
    """In-kernel replica of the zero-pad / reshape / drop-row relative shift.

    shifted[r, c] = W[r, c + (S-1-r)] with W = [pos | 0-col | pos-shifted-up];
    the per-row left-roll is realized as log2(S) static lane rolls plus
    row-masked selects — VMEM only, no HBM round trip, no in-kernel reshape.
    """
    s = pos.shape[0]
    pos_down = jnp.concatenate(
        [pos[1:, :], jnp.zeros((1, s), jnp.float32)], axis=0)
    w = jnp.concatenate(
        [pos, jnp.zeros((s, 1), jnp.float32), pos_down], axis=-1)   # (S, 2S+1)
    rows = jax.lax.broadcasted_iota(jnp.int32, (s, 1), 0)
    amount = (s - 1) - rows                                         # per-row left roll
    for b in range(max(1, (s - 1).bit_length())):
        step = 1 << b
        rolled = jnp.concatenate([w[:, step:], w[:, :step]], axis=-1)
        w = jnp.where((amount & step) != 0, rolled, w)
    return w[:, :s]


# --------------------------------------------------------------------------
# Pallas kernels
# --------------------------------------------------------------------------
def _ffn_kernel(*refs, final_ln):
    # LayerNorm -> Linear(D,4D) -> SiLU -> Linear(4D,D) -> 0.5*y + x [-> LayerNorm]
    if final_ln:
        (x_ref, g_ref, b_ref, w1_ref, b1_ref, w2_ref, b2_ref,
         lng_ref, lnb_ref, o_ref) = refs
    else:
        x_ref, g_ref, b_ref, w1_ref, b1_ref, w2_ref, b2_ref, o_ref = refs
    x = x_ref[...]
    h = _layernorm(x, g_ref[...], b_ref[...])
    h = jnp.dot(_bf16(h), w1_ref[...],
                preferred_element_type=jnp.float32) + b1_ref[...]
    h = _silu(h)                                    # Dropout = identity (inference)
    y = jnp.dot(_bf16(h), w2_ref[...],
                preferred_element_type=jnp.float32) + b2_ref[...]
    y = 0.5 * y + x                                 # fused residual add
    if final_ln:
        y = _layernorm(y, lng_ref[...], lnb_ref[...])   # fused trailing block LN
    o_ref[...] = y


def _attention_kernel(x_ref, wq_ref, wk_ref, wv_ref, bq_ref, bk_ref, bv_ref,
                      pe_ref, wp_ref, u_ref, vbias_ref, wo_ref, bo_ref, o_ref,
                      *, n_heads, scale):
    x = x_ref[0]                                    # (S, D) fp32
    s, d = x.shape
    dh = d // n_heads
    xb = _bf16(x)
    q = jnp.dot(xb, wq_ref[...], preferred_element_type=jnp.float32) + bq_ref[...]
    k = jnp.dot(xb, wk_ref[...], preferred_element_type=jnp.float32) + bk_ref[...]
    v = jnp.dot(xb, wv_ref[...], preferred_element_type=jnp.float32) + bv_ref[...]
    p = jnp.dot(_bf16(pe_ref[...]), wp_ref[...],
                preferred_element_type=jnp.float32)  # positional projection (no bias)
    q_u = _bf16(q + u_ref[...])
    q_v = _bf16(q + vbias_ref[...])
    kb, vb, pb = _bf16(k), _bf16(v), _bf16(p)
    dn = (((1,), (1,)), ((), ()))                    # A @ B.T on the MXU

    ctx = []
    for h in range(n_heads):                         # heads packed along lanes
        sl = slice(h * dh, (h + 1) * dh)
        content = jax.lax.dot_general(q_u[:, sl], kb[:, sl], dn,
                                      preferred_element_type=jnp.float32)
        pos = jax.lax.dot_general(q_v[:, sl], pb[:, sl], dn,
                                  preferred_element_type=jnp.float32)
        score = (content + _relative_shift(pos)) * scale
        score = score - jnp.max(score, axis=-1, keepdims=True)
        e = jnp.exp(score)
        attn = e / jnp.sum(e, axis=-1, keepdims=True)
        ctx.append(jnp.dot(_bf16(attn), vb[:, sl],
                           preferred_element_type=jnp.float32))
    ctx = jnp.concatenate(ctx, axis=-1)              # (S, D), lane-dense store path
    out = jnp.dot(_bf16(ctx), wo_ref[...],
                  preferred_element_type=jnp.float32) + bo_ref[...]
    o_ref[0] = out + x                               # fused residual add


def _conv_kernel(x_ref, lng_ref, lnb_ref, w1_ref, b1_ref, dww_ref, dwb_ref,
                 bng_ref, bnb_ref, bnm_ref, bnv_ref, w2_ref, b2_ref, o_ref,
                 *, ksize):
    x = x_ref[0]                                     # (S, D)
    s = x.shape[0]
    h = _layernorm(x, lng_ref[...], lnb_ref[...])
    h = jnp.dot(_bf16(h), w1_ref[...],
                preferred_element_type=jnp.float32) + b1_ref[...]   # (S, 2D)
    h = _gelu(h)
    c = h.shape[-1]
    # depthwise Conv1d, padding='same' (zero-fill handled with shifted slices)
    pad_l = (ksize - 1) // 2
    dw = dww_ref[...]                                # (K, 2D)
    acc = jnp.zeros_like(h)
    for kk in range(ksize):
        off = kk - pad_l
        if off >= s or off <= -s:
            shifted = jnp.zeros_like(h)
        elif off == 0:
            shifted = h
        elif off > 0:
            shifted = jnp.concatenate(
                [h[off:, :], jnp.zeros((off, c), jnp.float32)], axis=0)
        else:
            shifted = jnp.concatenate(
                [jnp.zeros((-off, c), jnp.float32), h[:s + off, :]], axis=0)
        acc = acc + shifted * dw[kk:kk + 1, :]
    acc = acc + dwb_ref[...]
    # BatchNorm1d (inference: running statistics) + SiLU
    acc = (acc - bnm_ref[...]) * jax.lax.rsqrt(bnv_ref[...] + BN_EPS)
    acc = acc * bng_ref[...] + bnb_ref[...]
    acc = _silu(acc)
    y = jnp.dot(_bf16(acc), w2_ref[...],
                preferred_element_type=jnp.float32) + b2_ref[...]
    o_ref[0] = y + x                                 # fused residual (Dropout = id)


# --------------------------------------------------------------------------
# wrappers
# --------------------------------------------------------------------------
def _feed_forward(x, p, final_ln=None):
    bsz, s, d = x.shape
    m = bsz * s
    d4 = p["w1"].shape[1]
    tm = _pick_tile(m)
    xf = x.reshape(m, d)
    row_spec = pl.BlockSpec((tm, d), lambda i: (i, 0))
    args = [xf,
            p["ln_g"].reshape(1, d), p["ln_b"].reshape(1, d),
            _bf16(p["w1"]), p["b1"].reshape(1, d4),
            _bf16(p["w2"]), p["b2"].reshape(1, d)]
    in_specs = [row_spec,
                _const_spec((1, d)), _const_spec((1, d)),
                _const_spec((d, d4)), _const_spec((1, d4)),
                _const_spec((d4, d)), _const_spec((1, d))]
    if final_ln is not None:
        lng, lnb = final_ln
        args += [lng.reshape(1, d), lnb.reshape(1, d)]
        in_specs += [_const_spec((1, d)), _const_spec((1, d))]
    out = pl.pallas_call(
        functools.partial(_ffn_kernel, final_ln=final_ln is not None),
        grid=(m // tm,),
        in_specs=in_specs,
        out_specs=row_spec,
        out_shape=jax.ShapeDtypeStruct((m, d), jnp.float32),
        compiler_params=_compiler_params(),
    )(*args)
    return out.reshape(bsz, s, d)


def _positional_encoding(s, d):
    # sinusoidal table; pure constant under jit (folded at compile time)
    pos = jnp.arange(s, dtype=jnp.float32)[:, None]
    i = jnp.arange(d // 2, dtype=jnp.float32)[None, :]
    angle = pos / jnp.power(10000.0, 2.0 * i / d)
    pe = jnp.zeros((s, d), jnp.float32)
    pe = pe.at[:, 0::2].set(jnp.sin(angle))
    pe = pe.at[:, 1::2].set(jnp.cos(angle))
    return pe


def _attention(x, p, n_heads):
    bsz, s, d = x.shape
    wqkv = _bf16(p["w_qkv"])
    wq, wk, wv = wqkv[:, :d], wqkv[:, d:2 * d], wqkv[:, 2 * d:]
    bq = p["b_qkv"][:d].reshape(1, d)
    bk = p["b_qkv"][d:2 * d].reshape(1, d)
    bv = p["b_qkv"][2 * d:].reshape(1, d)
    pe = _positional_encoding(s, d)
    batch_spec = pl.BlockSpec((1, s, d), lambda b: (b, 0, 0))
    return pl.pallas_call(
        functools.partial(_attention_kernel, n_heads=n_heads,
                          scale=1.0 / math.sqrt(d)),
        grid=(bsz,),
        in_specs=[batch_spec,
                  _const_spec((d, d)), _const_spec((d, d)), _const_spec((d, d)),
                  _const_spec((1, d)), _const_spec((1, d)), _const_spec((1, d)),
                  _const_spec((s, d)), _const_spec((d, d)),
                  _const_spec((1, d)), _const_spec((1, d)),
                  _const_spec((d, d)), _const_spec((1, d))],
        out_specs=batch_spec,
        out_shape=jax.ShapeDtypeStruct((bsz, s, d), jnp.float32),
        compiler_params=_compiler_params(),
    )(x, wq, wk, wv, bq, bk, bv, pe, _bf16(p["w_pos"]),
      p["u_bias"].reshape(1, d), p["v_bias"].reshape(1, d),
      _bf16(p["w_out"]), p["b_out"].reshape(1, d))


def _conv_module(x, p, kernel_size):
    bsz, s, d = x.shape
    d2 = 2 * d
    batch_spec = pl.BlockSpec((1, s, d), lambda b: (b, 0, 0))
    return pl.pallas_call(
        functools.partial(_conv_kernel, ksize=kernel_size),
        grid=(bsz,),
        in_specs=[batch_spec,
                  _const_spec((1, d)), _const_spec((1, d)),
                  _const_spec((d, d2)), _const_spec((1, d2)),
                  _const_spec((kernel_size, d2)), _const_spec((1, d2)),
                  _const_spec((1, d2)), _const_spec((1, d2)),
                  _const_spec((1, d2)), _const_spec((1, d2)),
                  _const_spec((d2, d)), _const_spec((1, d))],
        out_specs=batch_spec,
        out_shape=jax.ShapeDtypeStruct((bsz, s, d), jnp.float32),
        compiler_params=_compiler_params(),
    )(x, p["ln_g"].reshape(1, d), p["ln_b"].reshape(1, d),
      _bf16(p["pw1_w"]), p["pw1_b"].reshape(1, d2),
      p["dw_w"], p["dw_b"].reshape(1, d2),
      p["bn_g"].reshape(1, d2), p["bn_b"].reshape(1, d2),
      p["bn_m"].reshape(1, d2), p["bn_v"].reshape(1, d2),
      _bf16(p["pw2_w"]), p["pw2_b"].reshape(1, d))


def conformer_block(x, params, *, n_heads, kernel_size):
    x = _feed_forward(x, params["ff1"])                        # 0.5*FF1(x) + x
    x = _attention(x, params["attn"], n_heads)                 # MHSA(x) + x
    x = _conv_module(x, params["conv"], kernel_size)           # Conv(x) + x
    x = _feed_forward(x, params["ff2"],
                      final_ln=(params["ln_g"], params["ln_b"]))  # 0.5*FF2+x, LN
    return x


# --------------------------------------------------------------------------
# deterministic parameter init (shapes follow the PyTorch __init__)
# --------------------------------------------------------------------------
def init_params(key, d, n_heads, kernel_size):
    d4, d2, dh = 4 * d, 2 * d, d // n_heads
    keys = iter(jax.random.split(key, 40))

    def nrm(shape, scale=0.05):
        return scale * jax.random.normal(next(keys), shape, dtype=jnp.float32)

    def ffn_p():
        return dict(ln_g=1.0 + nrm((d,), 0.02), ln_b=nrm((d,), 0.02),
                    w1=nrm((d, d4)), b1=nrm((d4,)),
                    w2=nrm((d4, d)), b2=nrm((d,)))

    return dict(
        ff1=ffn_p(),
        ff2=ffn_p(),
        attn=dict(w_qkv=nrm((d, 3 * d)), b_qkv=nrm((3 * d,)),
                  w_pos=nrm((d, d)),
                  u_bias=nrm((n_heads, dh)), v_bias=nrm((n_heads, dh)),
                  w_out=nrm((d, d)), b_out=nrm((d,))),
        conv=dict(ln_g=1.0 + nrm((d,), 0.02), ln_b=nrm((d,), 0.02),
                  pw1_w=nrm((d, d2)), pw1_b=nrm((d2,)),
                  dw_w=nrm((kernel_size, d2)), dw_b=nrm((d2,)),
                  bn_g=1.0 + nrm((d2,), 0.02), bn_b=nrm((d2,), 0.02),
                  bn_m=nrm((d2,), 0.02),
                  bn_v=1.0 + 0.1 * jax.random.uniform(next(keys), (d2,),
                                                      dtype=jnp.float32),
                  pw2_w=nrm((d2, d)), pw2_b=nrm((d,))),
        ln_g=1.0 + nrm((d,), 0.02),
        ln_b=nrm((d,), 0.02),
    )


if __name__ == "__main__":
    B, S, D, H, K = 2, 8, 32, 4, 3
    pkey, xkey = jax.random.split(jax.random.PRNGKey(0))
    params = init_params(pkey, D, H, K)
    x = jax.random.normal(xkey, (B, S, D), dtype=jnp.float32)

    fwd = jax.jit(functools.partial(conformer_block, n_heads=H, kernel_size=K))
    out = jax.block_until_ready(fwd(x, params))
    assert out.shape == (B, S, D) and bool(jnp.all(jnp.isfinite(out)))
    print("KERNEL_OK")
</pallas_src>

<mosaic_0001>
module attributes {stable_mosaic.version = 11 : i64} {
  func.func @_ffn_kernel(%arg0: i32, %arg1: memref<16x32xf32, #tpu.memory_space<vmem>>, %arg2: memref<1x32xf32, #tpu.memory_space<vmem>>, %arg3: memref<1x32xf32, #tpu.memory_space<vmem>>, %arg4: memref<32x128xbf16, #tpu.memory_space<vmem>>, %arg5: memref<1x128xf32, #tpu.memory_space<vmem>>, %arg6: memref<128x32xbf16, #tpu.memory_space<vmem>>, %arg7: memref<1x32xf32, #tpu.memory_space<vmem>>, %arg8: memref<16x32xf32, #tpu.memory_space<vmem>>) attributes {dimension_semantics = [#tpu.dimension_semantics<parallel>], iteration_bounds = array<i64: 1>, scalar_prefetch = 0 : i64, scratch_operands = 0 : i64, tpu.core_type = #tpu.core_type<tc>, window_params = [{transform_indices = @transform_0, window_bounds = array<i64: 16, 32>}, {pipeline_mode = #tpu.pipeline_mode<synchronous>, transform_indices = @transform_1, window_bounds = array<i64: 1, 32>}, {pipeline_mode = #tpu.pipeline_mode<synchronous>, transform_indices = @transform_2, window_bounds = array<i64: 1, 32>}, {pipeline_mode = #tpu.pipeline_mode<synchronous>, transform_indices = @transform_3, window_bounds = array<i64: 32, 128>}, {pipeline_mode = #tpu.pipeline_mode<synchronous>, transform_indices = @transform_4, window_bounds = array<i64: 1, 128>}, {pipeline_mode = #tpu.pipeline_mode<synchronous>, transform_indices = @transform_5, window_bounds = array<i64: 128, 32>}, {pipeline_mode = #tpu.pipeline_mode<synchronous>, transform_indices = @transform_6, window_bounds = array<i64: 1, 32>}, {transform_indices = @transform_7, window_bounds = array<i64: 16, 32>}]} {
    %c0 = arith.constant 0 : index
    %c0_0 = arith.constant 0 : index
    %0 = vector.load %arg1[%c0, %c0_0] : memref<16x32xf32, #tpu.memory_space<vmem>>, vector<16x32xf32>
    %c0_1 = arith.constant 0 : index
    %c0_2 = arith.constant 0 : index
    %1 = vector.load %arg2[%c0_1, %c0_2] : memref<1x32xf32, #tpu.memory_space<vmem>>, vector<1x32xf32>
    %c0_3 = arith.constant 0 : index
    %c0_4 = arith.constant 0 : index
    %2 = vector.load %arg3[%c0_3, %c0_4] : memref<1x32xf32, #tpu.memory_space<vmem>>, vector<1x32xf32>
    %cst = arith.constant dense<0.000000e+00> : vector<16xf32>
    %3 = vector.multi_reduction <add>, %0, %cst [1] : vector<16x32xf32> to vector<16xf32>
    %4 = vector.shape_cast %3 : vector<16xf32> to vector<16x1xf32>
    %cst_5 = arith.constant 3.200000e+01 : f32
    %5 = vector.broadcast %cst_5 : f32 to vector<16x1xf32>
    %6 = arith.divf %4, %5 : vector<16x1xf32>
    %7 = vector.broadcast %6 : vector<16x1xf32> to vector<16x32xf32>
    %8 = arith.subf %0, %7 : vector<16x32xf32>
    %9 = arith.mulf %8, %8 : vector<16x32xf32>
    %cst_6 = arith.constant dense<0.000000e+00> : vector<16xf32>
    %10 = vector.multi_reduction <add>, %9, %cst_6 [1] : vector<16x32xf32> to vector<16xf32>
    %11 = vector.shape_cast %10 : vector<16xf32> to vector<16x1xf32>
    %cst_7 = arith.constant 3.200000e+01 : f32
    %12 = vector.broadcast %cst_7 : f32 to vector<16x1xf32>
    %13 = arith.divf %11, %12 : vector<16x1xf32>
    %14 = vector.broadcast %6 : vector<16x1xf32> to vector<16x32xf32>
    %15 = arith.subf %0, %14 : vector<16x32xf32>
    %cst_8 = arith.constant 9.99999974E-6 : f32
    %16 = vector.broadcast %cst_8 : f32 to vector<16x1xf32>
    %17 = arith.addf %13, %16 : vector<16x1xf32>
    %18 = math.rsqrt %17 : vector<16x1xf32>
    %19 = vector.broadcast %18 : vector<16x1xf32> to vector<16x32xf32>
    %20 = arith.mulf %15, %19 : vector<16x32xf32>
    %21 = vector.broadcast %1 : vector<1x32xf32> to vector<16x32xf32>
    %22 = arith.mulf %20, %21 : vector<16x32xf32>
    %23 = vector.broadcast %2 : vector<1x32xf32> to vector<16x32xf32>
    %24 = arith.addf %22, %23 : vector<16x32xf32>
    %25 = arith.truncf %24 : vector<16x32xf32> to vector<16x32xbf16>
    %c0_9 = arith.constant 0 : index
    %c0_10 = arith.constant 0 : index
    %26 = vector.load %arg4[%c0_9, %c0_10] : memref<32x128xbf16, #tpu.memory_space<vmem>>, vector<32x128xbf16>
    %cst_11 = arith.constant dense<0.000000e+00> : vector<16x128xf32>
    %27 = tpu.matmul %25, %26, %cst_11 {dimension_numbers = #tpu.dot_dimension_numbers<[1], [0], [0], [1], [0, 0, 1, 1], [], []>} : vector<16x32xbf16>, vector<32x128xbf16>, vector<16x128xf32> -> vector<16x128xf32>
    %c0_12 = arith.constant 0 : index
    %c0_13 = arith.constant 0 : index
    %28 = vector.load %arg5[%c0_12, %c0_13] : memref<1x128xf32, #tpu.memory_space<vmem>>, vector<1x128xf32>
    %29 = vector.broadcast %28 : vector<1x128xf32> to vector<16x128xf32>
    %30 = arith.addf %27, %29 : vector<16x128xf32>
    %31 = arith.negf %30 : vector<16x128xf32>
    %32 = math.exp %31 : vector<16x128xf32>
    %cst_14 = arith.constant 1.000000e+00 : f32
    %33 = vector.broadcast %cst_14 : f32 to vector<16x128xf32>
    %34 = arith.addf %33, %32 : vector<16x128xf32>
    %35 = arith.divf %33, %34 : vector<16x128xf32>
    %36 = arith.mulf %30, %35 : vector<16x128xf32>
    %37 = arith.truncf %36 : vector<16x128xf32> to vector<16x128xbf16>
    %c0_15 = arith.constant 0 : index
    %c0_16 = arith.constant 0 : index
    %38 = vector.load %arg6[%c0_15, %c0_16] : memref<128x32xbf16, #tpu.memory_space<vmem>>, vector<128x32xbf16>
    %cst_17 = arith.constant dense<0.000000e+00> : vector<16x32xf32>
    %39 = tpu.matmul %37, %38, %cst_17 {dimension_numbers = #tpu.dot_dimension_numbers<[1], [0], [0], [1], [0, 0, 1, 1], [], []>} : vector<16x128xbf16>, vector<128x32xbf16>, vector<16x32xf32> -> vector<16x32xf32>
    %c0_18 = arith.constant 0 : index
    %c0_19 = arith.constant 0 : index
    %40 = vector.load %arg7[%c0_18, %c0_19] : memref<1x32xf32, #tpu.memory_space<vmem>>, vector<1x32xf32>
    %41 = vector.broadcast %40 : vector<1x32xf32> to vector<16x32xf32>
    %42 = arith.addf %39, %41 : vector<16x32xf32>
    %cst_20 = arith.constant 5.000000e-01 : f32
    %43 = vector.broadcast %cst_20 : f32 to vector<16x32xf32>
    %44 = arith.mulf %43, %42 : vector<16x32xf32>
    %45 = arith.addf %44, %0 : vector<16x32xf32>
    %c0_21 = arith.constant 0 : index
    %c0_22 = arith.constant 0 : index
    %46 = vector.load %arg8[%c0_21, %c0_22] : memref<16x32xf32, #tpu.memory_space<vmem>>, vector<16x32xf32>
    tpu.vector_store %arg8[%c0_21, %c0_22], %45 {strides = array<i32>} : memref<16x32xf32, #tpu.memory_space<vmem>>, vector<16x32xf32>,
    return
  }
  func.func @transform_0(%arg0: i32) -> (i32, i32) {
    %c0_i32 = arith.constant 0 : i32
    %c0_i32_0 = arith.constant 0 : i32
    return %arg0, %c0_i32 : i32, i32
  }
  func.func @transform_1(%arg0: i32) -> (i32, i32) {
    %c0_i32 = arith.constant 0 : i32
    %c0_i32_0 = arith.constant 0 : i32
    %c0_i32_1 = arith.constant 0 : i32
    return %c0_i32, %c0_i32_0 : i32, i32
  }
  func.func @transform_2(%arg0: i32) -> (i32, i32) {
    %c0_i32 = arith.constant 0 : i32
    %c0_i32_0 = arith.constant 0 : i32
    %c0_i32_1 = arith.constant 0 : i32
    return %c0_i32, %c0_i32_0 : i32, i32
  }
  func.func @transform_3(%arg0: i32) -> (i32, i32) {
    %c0_i32 = arith.constant 0 : i32
    %c0_i32_0 = arith.constant 0 : i32
    %c0_i32_1 = arith.constant 0 : i32
    return %c0_i32, %c0_i32_0 : i32, i32
  }
  func.func @transform_4(%arg0: i32) -> (i32, i32) {
    %c0_i32 = arith.constant 0 : i32
    %c0_i32_0 = arith.constant 0 : i32
    %c0_i32_1 = arith.constant 0 : i32
    return %c0_i32, %c0_i32_0 : i32, i32
  }
  func.func @transform_5(%arg0: i32) -> (i32, i32) {
    %c0_i32 = arith.constant 0 : i32
    %c0_i32_0 = arith.constant 0 : i32
    %c0_i32_1 = arith.constant 0 : i32
    return %c0_i32, %c0_i32_0 : i32, i32
  }
  func.func @transform_6(%arg0: i32) -> (i32, i32) {
    %c0_i32 = arith.constant 0 : i32
    %c0_i32_0 = arith.constant 0 : i32
    %c0_i32_1 = arith.constant 0 : i32
    return %c0_i32, %c0_i32_0 : i32, i32
  }
  func.func @transform_7(%arg0: i32) -> (i32, i32) {
    %c0_i32 = arith.constant 0 : i32
    %c0_i32_0 = arith.constant 0 : i32
    return %arg0, %c0_i32 : i32, i32
  }
}

module attributes {stable_mosaic.version = 11 : i64} {
  func.func @_attention_kernel(%arg0: i32, %arg1: memref<1x8x32xf32, #tpu.memory_space<vmem>>, %arg2: memref<32x32xbf16, #tpu.memory_space<vmem>>, %arg3: memref<32x32xbf16, #tpu.memory_space<vmem>>, %arg4: memref<32x32xbf16, #tpu.memory_space<vmem>>, %arg5: memref<1x32xf32, #tpu.memory_space<vmem>>, %arg6: memref<1x32xf32, #tpu.memory_space<vmem>>, %arg7: memref<1x32xf32, #tpu.memory_space<vmem>>, %arg8: memref<8x32xf32, #tpu.memory_space<vmem>>, %arg9: memref<32x32xbf16, #tpu.memory_space<vmem>>, %arg10: memref<1x32xf32, #tpu.memory_space<vmem>>, %arg11: memref<1x32xf32, #tpu.memory_space<vmem>>, %arg12: memref<32x32xbf16, #tpu.memory_space<vmem>>, %arg13: memref<1x32xf32, #tpu.memory_space<vmem>>, %arg14: memref<1x8x32xf32, #tpu.memory_space<vmem>>) attributes {dimension_semantics = [#tpu.dimension_semantics<parallel>], iteration_bounds = array<i64: 2>, scalar_prefetch = 0 : i64, scratch_operands = 0 : i64, tpu.core_type = #tpu.core_type<tc>, window_params = [{transform_indices = @transform_0, window_bounds = array<i64: 1, 8, 32>}, {pipeline_mode = #tpu.pipeline_mode<synchronous>, transform_indices = @transform_1, window_bounds = array<i64: 32, 32>}, {pipeline_mode = #tpu.pipeline_mode<synchronous>, transform_indices = @transform_2, window_bounds = array<i64: 32, 32>}, {pipeline_mode = #tpu.pipeline_mode<synchronous>, transform_indices = @transform_3, window_bounds = array<i64: 32, 32>}, {pipeline_mode = #tpu.pipeline_mode<synchronous>, transform_indices = @transform_4, window_bounds = array<i64: 1, 32>}, {pipeline_mode = #tpu.pipeline_mode<synchronous>, transform_indices = @transform_5, window_bounds = array<i64: 1, 32>}, {pipeline_mode = #tpu.pipeline_mode<synchronous>, transform_indices = @transform_6, window_bounds = array<i64: 1, 32>}, {pipeline_mode = #tpu.pipeline_mode<synchronous>, transform_indices = @transform_7, window_bounds = array<i64: 8, 32>}, {pipeline_mode = #tpu.pipeline_mode<synchronous>, transform_indices = @transform_8, window_bounds = array<i64: 32, 32>}, {pipeline_mode = #tpu.pipeline_mode<synchronous>, transform_indices = @transform_9, window_bounds = array<i64: 1, 32>}, {pipeline_mode = #tpu.pipeline_mode<synchronous>, transform_indices = @transform_10, window_bounds = array<i64: 1, 32>}, {pipeline_mode = #tpu.pipeline_mode<synchronous>, transform_indices = @transform_11, window_bounds = array<i64: 32, 32>}, {pipeline_mode = #tpu.pipeline_mode<synchronous>, transform_indices = @transform_12, window_bounds = array<i64: 1, 32>}, {transform_indices = @transform_13, window_bounds = array<i64: 1, 8, 32>}]} {
    %c0 = arith.constant 0 : index
    %c0_0 = arith.constant 0 : index
    %c0_1 = arith.constant 0 : index
    %0 = vector.load %arg1[%c0, %c0_0, %c0_1] : memref<1x8x32xf32, #tpu.memory_space<vmem>>, vector<1x8x32xf32>
    %1 = vector.shape_cast %0 : vector<1x8x32xf32> to vector<8x32xf32>
    %2 = arith.truncf %1 : vector<8x32xf32> to vector<8x32xbf16>
    %c0_2 = arith.constant 0 : index
    %c0_3 = arith.constant 0 : index
    %3 = vector.load %arg2[%c0_2, %c0_3] : memref<32x32xbf16, #tpu.memory_space<vmem>>, vector<32x32xbf16>
    %cst = arith.constant dense<0.000000e+00> : vector<8x32xf32>
    %4 = tpu.matmul %2, %3, %cst {dimension_numbers = #tpu.dot_dimension_numbers<[1], [0], [0], [1], [0, 0, 1, 1], [], []>} : vector<8x32xbf16>, vector<32x32xbf16>, vector<8x32xf32> -> vector<8x32xf32>
    %c0_4 = arith.constant 0 : index
    %c0_5 = arith.constant 0 : index
    %5 = vector.load %arg5[%c0_4, %c0_5] : memref<1x32xf32, #tpu.memory_space<vmem>>, vector<1x32xf32>
    %6 = vector.broadcast %5 : vector<1x32xf32> to vector<8x32xf32>
    %7 = arith.addf %4, %6 : vector<8x32xf32>
    %c0_6 = arith.constant 0 : index
    %c0_7 = arith.constant 0 : index
    %8 = vector.load %arg3[%c0_6, %c0_7] : memref<32x32xbf16, #tpu.memory_space<vmem>>, vector<32x32xbf16>
    %cst_8 = arith.constant dense<0.000000e+00> : vector<8x32xf32>
    %9 = tpu.matmul %2, %8, %cst_8 {dimension_numbers = #tpu.dot_dimension_numbers<[1], [0], [0], [1], [0, 0, 1, 1], [], []>} : vector<8x32xbf16>, vector<32x32xbf16>, vector<8x32xf32> -> vector<8x32xf32>
    %c0_9 = arith.constant 0 : index
    %c0_10 = arith.constant 0 : index
    %10 = vector.load %arg6[%c0_9, %c0_10] : memref<1x32xf32, #tpu.memory_space<vmem>>, vector<1x32xf32>
    %11 = vector.broadcast %10 : vector<1x32xf32> to vector<8x32xf32>
    %12 = arith.addf %9, %11 : vector<8x32xf32>
    %c0_11 = arith.constant 0 : index
    %c0_12 = arith.constant 0 : index
    %13 = vector.load %arg4[%c0_11, %c0_12] : memref<32x32xbf16, #tpu.memory_space<vmem>>, vector<32x32xbf16>
    %cst_13 = arith.constant dense<0.000000e+00> : vector<8x32xf32>
    %14 = tpu.matmul %2, %13, %cst_13 {dimension_numbers = #tpu.dot_dimension_numbers<[1], [0], [0], [1], [0, 0, 1, 1], [], []>} : vector<8x32xbf16>, vector<32x32xbf16>, vector<8x32xf32> -> vector<8x32xf32>
    %c0_14 = arith.constant 0 : index
    %c0_15 = arith.constant 0 : index
    %15 = vector.load %arg7[%c0_14, %c0_15] : memref<1x32xf32, #tpu.memory_space<vmem>>, vector<1x32xf32>
    %16 = vector.broadcast %15 : vector<1x32xf32> to vector<8x32xf32>
    %17 = arith.addf %14, %16 : vector<8x32xf32>
    %c0_16 = arith.constant 0 : index
    %c0_17 = arith.constant 0 : index
    %18 = vector.load %arg8[%c0_16, %c0_17] : memref<8x32xf32, #tpu.memory_space<vmem>>, vector<8x32xf32>
    %19 = arith.truncf %18 : vector<8x32xf32> to vector<8x32xbf16>
    %c0_18 = arith.constant 0 : index
    %c0_19 = arith.constant 0 : index
    %20 = vector.load %arg9[%c0_18, %c0_19] : memref<32x32xbf16, #tpu.memory_space<vmem>>, vector<32x32xbf16>
    %cst_20 = arith.constant dense<0.000000e+00> : vector<8x32xf32>
    %21 = tpu.matmul %19, %20, %cst_20 {dimension_numbers = #tpu.dot_dimension_numbers<[1], [0], [0], [1], [0, 0, 1, 1], [], []>} : vector<8x32xbf16>, vector<32x32xbf16>, vector<8x32xf32> -> vector<8x32xf32>
    %c0_21 = arith.constant 0 : index
    %c0_22 = arith.constant 0 : index
    %22 = vector.load %arg10[%c0_21, %c0_22] : memref<1x32xf32, #tpu.memory_space<vmem>>, vector<1x32xf32>
    %23 = vector.broadcast %22 : vector<1x32xf32> to vector<8x32xf32>
    %24 = arith.addf %7, %23 : vector<8x32xf32>
    %25 = arith.truncf %24 : vector<8x32xf32> to vector<8x32xbf16>
    %c0_23 = arith.constant 0 : index
    %c0_24 = arith.constant 0 : index
    %26 = vector.load %arg11[%c0_23, %c0_24] : memref<1x32xf32, #tpu.memory_space<vmem>>, vector<1x32xf32>
    %27 = vector.broadcast %26 : vector<1x32xf32> to vector<8x32xf32>
    %28 = arith.addf %7, %27 : vector<8x32xf32>
    %29 = arith.truncf %28 : vector<8x32xf32> to vector<8x32xbf16>
    %30 = arith.truncf %12 : vector<8x32xf32> to vector<8x32xbf16>
    %31 = arith.truncf %17 : vector<8x32xf32> to vector<8x32xbf16>
    %32 = arith.truncf %21 : vector<8x32xf32> to vector<8x32xbf16>
    %33 = vector.extract_strided_slice %25 {offsets = [0, 0], sizes = [8, 8], strides = [1, 1]} : vector<8x32xbf16> to vector<8x8xbf16>
    %34 = vector.extract_strided_slice %30 {offsets = [0, 0], sizes = [8, 8], strides = [1, 1]} : vector<8x32xbf16> to vector<8x8xbf16>
    %cst_25 = arith.constant dense<0.000000e+00> : vector<8x8xf32>
    %35 = tpu.matmul %33, %34, %cst_25 {dimension_numbers = #tpu.dot_dimension_numbers<[1], [1], [0], [0], [0, 0, 1, 0], [], []>} : vector<8x8xbf16>, vector<8x8xbf16>, vector<8x8xf32> -> vector<8x8xf32>
    %36 = vector.extract_strided_slice %29 {offsets = [0, 0], sizes = [8, 8], strides = [1, 1]} : vector<8x32xbf16> to vector<8x8xbf16>
    %37 = vector.extract_strided_slice %32 {offsets = [0, 0], sizes = [8, 8], strides = [1, 1]} : vector<8x32xbf16> to vector<8x8xbf16>
    %cst_26 = arith.constant dense<0.000000e+00> : vector<8x8xf32>
    %38 = tpu.matmul %36, %37, %cst_26 {dimension_numbers = #tpu.dot_dimension_numbers<[1], [1], [0], [0], [0, 0, 1, 0], [], []>} : vector<8x8xbf16>, vector<8x8xbf16>, vector<8x8xf32> -> vector<8x8xf32>
    %39 = vector.extract_strided_slice %38 {offsets = [1, 0], sizes = [7, 8], strides = [1, 1]} : vector<8x8xf32> to vector<7x8xf32>
    %cst_27 = arith.constant 0.000000e+00 : f32
    %40 = vector.broadcast %cst_27 : f32 to vector<1x8xf32>
    %41 = tpu.concatenate %39, %40 in 0 : vector<7x8xf32>, vector<1x8xf32> -> vector<8x8xf32>
    %cst_28 = arith.constant 0.000000e+00 : f32
    %42 = vector.broadcast %cst_28 : f32 to vector<8x1xf32>
    %43 = tpu.concatenate %38, %42, %41 in 1 : vector<8x8xf32>, vector<8x1xf32>, vector<8x8xf32> -> vector<8x17xf32>
    %44 = tpu.iota {dimensions = array<i32: 0>} : vector<8x1xi32>
    %c7_i32 = arith.constant 7 : i32
    %45 = vector.broadcast %c7_i32 : i32 to vector<8x1xi32>
    %46 = arith.subi %45, %44 : vector<8x1xi32>
    %47 = vector.extract_strided_slice %43 {offsets = [0, 1], sizes = [8, 16], strides = [1, 1]} : vector<8x17xf32> to vector<8x16xf32>
    %48 = vector.extract_strided_slice %43 {offsets = [0, 0], sizes = [8, 1], strides = [1, 1]} : vector<8x17xf32> to vector<8x1xf32>
    %49 = tpu.concatenate %47, %48 in 1 : vector<8x16xf32>, vector<8x1xf32> -> vector<8x17xf32>
    %c1_i32 = arith.constant 1 : i32
    %50 = vector.broadcast %c1_i32 : i32 to vector<8x1xi32>
    %51 = arith.andi %46, %50 : vector<8x1xi32>
    %c0_i32 = arith.constant 0 : i32
    %52 = vector.broadcast %c0_i32 : i32 to vector<8x1xi32>
    %53 = arith.cmpi ne, %51, %52 : vector<8x1xi32>
    %54 = vector.shape_cast %53 : vector<8x1xi1> to vector<8x1xi1>
    %55 = vector.broadcast %54 : vector<8x1xi1> to vector<8x17xi1>
    %56 = arith.select %55, %49, %43 : vector<8x17xi1>, vector<8x17xf32>
    %57 = vector.extract_strided_slice %56 {offsets = [0, 2], sizes = [8, 15], strides = [1, 1]} : vector<8x17xf32> to vector<8x15xf32>
    %58 = vector.extract_strided_slice %56 {offsets = [0, 0], sizes = [8, 2], strides = [1, 1]} : vector<8x17xf32> to vector<8x2xf32>
    %59 = tpu.concatenate %57, %58 in 1 : vector<8x15xf32>, vector<8x2xf32> -> vector<8x17xf32>
    %c2_i32 = arith.constant 2 : i32
    %60 = vector.broadcast %c2_i32 : i32 to vector<8x1xi32>
    %61 = arith.andi %46, %60 : vector<8x1xi32>
    %c0_i32_29 = arith.constant 0 : i32
    %62 = vector.broadcast %c0_i32_29 : i32 to vector<8x1xi32>
    %63 = arith.cmpi ne, %61, %62 : vector<8x1xi32>
    %64 = vector.shape_cast %63 : vector<8x1xi1> to vector<8x1xi1>
    %65 = vector.broadcast %64 : vector<8x1xi1> to vector<8x17xi1>
    %66 = arith.select %65, %59, %56 : vector<8x17xi1>, vector<8x17xf32>
    %67 = vector.extract_strided_slice %66 {offsets = [0, 4], sizes = [8, 13], strides = [1, 1]} : vector<8x17xf32> to vector<8x13xf32>
    %68 = vector.extract_strided_slice %66 {offsets = [0, 0], sizes = [8, 4], strides = [1, 1]} : vector<8x17xf32> to vector<8x4xf32>
    %69 = tpu.concatenate %67, %68 in 1 : vector<8x13xf32>, vector<8x4xf32> -> vector<8x17xf32>
    %c4_i32 = arith.constant 4 : i32
    %70 = vector.broadcast %c4_i32 : i32 to vector<8x1xi32>
    %71 = arith.andi %46, %70 : vector<8x1xi32>
    %c0_i32_30 = arith.constant 0 : i32
    %72 = vector.broadcast %c0_i32_30 : i32 to vector<8x1xi32>
    %73 = arith.cmpi ne, %71, %72 : vector<8x1xi32>
    %74 = vector.shape_cast %73 : vector<8x1xi1> to vector<8x1xi1>
    %75 = vector.broadcast %74 : vector<8x1xi1> to vector<8x17xi1>
    %76 = arith.select %75, %69, %66 : vector<8x17xi1>, vector<8x17xf32>
    %77 = vector.extract_strided_slice %76 {offsets = [0, 0], sizes = [8, 8], strides = [1, 1]} : vector<8x17xf32> to vector<8x8xf32>
    %78 = arith.addf %35, %77 : vector<8x8xf32>
    %cst_31 = arith.constant 0.176776692 : f32
    %79 = vector.broadcast %cst_31 : f32 to vector<8x8xf32>
    %80 = arith.mulf %78, %79 : vector<8x8xf32>
    %cst_32 = arith.constant dense<0xFF800000> : vector<8xf32>
    %81 = vector.multi_reduction <maximumf>, %80, %cst_32 [1] : vector<8x8xf32> to vector<8xf32>
    %82 = vector.shape_cast %81 : vector<8xf32> to vector<8x1xf32>
    %83 = vector.broadcast %82 : vector<8x1xf32> to vector<8x8xf32>
    %84 = arith.subf %80, %83 : vector<8x8xf32>
    %85 = math.exp %84 : vector<8x8xf32>
    %cst_33 = arith.constant dense<0.000000e+00> : vector<8xf32>
    %86 = vector.multi_reduction <add>, %85, %cst_33 [1] : vector<8x8xf32> to vector<8xf32>
    %87 = vector.shape_cast %86 : vector<8xf32> to vector<8x1xf32>
    %88 = vector.broadcast %87 : vector<8x1xf32> to vector<8x8xf32>
    %89 = arith.divf %85, %88 : vector<8x8xf32>
    %90 = arith.truncf %89 : vector<8x8xf32> to vector<8x8xbf16>
    %91 = vector.extract_strided_slice %31 {offsets = [0, 0], sizes = [8, 8], strides = [1, 1]} : vector<8x32xbf16> to vector<8x8xbf16>
    %cst_34 = arith.constant dense<0.000000e+00> : vector<8x8xf32>
    %92 = tpu.matmul %90, %91, %cst_34 {dimension_numbers = #tpu.dot_dimension_numbers<[1], [0], [0], [1], [0, 0, 1, 1], [], []>} : vector<8x8xbf16>, vector<8x8xbf16>, vector<8x8xf32> -> vector<8x8xf32>
    %93 = vector.extract_strided_slice %25 {offsets = [0, 8], sizes = [8, 8], strides = [1, 1]} : vector<8x32xbf16> to vector<8x8xbf16>
    %94 = vector.extract_strided_slice %30 {offsets = [0, 8], sizes = [8, 8], strides = [1, 1]} : vector<8x32xbf16> to vector<8x8xbf16>
    %cst_35 = arith.constant dense<0.000000e+00> : vector<8x8xf32>
    %95 = tpu.matmul %93, %94, %cst_35 {dimension_numbers = #tpu.dot_dimension_numbers<[1], [1], [0], [0], [0, 0, 1, 0], [], []>} : vector<8x8xbf16>, vector<8x8xbf16>, vector<8x8xf32> -> vector<8x8xf32>
    %96 = vector.extract_strided_slice %29 {offsets = [0, 8], sizes = [8, 8], strides = [1, 1]} : vector<8x32xbf16> to vector<8x8xbf16>
    %97 = vector.extract_strided_slice %32 {offsets = [0, 8], sizes = [8, 8], strides = [1, 1]} : vector<8x32xbf16> to vector<8x8xbf16>
    %cst_36 = arith.constant dense<0.000000e+00> : vector<8x8xf32>
    %98 = tpu.matmul %96, %97, %cst_36 {dimension_numbers = #tpu.dot_dimension_numbers<[1], [1], [0], [0], [0, 0, 1, 0], [], []>} : vector<8x8xbf16>, vector<8x8xbf16>, vector<8x8xf32> -> vector<8x8xf32>
    %99 = vector.extract_strided_slice %98 {offsets = [1, 0], sizes = [7, 8], strides = [1, 1]} : vector<8x8xf32> to vector<7x8xf32>
    %cst_37 = arith.constant 0.000000e+00 : f32
    %100 = vector.broadcast %cst_37 : f32 to vector<1x8xf32>
    %101 = tpu.concatenate %99, %100 in 0 : vector<7x8xf32>, vector<1x8xf32> -> vector<8x8xf32>
    %cst_38 = arith.constant 0.000000e+00 : f32
    %102 = vector.broadcast %cst_38 : f32 to vector<8x1xf32>
    %103 = tpu.concatenate %98, %102, %101 in 1 : vector<8x8xf32>, vector<8x1xf32>, vector<8x8xf32> -> vector<8x17xf32>
    %104 = tpu.iota {dimensions = array<i32: 0>} : vector<8x1xi32>
    %c7_i32_39 = arith.constant 7 : i32
    %105 = vector.broadcast %c7_i32_39 : i32 to vector<8x1xi32>
    %106 = arith.subi %105, %104 : vector<8x1xi32>
    %107 = vector.extract_strided_slice %103 {offsets = [0, 1], sizes = [8, 16], strides = [1, 1]} : vector<8x17xf32> to vector<8x16xf32>
    %108 = vector.extract_strided_slice %103 {offsets = [0, 0], sizes = [8, 1], strides = [1, 1]} : vector<8x17xf32> to vector<8x1xf32>
    %109 = tpu.concatenate %107, %108 in 1 : vector<8x16xf32>, vector<8x1xf32> -> vector<8x17xf32>
    %c1_i32_40 = arith.constant 1 : i32
    %110 = vector.broadcast %c1_i32_40 : i32 to vector<8x1xi32>
    %111 = arith.andi %106, %110 : vector<8x1xi32>
    %c0_i32_41 = arith.constant 0 : i32
    %112 = vector.broadcast %c0_i32_41 : i32 to vector<8x1xi32>
    %113 = arith.cmpi ne, %111, %112 : vector<8x1xi32>
    %114 = vector.shape_cast %113 : vector<8x1xi1> to vector<8x1xi1>
    %115 = vector.broadcast %114 : vector<8x1xi1> to vector<8x17xi1>
    %116 = arith.select %115, %109, %103 : vector<8x17xi1>, vector<8x17xf32>
    %117 = vector.extract_strided_slice %116 {offsets = [0, 2], sizes = [8, 15], strides = [1, 1]} : vector<8x17xf32> to vector<8x15xf32>
    %118 = vector.extract_strided_slice %116 {offsets = [0, 0], sizes = [8, 2], strides = [1, 1]} : vector<8x17xf32> to vector<8x2xf32>
    %119 = tpu.concatenate %117, %118 in 1 : vector<8x15xf32>, vector<8x2xf32> -> vector<8x17xf32>
    %c2_i32_42 = arith.constant 2 : i32
    %120 = vector.broadcast %c2_i32_42 : i32 to vector<8x1xi32>
    %121 = arith.andi %106, %120 : vector<8x1xi32>
    %c0_i32_43 = arith.constant 0 : i32
    %122 = vector.broadcast %c0_i32_43 : i32 to vector<8x1xi32>
    %123 = arith.cmpi ne, %121, %122 : vector<8x1xi32>
    %124 = vector.shape_cast %123 : vector<8x1xi1> to vector<8x1xi1>
    %125 = vector.broadcast %124 : vector<8x1xi1> to vector<8x17xi1>
    %126 = arith.select %125, %119, %116 : vector<8x17xi1>, vector<8x17xf32>
    %127 = vector.extract_strided_slice %126 {offsets = [0, 4], sizes = [8, 13], strides = [1, 1]} : vector<8x17xf32> to vector<8x13xf32>
    %128 = vector.extract_strided_slice %126 {offsets = [0, 0], sizes = [8, 4], strides = [1, 1]} : vector<8x17xf32> to vector<8x4xf32>
    %129 = tpu.concatenate %127, %128 in 1 : vector<8x13xf32>, vector<8x4xf32> -> vector<8x17xf32>
    %c4_i32_44 = arith.constant 4 : i32
    %130 = vector.broadcast %c4_i32_44 : i32 to vector<8x1xi32>
    %131 = arith.andi %106, %130 : vector<8x1xi32>
    %c0_i32_45 = arith.constant 0 : i32
    %132 = vector.broadcast %c0_i32_45 : i32 to vector<8x1xi32>
    %133 = arith.cmpi ne, %131, %132 : vector<8x1xi32>
    %134 = vector.shape_cast %133 : vector<8x1xi1> to vector<8x1xi1>
    %135 = vector.broadcast %134 : vector<8x1xi1> to vector<8x17xi1>
    %136 = arith.select %135, %129, %126 : vector<8x17xi1>, vector<8x17xf32>
    %137 = vector.extract_strided_slice %136 {offsets = [0, 0], sizes = [8, 8], strides = [1, 1]} : vector<8x17xf32> to vector<8x8xf32>
    %138 = arith.addf %95, %137 : vector<8x8xf32>
    %cst_46 = arith.constant 0.176776692 : f32
    %139 = vector.broadcast %cst_46 : f32 to vector<8x8xf32>
    %140 = arith.mulf %138, %139 : vector<8x8xf32>
    %cst_47 = arith.constant dense<0xFF800000> : vector<8xf32>
    %141 = vector.multi_reduction <maximumf>, %140, %cst_47 [1] : vector<8x8xf32> to vector<8xf32>
    %142 = vector.shape_cast %141 : vector<8xf32> to vector<8x1xf32>
    %143 = vector.broadcast %142 : vector<8x1xf32> to vector<8x8xf32>
    %144 = arith.subf %140, %143 : vector<8x8xf32>
    %145 = math.exp %144 : vector<8x8xf32>
    %cst_48 = arith.constant dense<0.000000e+00> : vector<8xf32>
    %146 = vector.multi_reduction <add>, %145, %cst_48 [1] : vector<8x8xf32> to vector<8xf32>
    %147 = vector.shape_cast %146 : vector<8xf32> to vector<8x1xf32>
    %148 = vector.broadcast %147 : vector<8x1xf32> to vector<8x8xf32>
    %149 = arith.divf %145, %148 : vector<8x8xf32>
    %150 = arith.truncf %149 : vector<8x8xf32> to vector<8x8xbf16>
    %151 = vector.extract_strided_slice %31 {offsets = [0, 8], sizes = [8, 8], strides = [1, 1]} : vector<8x32xbf16> to vector<8x8xbf16>
    %cst_49 = arith.constant dense<0.000000e+00> : vector<8x8xf32>
    %152 = tpu.matmul %150, %151, %cst_49 {dimension_numbers = #tpu.dot_dimension_numbers<[1], [0], [0], [1], [0, 0, 1, 1], [], []>} : vector<8x8xbf16>, vector<8x8xbf16>, vector<8x8xf32> -> vector<8x8xf32>
    %153 = vector.extract_strided_slice %25 {offsets = [0, 16], sizes = [8, 8], strides = [1, 1]} : vector<8x32xbf16> to vector<8x8xbf16>
    %154 = vector.extract_strided_slice %30 {offsets = [0, 16], sizes = [8, 8], strides = [1, 1]} : vector<8x32xbf16> to vector<8x8xbf16>
    %cst_50 = arith.constant dense<0.000000e+00> : vector<8x8xf32>
    %155 = tpu.matmul %153, %154, %cst_50 {dimension_numbers = #tpu.dot_dimension_numbers<[1], [1], [0], [0], [0, 0, 1, 0], [], []>} : vector<8x8xbf16>, vector<8x8xbf16>, vector<8x8xf32> -> vector<8x8xf32>
    %156 = vector.extract_strided_slice %29 {offsets = [0, 16], sizes = [8, 8], strides = [1, 1]} : vector<8x32xbf16> to vector<8x8xbf16>
    %157 = vector.extract_strided_slice %32 {offsets = [0, 16], sizes = [8, 8], strides = [1, 1]} : vector<8x32xbf16> to vector<8x8xbf16>
    %cst_51 = arith.constant dense<0.000000e+00> : vector<8x8xf32>
    %158 = tpu.matmul %156, %157, %cst_51 {dimension_numbers = #tpu.dot_dimension_numbers<[1], [1], [0], [0], [0, 0, 1, 0], [], []>} : vector<8x8xbf16>, vector<8x8xbf16>, vector<8x8xf32> -> vector<8x8xf32>
    %159 = vector.extract_strided_slice %158 {offsets = [1, 0], sizes = [7, 8], strides = [1, 1]} : vector<8x8xf32> to vector<7x8xf32>
    %cst_52 = arith.constant 0.000000e+00 : f32
    %160 = vector.broadcast %cst_52 : f32 to vector<1x8xf32>
    %161 = tpu.concatenate %159, %160 in 0 : vector<7x8xf32>, vector<1x8xf32> -> vector<8x8xf32>
    %cst_53 = arith.constant 0.000000e+00 : f32
    %162 = vector.broadcast %cst_53 : f32 to vector<8x1xf32>
    %163 = tpu.concatenate %158, %162, %161 in 1 : vector<8x8xf32>, vector<8x1xf32>, vector<8x8xf32> -> vector<8x17xf32>
    %164 = tpu.iota {dimensions = array<i32: 0>} : vector<8x1xi32>
    %c7_i32_54 = arith.constant 7 : i32
    %165 = vector.broadcast %c7_i32_54 : i32 to vector<8x1xi32>
    %166 = arith.subi %165, %164 : vector<8x1xi32>
    %167 = vector.extract_strided_slice %163 {offsets = [0, 1], sizes = [8, 16], strides = [1, 1]} : vector<8x17xf32> to vector<8x16xf32>
    %168 = vector.extract_strided_slice %163 {offsets = [0, 0], sizes = [8, 1], strides = [1, 1]} : vector<8x17xf32> to vector<8x1xf32>
    %169 = tpu.concatenate %167, %168 in 1 : vector<8x16xf32>, vector<8x1xf32> -> vector<8x17xf32>
    %c1_i32_55 = arith.constant 1 : i32
    %170 = vector.broadcast %c1_i32_55 : i32 to vector<8x1xi32>
    %171 = arith.andi %166, %170 : vector<8x1xi32>
    %c0_i32_56 = arith.constant 0 : i32
    %172 = vector.broadcast %c0_i32_56 : i32 to vector<8x1xi32>
    %173 = arith.cmpi ne, %171, %172 : vector<8x1xi32>
    %174 = vector.shape_cast %173 : vector<8x1xi1> to vector<8x1xi1>
    %175 = vector.broadcast %174 : vector<8x1xi1> to vector<8x17xi1>
    %176 = arith.select %175, %169, %163 : vector<8x17xi1>, vector<8x17xf32>
    %177 = vector.extract_strided_slice %176 {offsets = [0, 2], sizes = [8, 15], strides = [1, 1]} : vector<8x17xf32> to vector<8x15xf32>
    %178 = vector.extract_strided_slice %176 {offsets = [0, 0], sizes = [8, 2], strides = [1, 1]} : vector<8x17xf32> to vector<8x2xf32>
    %179 = tpu.concatenate %177, %178 in 1 : vector<8x15xf32>, vector<8x2xf32> -> vector<8x17xf32>
    %c2_i32_57 = arith.constant 2 : i32
    %180 = vector.broadcast %c2_i32_57 : i32 to vector<8x1xi32>
    %181 = arith.andi %166, %180 : vector<8x1xi32>
    %c0_i32_58 = arith.constant 0 : i32
    %182 = vector.broadcast %c0_i32_58 : i32 to vector<8x1xi32>
    %183 = arith.cmpi ne, %181, %182 : vector<8x1xi32>
    %184 = vector.shape_cast %183 : vector<8x1xi1> to vector<8x1xi1>
    %185 = vector.broadcast %184 : vector<8x1xi1> to vector<8x17xi1>
    %186 = arith.select %185, %179, %176 : vector<8x17xi1>, vector<8x17xf32>
    %187 = vector.extract_strided_slice %186 {offsets = [0, 4], sizes = [8, 13], strides = [1, 1]} : vector<8x17xf32> to vector<8x13xf32>
    %188 = vector.extract_strided_slice %186 {offsets = [0, 0], sizes = [8, 4], strides = [1, 1]} : vector<8x17xf32> to vector<8x4xf32>
    %189 = tpu.concatenate %187, %188 in 1 : vector<8x13xf32>, vector<8x4xf32> -> vector<8x17xf32>
    %c4_i32_59 = arith.constant 4 : i32
    %190 = vector.broadcast %c4_i32_59 : i32 to vector<8x1xi32>
    %191 = arith.andi %166, %190 : vector<8x1xi32>
    %c0_i32_60 = arith.constant 0 : i32
    %192 = vector.broadcast %c0_i32_60 : i32 to vector<8x1xi32>
    %193 = arith.cmpi ne, %191, %192 : vector<8x1xi32>
    %194 = vector.shape_cast %193 : vector<8x1xi1> to vector<8x1xi1>
    %195 = vector.broadcast %194 : vector<8x1xi1> to vector<8x17xi1>
    %196 = arith.select %195, %189, %186 : vector<8x17xi1>, vector<8x17xf32>
    %197 = vector.extract_strided_slice %196 {offsets = [0, 0], sizes = [8, 8], strides = [1, 1]} : vector<8x17xf32> to vector<8x8xf32>
    %198 = arith.addf %155, %197 : vector<8x8xf32>
    %cst_61 = arith.constant 0.176776692 : f32
    %199 = vector.broadcast %cst_61 : f32 to vector<8x8xf32>
    %200 = arith.mulf %198, %199 : vector<8x8xf32>
    %cst_62 = arith.constant dense<0xFF800000> : vector<8xf32>
    %201 = vector.multi_reduction <maximumf>, %200, %cst_62 [1] : vector<8x8xf32> to vector<8xf32>
    %202 = vector.shape_cast %201 : vector<8xf32> to vector<8x1xf32>
    %203 = vector.broadcast %202 : vector<8x1xf32> to vector<8x8xf32>
    %204 = arith.subf %200, %203 : vector<8x8xf32>
    %205 = math.exp %204 : vector<8x8xf32>
    %cst_63 = arith.constant dense<0.000000e+00> : vector<8xf32>
    %206 = vector.multi_reduction <add>, %205, %cst_63 [1] : vector<8x8xf32> to vector<8xf32>
    %207 = vector.shape_cast %206 : vector<8xf32> to vector<8x1xf32>
    %208 = vector.broadcast %207 : vector<8x1xf32> to vector<8x8xf32>
    %209 = arith.divf %205, %208 : vector<8x8xf32>
    %210 = arith.truncf %209 : vector<8x8xf32> to vector<8x8xbf16>
    %211 = vector.extract_strided_slice %31 {offsets = [0, 16], sizes = [8, 8], strides = [1, 1]} : vector<8x32xbf16> to vector<8x8xbf16>
    %cst_64 = arith.constant dense<0.000000e+00> : vector<8x8xf32>
    %212 = tpu.matmul %210, %211, %cst_64 {dimension_numbers = #tpu.dot_dimension_numbers<[1], [0], [0], [1], [0, 0, 1, 1], [], []>} : vector<8x8xbf16>, vector<8x8xbf16>, vector<8x8xf32> -> vector<8x8xf32>
    %213 = vector.extract_strided_slice %25 {offsets = [0, 24], sizes = [8, 8], strides = [1, 1]} : vector<8x32xbf16> to vector<8x8xbf16>
    %214 = vector.extract_strided_slice %30 {offsets = [0, 24], sizes = [8, 8], strides = [1, 1]} : vector<8x32xbf16> to vector<8x8xbf16>
    %cst_65 = arith.constant dense<0.000000e+00> : vector<8x8xf32>
    %215 = tpu.matmul %213, %214, %cst_65 {dimension_numbers = #tpu.dot_dimension_numbers<[1], [1], [0], [0], [0, 0, 1, 0], [], []>} : vector<8x8xbf16>, vector<8x8xbf16>, vector<8x8xf32> -> vector<8x8xf32>
    %216 = vector.extract_strided_slice %29 {offsets = [0, 24], sizes = [8, 8], strides = [1, 1]} : vector<8x32xbf16> to vector<8x8xbf16>
    %217 = vector.extract_strided_slice %32 {offsets = [0, 24], sizes = [8, 8], strides = [1, 1]} : vector<8x32xbf16> to vector<8x8xbf16>
    %cst_66 = arith.constant dense<0.000000e+00> : vector<8x8xf32>
    %218 = tpu.matmul %216, %217, %cst_66 {dimension_numbers = #tpu.dot_dimension_numbers<[1], [1], [0], [0], [0, 0, 1, 0], [], []>} : vector<8x8xbf16>, vector<8x8xbf16>, vector<8x8xf32> -> vector<8x8xf32>
    %219 = vector.extract_strided_slice %218 {offsets = [1, 0], sizes = [7, 8], strides = [1, 1]} : vector<8x8xf32> to vector<7x8xf32>
    %cst_67 = arith.constant 0.000000e+00 : f32
    %220 = vector.broadcast %cst_67 : f32 to vector<1x8xf32>
    %221 = tpu.concatenate %219, %220 in 0 : vector<7x8xf32>, vector<1x8xf32> -> vector<8x8xf32>
    %cst_68 = arith.constant 0.000000e+00 : f32
    %222 = vector.broadcast %cst_68 : f32 to vector<8x1xf32>
    %223 = tpu.concatenate %218, %222, %221 in 1 : vector<8x8xf32>, vector<8x1xf32>, vector<8x8xf32> -> vector<8x17xf32>
    %224 = tpu.iota {dimensions = array<i32: 0>} : vector<8x1xi32>
    %c7_i32_69 = arith.constant 7 : i32
    %225 = vector.broadcast %c7_i32_69 : i32 to vector<8x1xi32>
    %226 = arith.subi %225, %224 : vector<8x1xi32>
    %227 = vector.extract_strided_slice %223 {offsets = [0, 1], sizes = [8, 16], strides = [1, 1]} : vector<8x17xf32> to vector<8x16xf32>
    %228 = vector.extract_strided_slice %223 {offsets = [0, 0], sizes = [8, 1], strides = [1, 1]} : vector<8x17xf32> to vector<8x1xf32>
    %229 = tpu.concatenate %227, %228 in 1 : vector<8x16xf32>, vector<8x1xf32> -> vector<8x17xf32>
    %c1_i32_70 = arith.constant 1 : i32
    %230 = vector.broadcast %c1_i32_70 : i32 to vector<8x1xi32>
    %231 = arith.andi %226, %230 : vector<8x1xi32>
    %c0_i32_71 = arith.constant 0 : i32
    %232 = vector.broadcast %c0_i32_71 : i32 to vector<8x1xi32>
    %233 = arith.cmpi ne, %231, %232 : vector<8x1xi32>
    %234 = vector.shape_cast %233 : vector<8x1xi1> to vector<8x1xi1>
    %235 = vector.broadcast %234 : vector<8x1xi1> to vector<8x17xi1>
    %236 = arith.select %235, %229, %223 : vector<8x17xi1>, vector<8x17xf32>
    %237 = vector.extract_strided_slice %236 {offsets = [0, 2], sizes = [8, 15], strides = [1, 1]} : vector<8x17xf32> to vector<8x15xf32>
    %238 = vector.extract_strided_slice %236 {offsets = [0, 0], sizes = [8, 2], strides = [1, 1]} : vector<8x17xf32> to vector<8x2xf32>
    %239 = tpu.concatenate %237, %238 in 1 : vector<8x15xf32>, vector<8x2xf32> -> vector<8x17xf32>
    %c2_i32_72 = arith.constant 2 : i32
    %240 = vector.broadcast %c2_i32_72 : i32 to vector<8x1xi32>
    %241 = arith.andi %226, %240 : vector<8x1xi32>
    %c0_i32_73 = arith.constant 0 : i32
    %242 = vector.broadcast %c0_i32_73 : i32 to vector<8x1xi32>
    %243 = arith.cmpi ne, %241, %242 : vector<8x1xi32>
    %244 = vector.shape_cast %243 : vector<8x1xi1> to vector<8x1xi1>
    %245 = vector.broadcast %244 : vector<8x1xi1> to vector<8x17xi1>
    %246 = arith.select %245, %239, %236 : vector<8x17xi1>, vector<8x17xf32>
    %247 = vector.extract_strided_slice %246 {offsets = [0, 4], sizes = [8, 13], strides = [1, 1]} : vector<8x17xf32> to vector<8x13xf32>
    %248 = vector.extract_strided_slice %246 {offsets = [0, 0], sizes = [8, 4], strides = [1, 1]} : vector<8x17xf32> to vector<8x4xf32>
    %249 = tpu.concatenate %247, %248 in 1 : vector<8x13xf32>, vector<8x4xf32> -> vector<8x17xf32>
    %c4_i32_74 = arith.constant 4 : i32
    %250 = vector.broadcast %c4_i32_74 : i32 to vector<8x1xi32>
    %251 = arith.andi %226, %250 : vector<8x1xi32>
    %c0_i32_75 = arith.constant 0 : i32
    %252 = vector.broadcast %c0_i32_75 : i32 to vector<8x1xi32>
    %253 = arith.cmpi ne, %251, %252 : vector<8x1xi32>
    %254 = vector.shape_cast %253 : vector<8x1xi1> to vector<8x1xi1>
    %255 = vector.broadcast %254 : vector<8x1xi1> to vector<8x17xi1>
    %256 = arith.select %255, %249, %246 : vector<8x17xi1>, vector<8x17xf32>
    %257 = vector.extract_strided_slice %256 {offsets = [0, 0], sizes = [8, 8], strides = [1, 1]} : vector<8x17xf32> to vector<8x8xf32>
    %258 = arith.addf %215, %257 : vector<8x8xf32>
    %cst_76 = arith.constant 0.176776692 : f32
    %259 = vector.broadcast %cst_76 : f32 to vector<8x8xf32>
    %260 = arith.mulf %258, %259 : vector<8x8xf32>
    %cst_77 = arith.constant dense<0xFF800000> : vector<8xf32>
    %261 = vector.multi_reduction <maximumf>, %260, %cst_77 [1] : vector<8x8xf32> to vector<8xf32>
    %262 = vector.shape_cast %261 : vector<8xf32> to vector<8x1xf32>
    %263 = vector.broadcast %262 : vector<8x1xf32> to vector<8x8xf32>
    %264 = arith.subf %260, %263 : vector<8x8xf32>
    %265 = math.exp %264 : vector<8x8xf32>
    %cst_78 = arith.constant dense<0.000000e+00> : vector<8xf32>
    %266 = vector.multi_reduction <add>, %265, %cst_78 [1] : vector<8x8xf32> to vector<8xf32>
    %267 = vector.shape_cast %266 : vector<8xf32> to vector<8x1xf32>
    %268 = vector.broadcast %267 : vector<8x1xf32> to vector<8x8xf32>
    %269 = arith.divf %265, %268 : vector<8x8xf32>
    %270 = arith.truncf %269 : vector<8x8xf32> to vector<8x8xbf16>
    %271 = vector.extract_strided_slice %31 {offsets = [0, 24], sizes = [8, 8], strides = [1, 1]} : vector<8x32xbf16> to vector<8x8xbf16>
    %cst_79 = arith.constant dense<0.000000e+00> : vector<8x8xf32>
    %272 = tpu.matmul %270, %271, %cst_79 {dimension_numbers = #tpu.dot_dimension_numbers<[1], [0], [0], [1], [0, 0, 1, 1], [], []>} : vector<8x8xbf16>, vector<8x8xbf16>, vector<8x8xf32> -> vector<8x8xf32>
    %273 = tpu.concatenate %92, %152, %212, %272 in 1 : vector<8x8xf32>, vector<8x8xf32>, vector<8x8xf32>, vector<8x8xf32> -> vector<8x32xf32>
    %274 = arith.truncf %273 : vector<8x32xf32> to vector<8x32xbf16>
    %c0_80 = arith.constant 0 : index
    %c0_81 = arith.constant 0 : index
    %275 = vector.load %arg12[%c0_80, %c0_81] : memref<32x32xbf16, #tpu.memory_space<vmem>>, vector<32x32xbf16>
    %cst_82 = arith.constant dense<0.000000e+00> : vector<8x32xf32>
    %276 = tpu.matmul %274, %275, %cst_82 {dimension_numbers = #tpu.dot_dimension_numbers<[1], [0], [0], [1], [0, 0, 1, 1], [], []>} : vector<8x32xbf16>, vector<32x32xbf16>, vector<8x32xf32> -> vector<8x32xf32>
    %c0_83 = arith.constant 0 : index
    %c0_84 = arith.constant 0 : index
    %277 = vector.load %arg13[%c0_83, %c0_84] : memref<1x32xf32, #tpu.memory_space<vmem>>, vector<1x32xf32>
    %278 = vector.broadcast %277 : vector<1x32xf32> to vector<8x32xf32>
    %279 = arith.addf %276, %278 : vector<8x32xf32>
    %280 = arith.addf %279, %1 : vector<8x32xf32>
    %c0_85 = arith.constant 0 : index
    %c0_86 = arith.constant 0 : index
    %c0_87 = arith.constant 0 : index
    %281 = vector.load %arg14[%c0_85, %c0_86, %c0_87] : memref<1x8x32xf32, #tpu.memory_space<vmem>>, vector<1x8x32xf32>
    %282 = vector.shape_cast %281 : vector<1x8x32xf32> to vector<8x32xf32>
    %283 = vector.shape_cast %280 : vector<8x32xf32> to vector<1x8x32xf32>
    tpu.vector_store %arg14[%c0_85, %c0_86, %c0_87], %283 {strides = array<i32>} : memref<1x8x32xf32, #tpu.memory_space<vmem>>, vector<1x8x32xf32>,
    return
  }
  func.func @transform_0(%arg0: i32) -> (i32, i32, i32) {
    %c0_i32 = arith.constant 0 : i32
    %c0_i32_0 = arith.constant 0 : i32
    %c0_i32_1 = arith.constant 0 : i32
    return %arg0, %c0_i32, %c0_i32_0 : i32, i32, i32
  }
  func.func @transform_1(%arg0: i32) -> (i32, i32) {
    %c0_i32 = arith.constant 0 : i32
    %c0_i32_0 = arith.constant 0 : i32
    %c0_i32_1 = arith.constant 0 : i32
    return %c0_i32, %c0_i32_0 : i32, i32
  }
  func.func @transform_2(%arg0: i32) -> (i32, i32) {
    %c0_i32 = arith.constant 0 : i32
    %c0_i32_0 = arith.constant 0 : i32
    %c0_i32_1 = arith.constant 0 : i32
    return %c0_i32, %c0_i32_0 : i32, i32
  }
  func.func @transform_3(%arg0: i32) -> (i32, i32) {
    %c0_i32 = arith.constant 0 : i32
    %c0_i32_0 = arith.constant 0 : i32
    %c0_i32_1 = arith.constant 0 : i32
    return %c0_i32, %c0_i32_0 : i32, i32
  }
  func.func @transform_4(%arg0: i32) -> (i32, i32) {
    %c0_i32 = arith.constant 0 : i32
    %c0_i32_0 = arith.constant 0 : i32
    %c0_i32_1 = arith.constant 0 : i32
    return %c0_i32, %c0_i32_0 : i32, i32
  }
  func.func @transform_5(%arg0: i32) -> (i32, i32) {
    %c0_i32 = arith.constant 0 : i32
    %c0_i32_0 = arith.constant 0 : i32
    %c0_i32_1 = arith.constant 0 : i32
    return %c0_i32, %c0_i32_0 : i32, i32
  }
  func.func @transform_6(%arg0: i32) -> (i32, i32) {
    %c0_i32 = arith.constant 0 : i32
    %c0_i32_0 = arith.constant 0 : i32
    %c0_i32_1 = arith.constant 0 : i32
    return %c0_i32, %c0_i32_0 : i32, i32
  }
  func.func @transform_7(%arg0: i32) -> (i32, i32) {
    %c0_i32 = arith.constant 0 : i32
    %c0_i32_0 = arith.constant 0 : i32
    %c0_i32_1 = arith.constant 0 : i32
    return %c0_i32, %c0_i32_0 : i32, i32
  }
  func.func @transform_8(%arg0: i32) -> (i32, i32) {
    %c0_i32 = arith.constant 0 : i32
    %c0_i32_0 = arith.constant 0 : i32
    %c0_i32_1 = arith.constant 0 : i32
    return %c0_i32, %c0_i32_0 : i32, i32
  }
  func.func @transform_9(%arg0: i32) -> (i32, i32) {
    %c0_i32 = arith.constant 0 : i32
    %c0_i32_0 = arith.constant 0 : i32
    %c0_i32_1 = arith.constant 0 : i32
    return %c0_i32, %c0_i32_0 : i32, i32
  }
  func.func @transform_10(%arg0: i32) -> (i32, i32) {
    %c0_i32 = arith.constant 0 : i32
    %c0_i32_0 = arith.constant 0 : i32
    %c0_i32_1 = arith.constant 0 : i32
    return %c0_i32, %c0_i32_0 : i32, i32
  }
  func.func @transform_11(%arg0: i32) -> (i32, i32) {
    %c0_i32 = arith.constant 0 : i32
    %c0_i32_0 = arith.constant 0 : i32
    %c0_i32_1 = arith.constant 0 : i32
    return %c0_i32, %c0_i32_0 : i32, i32
  }
  func.func @transform_12(%arg0: i32) -> (i32, i32) {
    %c0_i32 = arith.constant 0 : i32
    %c0_i32_0 = arith.constant 0 : i32
    %c0_i32_1 = arith.constant 0 : i32
    return %c0_i32, %c0_i32_0 : i32, i32
  }
  func.func @transform_13(%arg0: i32) -> (i32, i32, i32) {
    %c0_i32 = arith.constant 0 : i32
    %c0_i32_0 = arith.constant 0 : i32
    %c0_i32_1 = arith.constant 0 : i32
    return %arg0, %c0_i32, %c0_i32_0 : i32, i32, i32
  }
}

module attributes {stable_mosaic.version = 11 : i64} {
  func.func @_conv_kernel(%arg0: i32, %arg1: memref<1x8x32xf32, #tpu.memory_space<vmem>>, %arg2: memref<1x32xf32, #tpu.memory_space<vmem>>, %arg3: memref<1x32xf32, #tpu.memory_space<vmem>>, %arg4: memref<32x64xbf16, #tpu.memory_space<vmem>>, %arg5: memref<1x64xf32, #tpu.memory_space<vmem>>, %arg6: memref<3x64xf32, #tpu.memory_space<vmem>>, %arg7: memref<1x64xf32, #tpu.memory_space<vmem>>, %arg8: memref<1x64xf32, #tpu.memory_space<vmem>>, %arg9: memref<1x64xf32, #tpu.memory_space<vmem>>, %arg10: memref<1x64xf32, #tpu.memory_space<vmem>>, %arg11: memref<1x64xf32, #tpu.memory_space<vmem>>, %arg12: memref<64x32xbf16, #tpu.memory_space<vmem>>, %arg13: memref<1x32xf32, #tpu.memory_space<vmem>>, %arg14: memref<1x8x32xf32, #tpu.memory_space<vmem>>) attributes {dimension_semantics = [#tpu.dimension_semantics<parallel>], iteration_bounds = array<i64: 2>, scalar_prefetch = 0 : i64, scratch_operands = 0 : i64, tpu.core_type = #tpu.core_type<tc>, window_params = [{transform_indices = @transform_0, window_bounds = array<i64: 1, 8, 32>}, {pipeline_mode = #tpu.pipeline_mode<synchronous>, transform_indices = @transform_1, window_bounds = array<i64: 1, 32>}, {pipeline_mode = #tpu.pipeline_mode<synchronous>, transform_indices = @transform_2, window_bounds = array<i64: 1, 32>}, {pipeline_mode = #tpu.pipeline_mode<synchronous>, transform_indices = @transform_3, window_bounds = array<i64: 32, 64>}, {pipeline_mode = #tpu.pipeline_mode<synchronous>, transform_indices = @transform_4, window_bounds = array<i64: 1, 64>}, {pipeline_mode = #tpu.pipeline_mode<synchronous>, transform_indices = @transform_5, window_bounds = array<i64: 3, 64>}, {pipeline_mode = #tpu.pipeline_mode<synchronous>, transform_indices = @transform_6, window_bounds = array<i64: 1, 64>}, {pipeline_mode = #tpu.pipeline_mode<synchronous>, transform_indices = @transform_7, window_bounds = array<i64: 1, 64>}, {pipeline_mode = #tpu.pipeline_mode<synchronous>, transform_indices = @transform_8, window_bounds = array<i64: 1, 64>}, {pipeline_mode = #tpu.pipeline_mode<synchronous>, transform_indices = @transform_9, window_bounds = array<i64: 1, 64>}, {pipeline_mode = #tpu.pipeline_mode<synchronous>, transform_indices = @transform_10, window_bounds = array<i64: 1, 64>}, {pipeline_mode = #tpu.pipeline_mode<synchronous>, transform_indices = @transform_11, window_bounds = array<i64: 64, 32>}, {pipeline_mode = #tpu.pipeline_mode<synchronous>, transform_indices = @transform_12, window_bounds = array<i64: 1, 32>}, {transform_indices = @transform_13, window_bounds = array<i64: 1, 8, 32>}]} {
    %c0 = arith.constant 0 : index
    %c0_0 = arith.constant 0 : index
    %c0_1 = arith.constant 0 : index
    %0 = vector.load %arg1[%c0, %c0_0, %c0_1] : memref<1x8x32xf32, #tpu.memory_space<vmem>>, vector<1x8x32xf32>
    %1 = vector.shape_cast %0 : vector<1x8x32xf32> to vector<8x32xf32>
    %c0_2 = arith.constant 0 : index
    %c0_3 = arith.constant 0 : index
    %2 = vector.load %arg2[%c0_2, %c0_3] : memref<1x32xf32, #tpu.memory_space<vmem>>, vector<1x32xf32>
    %c0_4 = arith.constant 0 : index
    %c0_5 = arith.constant 0 : index
    %3 = vector.load %arg3[%c0_4, %c0_5] : memref<1x32xf32, #tpu.memory_space<vmem>>, vector<1x32xf32>
    %cst = arith.constant dense<0.000000e+00> : vector<8xf32>
    %4 = vector.multi_reduction <add>, %1, %cst [1] : vector<8x32xf32> to vector<8xf32>
    %5 = vector.shape_cast %4 : vector<8xf32> to vector<8x1xf32>
    %cst_6 = arith.constant 3.200000e+01 : f32
    %6 = vector.broadcast %cst_6 : f32 to vector<8x1xf32>
    %7 = arith.divf %5, %6 : vector<8x1xf32>
    %8 = vector.broadcast %7 : vector<8x1xf32> to vector<8x32xf32>
    %9 = arith.subf %1, %8 : vector<8x32xf32>
    %10 = arith.mulf %9, %9 : vector<8x32xf32>
    %cst_7 = arith.constant dense<0.000000e+00> : vector<8xf32>
    %11 = vector.multi_reduction <add>, %10, %cst_7 [1] : vector<8x32xf32> to vector<8xf32>
    %12 = vector.shape_cast %11 : vector<8xf32> to vector<8x1xf32>
    %cst_8 = arith.constant 3.200000e+01 : f32
    %13 = vector.broadcast %cst_8 : f32 to vector<8x1xf32>
    %14 = arith.divf %12, %13 : vector<8x1xf32>
    %15 = vector.broadcast %7 : vector<8x1xf32> to vector<8x32xf32>
    %16 = arith.subf %1, %15 : vector<8x32xf32>
    %cst_9 = arith.constant 9.99999974E-6 : f32
    %17 = vector.broadcast %cst_9 : f32 to vector<8x1xf32>
    %18 = arith.addf %14, %17 : vector<8x1xf32>
    %19 = math.rsqrt %18 : vector<8x1xf32>
    %20 = vector.broadcast %19 : vector<8x1xf32> to vector<8x32xf32>
    %21 = arith.mulf %16, %20 : vector<8x32xf32>
    %22 = vector.broadcast %2 : vector<1x32xf32> to vector<8x32xf32>
    %23 = arith.mulf %21, %22 : vector<8x32xf32>
    %24 = vector.broadcast %3 : vector<1x32xf32> to vector<8x32xf32>
    %25 = arith.addf %23, %24 : vector<8x32xf32>
    %26 = arith.truncf %25 : vector<8x32xf32> to vector<8x32xbf16>
    %c0_10 = arith.constant 0 : index
    %c0_11 = arith.constant 0 : index
    %27 = vector.load %arg4[%c0_10, %c0_11] : memref<32x64xbf16, #tpu.memory_space<vmem>>, vector<32x64xbf16>
    %cst_12 = arith.constant dense<0.000000e+00> : vector<8x64xf32>
    %28 = tpu.matmul %26, %27, %cst_12 {dimension_numbers = #tpu.dot_dimension_numbers<[1], [0], [0], [1], [0, 0, 1, 1], [], []>} : vector<8x32xbf16>, vector<32x64xbf16>, vector<8x64xf32> -> vector<8x64xf32>
    %c0_13 = arith.constant 0 : index
    %c0_14 = arith.constant 0 : index
    %29 = vector.load %arg5[%c0_13, %c0_14] : memref<1x64xf32, #tpu.memory_space<vmem>>, vector<1x64xf32>
    %30 = vector.broadcast %29 : vector<1x64xf32> to vector<8x64xf32>
    %31 = arith.addf %28, %30 : vector<8x64xf32>
    %cst_15 = arith.constant 5.000000e-01 : f32
    %32 = vector.broadcast %cst_15 : f32 to vector<8x64xf32>
    %33 = arith.mulf %32, %31 : vector<8x64xf32>
    %cst_16 = arith.constant 0.707106769 : f32
    %34 = vector.broadcast %cst_16 : f32 to vector<8x64xf32>
    %35 = arith.mulf %31, %34 : vector<8x64xf32>
    %36 = math.absf %35 : vector<8x64xf32>
    %cst_17 = arith.constant 0.327591091 : f32
    %37 = vector.broadcast %cst_17 : f32 to vector<8x64xf32>
    %38 = arith.mulf %37, %36 : vector<8x64xf32>
    %cst_18 = arith.constant 1.000000e+00 : f32
    %39 = vector.broadcast %cst_18 : f32 to vector<8x64xf32>
    %40 = arith.addf %39, %38 : vector<8x64xf32>
    %cst_19 = arith.constant 1.000000e+00 : f32
    %41 = vector.broadcast %cst_19 : f32 to vector<8x64xf32>
    %42 = arith.divf %41, %40 : vector<8x64xf32>
    %cst_20 = arith.constant 1.06140542 : f32
    %43 = vector.broadcast %cst_20 : f32 to vector<8x64xf32>
    %44 = arith.mulf %43, %42 : vector<8x64xf32>
    %cst_21 = arith.constant -1.45315206 : f32
    %45 = vector.broadcast %cst_21 : f32 to vector<8x64xf32>
    %46 = arith.addf %44, %45 : vector<8x64xf32>
    %47 = arith.mulf %46, %42 : vector<8x64xf32>
    %cst_22 = arith.constant 1.42141378 : f32
    %48 = vector.broadcast %cst_22 : f32 to vector<8x64xf32>
    %49 = arith.addf %47, %48 : vector<8x64xf32>
    %50 = arith.mulf %49, %42 : vector<8x64xf32>
    %cst_23 = arith.constant -0.284496725 : f32
    %51 = vector.broadcast %cst_23 : f32 to vector<8x64xf32>
    %52 = arith.addf %50, %51 : vector<8x64xf32>
    %53 = arith.mulf %52, %42 : vector<8x64xf32>
    %cst_24 = arith.constant 0.254829586 : f32
    %54 = vector.broadcast %cst_24 : f32 to vector<8x64xf32>
    %55 = arith.addf %53, %54 : vector<8x64xf32>
    %56 = arith.mulf %55, %42 : vector<8x64xf32>
    %cst_25 = arith.constant 0.000000e+00 : f32
    %57 = vector.broadcast %cst_25 : f32 to vector<8x64xf32>
    %58 = arith.subf %57, %36 : vector<8x64xf32>
    %59 = arith.mulf %58, %36 : vector<8x64xf32>
    %60 = math.exp %59 : vector<8x64xf32>
    %61 = arith.mulf %56, %60 : vector<8x64xf32>
    %cst_26 = arith.constant 1.000000e+00 : f32
    %62 = vector.broadcast %cst_26 : f32 to vector<8x64xf32>
    %63 = arith.subf %62, %61 : vector<8x64xf32>
    %cst_27 = arith.constant 0.000000e+00 : f32
    %64 = vector.broadcast %cst_27 : f32 to vector<8x64xf32>
    %65 = arith.cmpf oge, %35, %64 : vector<8x64xf32>
    %cst_28 = arith.constant 0.000000e+00 : f32
    %66 = vector.broadcast %cst_28 : f32 to vector<8x64xf32>
    %67 = arith.subf %66, %63 : vector<8x64xf32>
    %68 = arith.select %65, %63, %67 : vector<8x64xi1>, vector<8x64xf32>
    %cst_29 = arith.constant 1.000000e+00 : f32
    %69 = vector.broadcast %cst_29 : f32 to vector<8x64xf32>
    %70 = arith.addf %69, %68 : vector<8x64xf32>
    %71 = arith.mulf %33, %70 : vector<8x64xf32>
    %c0_30 = arith.constant 0 : index
    %c0_31 = arith.constant 0 : index
    %72 = vector.load %arg6[%c0_30, %c0_31] : memref<3x64xf32, #tpu.memory_space<vmem>>, vector<3x64xf32>
    %cst_32 = arith.constant 0.000000e+00 : f32
    %73 = vector.broadcast %cst_32 : f32 to vector<8x64xf32>
    %cst_33 = arith.constant 0.000000e+00 : f32
    %74 = vector.broadcast %cst_33 : f32 to vector<1x64xf32>
    %75 = vector.extract_strided_slice %71 {offsets = [0, 0], sizes = [7, 64], strides = [1, 1]} : vector<8x64xf32> to vector<7x64xf32>
    %76 = tpu.concatenate %74, %75 in 0 : vector<1x64xf32>, vector<7x64xf32> -> vector<8x64xf32>
    %77 = vector.extract_strided_slice %72 {offsets = [0, 0], sizes = [1, 64], strides = [1, 1]} : vector<3x64xf32> to vector<1x64xf32>
    %78 = vector.broadcast %77 : vector<1x64xf32> to vector<8x64xf32>
    %79 = arith.mulf %76, %78 : vector<8x64xf32>
    %80 = arith.addf %73, %79 : vector<8x64xf32>
    %81 = vector.extract_strided_slice %72 {offsets = [1, 0], sizes = [1, 64], strides = [1, 1]} : vector<3x64xf32> to vector<1x64xf32>
    %82 = vector.broadcast %81 : vector<1x64xf32> to vector<8x64xf32>
    %83 = arith.mulf %71, %82 : vector<8x64xf32>
    %84 = arith.addf %80, %83 : vector<8x64xf32>
    %85 = vector.extract_strided_slice %71 {offsets = [1, 0], sizes = [7, 64], strides = [1, 1]} : vector<8x64xf32> to vector<7x64xf32>
    %cst_34 = arith.constant 0.000000e+00 : f32
    %86 = vector.broadcast %cst_34 : f32 to vector<1x64xf32>
    %87 = tpu.concatenate %85, %86 in 0 : vector<7x64xf32>, vector<1x64xf32> -> vector<8x64xf32>
    %88 = vector.extract_strided_slice %72 {offsets = [2, 0], sizes = [1, 64], strides = [1, 1]} : vector<3x64xf32> to vector<1x64xf32>
    %89 = vector.broadcast %88 : vector<1x64xf32> to vector<8x64xf32>
    %90 = arith.mulf %87, %89 : vector<8x64xf32>
    %91 = arith.addf %84, %90 : vector<8x64xf32>
    %c0_35 = arith.constant 0 : index
    %c0_36 = arith.constant 0 : index
    %92 = vector.load %arg7[%c0_35, %c0_36] : memref<1x64xf32, #tpu.memory_space<vmem>>, vector<1x64xf32>
    %93 = vector.broadcast %92 : vector<1x64xf32> to vector<8x64xf32>
    %94 = arith.addf %91, %93 : vector<8x64xf32>
    %c0_37 = arith.constant 0 : index
    %c0_38 = arith.constant 0 : index
    %95 = vector.load %arg10[%c0_37, %c0_38] : memref<1x64xf32, #tpu.memory_space<vmem>>, vector<1x64xf32>
    %96 = vector.broadcast %95 : vector<1x64xf32> to vector<8x64xf32>
    %97 = arith.subf %94, %96 : vector<8x64xf32>
    %c0_39 = arith.constant 0 : index
    %c0_40 = arith.constant 0 : index
    %98 = vector.load %arg11[%c0_39, %c0_40] : memref<1x64xf32, #tpu.memory_space<vmem>>, vector<1x64xf32>
    %cst_41 = arith.constant 9.99999974E-6 : f32
    %99 = vector.broadcast %cst_41 : f32 to vector<1x64xf32>
    %100 = arith.addf %98, %99 : vector<1x64xf32>
    %101 = math.rsqrt %100 : vector<1x64xf32>
    %102 = vector.broadcast %101 : vector<1x64xf32> to vector<8x64xf32>
    %103 = arith.mulf %97, %102 : vector<8x64xf32>
    %c0_42 = arith.constant 0 : index
    %c0_43 = arith.constant 0 : index
    %104 = vector.load %arg8[%c0_42, %c0_43] : memref<1x64xf32, #tpu.memory_space<vmem>>, vector<1x64xf32>
    %105 = vector.broadcast %104 : vector<1x64xf32> to vector<8x64xf32>
    %106 = arith.mulf %103, %105 : vector<8x64xf32>
    %c0_44 = arith.constant 0 : index
    %c0_45 = arith.constant 0 : index
    %107 = vector.load %arg9[%c0_44, %c0_45] : memref<1x64xf32, #tpu.memory_space<vmem>>, vector<1x64xf32>
    %108 = vector.broadcast %107 : vector<1x64xf32> to vector<8x64xf32>
    %109 = arith.addf %106, %108 : vector<8x64xf32>
    %110 = arith.negf %109 : vector<8x64xf32>
    %111 = math.exp %110 : vector<8x64xf32>
    %cst_46 = arith.constant 1.000000e+00 : f32
    %112 = vector.broadcast %cst_46 : f32 to vector<8x64xf32>
    %113 = arith.addf %112, %111 : vector<8x64xf32>
    %114 = arith.divf %112, %113 : vector<8x64xf32>
    %115 = arith.mulf %109, %114 : vector<8x64xf32>
    %116 = arith.truncf %115 : vector<8x64xf32> to vector<8x64xbf16>
    %c0_47 = arith.constant 0 : index
    %c0_48 = arith.constant 0 : index
    %117 = vector.load %arg12[%c0_47, %c0_48] : memref<64x32xbf16, #tpu.memory_space<vmem>>, vector<64x32xbf16>
    %cst_49 = arith.constant dense<0.000000e+00> : vector<8x32xf32>
    %118 = tpu.matmul %116, %117, %cst_49 {dimension_numbers = #tpu.dot_dimension_numbers<[1], [0], [0], [1], [0, 0, 1, 1], [], []>} : vector<8x64xbf16>, vector<64x32xbf16>, vector<8x32xf32> -> vector<8x32xf32>
    %c0_50 = arith.constant 0 : index
    %c0_51 = arith.constant 0 : index
    %119 = vector.load %arg13[%c0_50, %c0_51] : memref<1x32xf32, #tpu.memory_space<vmem>>, vector<1x32xf32>
    %120 = vector.broadcast %119 : vector<1x32xf32> to vector<8x32xf32>
    %121 = arith.addf %118, %120 : vector<8x32xf32>
    %122 = arith.addf %121, %1 : vector<8x32xf32>
    %c0_52 = arith.constant 0 : index
    %c0_53 = arith.constant 0 : index
    %c0_54 = arith.constant 0 : index
    %123 = vector.load %arg14[%c0_52, %c0_53, %c0_54] : memref<1x8x32xf32, #tpu.memory_space<vmem>>, vector<1x8x32xf32>
    %124 = vector.shape_cast %123 : vector<1x8x32xf32> to vector<8x32xf32>
    %125 = vector.shape_cast %122 : vector<8x32xf32> to vector<1x8x32xf32>
    tpu.vector_store %arg14[%c0_52, %c0_53, %c0_54], %125 {strides = array<i32>} : memref<1x8x32xf32, #tpu.memory_space<vmem>>, vector<1x8x32xf32>,
    return
  }
  func.func @transform_0(%arg0: i32) -> (i32, i32, i32) {
    %c0_i32 = arith.constant 0 : i32
    %c0_i32_0 = arith.constant 0 : i32
    %c0_i32_1 = arith.constant 0 : i32
    return %arg0, %c0_i32, %c0_i32_0 : i32, i32, i32
  }
  func.func @transform_1(%arg0: i32) -> (i32, i32) {
    %c0_i32 = arith.constant 0 : i32
    %c0_i32_0 = arith.constant 0 : i32
    %c0_i32_1 = arith.constant 0 : i32
    return %c0_i32, %c0_i32_0 : i32, i32
  }
  func.func @transform_2(%arg0: i32) -> (i32, i32) {
    %c0_i32 = arith.constant 0 : i32
    %c0_i32_0 = arith.constant 0 : i32
    %c0_i32_1 = arith.constant 0 : i32
    return %c0_i32, %c0_i32_0 : i32, i32
  }
  func.func @transform_3(%arg0: i32) -> (i32, i32) {
    %c0_i32 = arith.constant 0 : i32
    %c0_i32_0 = arith.constant 0 : i32
    %c0_i32_1 = arith.constant 0 : i32
    return %c0_i32, %c0_i32_0 : i32, i32
  }
  func.func @transform_4(%arg0: i32) -> (i32, i32) {
    %c0_i32 = arith.constant 0 : i32
    %c0_i32_0 = arith.constant 0 : i32
    %c0_i32_1 = arith.constant 0 : i32
    return %c0_i32, %c0_i32_0 : i32, i32
  }
  func.func @transform_5(%arg0: i32) -> (i32, i32) {
    %c0_i32 = arith.constant 0 : i32
    %c0_i32_0 = arith.constant 0 : i32
    %c0_i32_1 = arith.constant 0 : i32
    return %c0_i32, %c0_i32_0 : i32, i32
  }
  func.func @transform_6(%arg0: i32) -> (i32, i32) {
    %c0_i32 = arith.constant 0 : i32
    %c0_i32_0 = arith.constant 0 : i32
    %c0_i32_1 = arith.constant 0 : i32
    return %c0_i32, %c0_i32_0 : i32, i32
  }
  func.func @transform_7(%arg0: i32) -> (i32, i32) {
    %c0_i32 = arith.constant 0 : i32
    %c0_i32_0 = arith.constant 0 : i32
    %c0_i32_1 = arith.constant 0 : i32
    return %c0_i32, %c0_i32_0 : i32, i32
  }
  func.func @transform_8(%arg0: i32) -> (i32, i32) {
    %c0_i32 = arith.constant 0 : i32
    %c0_i32_0 = arith.constant 0 : i32
    %c0_i32_1 = arith.constant 0 : i32
    return %c0_i32, %c0_i32_0 : i32, i32
  }
  func.func @transform_9(%arg0: i32) -> (i32, i32) {
    %c0_i32 = arith.constant 0 : i32
    %c0_i32_0 = arith.constant 0 : i32
    %c0_i32_1 = arith.constant 0 : i32
    return %c0_i32, %c0_i32_0 : i32, i32
  }
  func.func @transform_10(%arg0: i32) -> (i32, i32) {
    %c0_i32 = arith.constant 0 : i32
    %c0_i32_0 = arith.constant 0 : i32
    %c0_i32_1 = arith.constant 0 : i32
    return %c0_i32, %c0_i32_0 : i32, i32
  }
  func.func @transform_11(%arg0: i32) -> (i32, i32) {
    %c0_i32 = arith.constant 0 : i32
    %c0_i32_0 = arith.constant 0 : i32
    %c0_i32_1 = arith.constant 0 : i32
    return %c0_i32, %c0_i32_0 : i32, i32
  }
  func.func @transform_12(%arg0: i32) -> (i32, i32) {
    %c0_i32 = arith.constant 0 : i32
    %c0_i32_0 = arith.constant 0 : i32
    %c0_i32_1 = arith.constant 0 : i32
    return %c0_i32, %c0_i32_0 : i32, i32
  }
  func.func @transform_13(%arg0: i32) -> (i32, i32, i32) {
    %c0_i32 = arith.constant 0 : i32
    %c0_i32_0 = arith.constant 0 : i32
    %c0_i32_1 = arith.constant 0 : i32
    return %arg0, %c0_i32, %c0_i32_0 : i32, i32, i32
  }
}

module attributes {stable_mosaic.version = 11 : i64} {
  func.func @_ffn_kernel(%arg0: i32, %arg1: memref<16x32xf32, #tpu.memory_space<vmem>>, %arg2: memref<1x32xf32, #tpu.memory_space<vmem>>, %arg3: memref<1x32xf32, #tpu.memory_space<vmem>>, %arg4: memref<32x128xbf16, #tpu.memory_space<vmem>>, %arg5: memref<1x128xf32, #tpu.memory_space<vmem>>, %arg6: memref<128x32xbf16, #tpu.memory_space<vmem>>, %arg7: memref<1x32xf32, #tpu.memory_space<vmem>>, %arg8: memref<1x32xf32, #tpu.memory_space<vmem>>, %arg9: memref<1x32xf32, #tpu.memory_space<vmem>>, %arg10: memref<16x32xf32, #tpu.memory_space<vmem>>) attributes {dimension_semantics = [#tpu.dimension_semantics<parallel>], iteration_bounds = array<i64: 1>, scalar_prefetch = 0 : i64, scratch_operands = 0 : i64, tpu.core_type = #tpu.core_type<tc>, window_params = [{transform_indices = @transform_0, window_bounds = array<i64: 16, 32>}, {pipeline_mode = #tpu.pipeline_mode<synchronous>, transform_indices = @transform_1, window_bounds = array<i64: 1, 32>}, {pipeline_mode = #tpu.pipeline_mode<synchronous>, transform_indices = @transform_2, window_bounds = array<i64: 1, 32>}, {pipeline_mode = #tpu.pipeline_mode<synchronous>, transform_indices = @transform_3, window_bounds = array<i64: 32, 128>}, {pipeline_mode = #tpu.pipeline_mode<synchronous>, transform_indices = @transform_4, window_bounds = array<i64: 1, 128>}, {pipeline_mode = #tpu.pipeline_mode<synchronous>, transform_indices = @transform_5, window_bounds = array<i64: 128, 32>}, {pipeline_mode = #tpu.pipeline_mode<synchronous>, transform_indices = @transform_6, window_bounds = array<i64: 1, 32>}, {pipeline_mode = #tpu.pipeline_mode<synchronous>, transform_indices = @transform_7, window_bounds = array<i64: 1, 32>}, {pipeline_mode = #tpu.pipeline_mode<synchronous>, transform_indices = @transform_8, window_bounds = array<i64: 1, 32>}, {transform_indices = @transform_9, window_bounds = array<i64: 16, 32>}]} {
    %c0 = arith.constant 0 : index
    %c0_0 = arith.constant 0 : index
    %0 = vector.load %arg1[%c0, %c0_0] : memref<16x32xf32, #tpu.memory_space<vmem>>, vector<16x32xf32>
    %c0_1 = arith.constant 0 : index
    %c0_2 = arith.constant 0 : index
    %1 = vector.load %arg2[%c0_1, %c0_2] : memref<1x32xf32, #tpu.memory_space<vmem>>, vector<1x32xf32>
    %c0_3 = arith.constant 0 : index
    %c0_4 = arith.constant 0 : index
    %2 = vector.load %arg3[%c0_3, %c0_4] : memref<1x32xf32, #tpu.memory_space<vmem>>, vector<1x32xf32>
    %cst = arith.constant dense<0.000000e+00> : vector<16xf32>
    %3 = vector.multi_reduction <add>, %0, %cst [1] : vector<16x32xf32> to vector<16xf32>
    %4 = vector.shape_cast %3 : vector<16xf32> to vector<16x1xf32>
    %cst_5 = arith.constant 3.200000e+01 : f32
    %5 = vector.broadcast %cst_5 : f32 to vector<16x1xf32>
    %6 = arith.divf %4, %5 : vector<16x1xf32>
    %7 = vector.broadcast %6 : vector<16x1xf32> to vector<16x32xf32>
    %8 = arith.subf %0, %7 : vector<16x32xf32>
    %9 = arith.mulf %8, %8 : vector<16x32xf32>
    %cst_6 = arith.constant dense<0.000000e+00> : vector<16xf32>
    %10 = vector.multi_reduction <add>, %9, %cst_6 [1] : vector<16x32xf32> to vector<16xf32>
    %11 = vector.shape_cast %10 : vector<16xf32> to vector<16x1xf32>
    %cst_7 = arith.constant 3.200000e+01 : f32
    %12 = vector.broadcast %cst_7 : f32 to vector<16x1xf32>
    %13 = arith.divf %11, %12 : vector<16x1xf32>
    %14 = vector.broadcast %6 : vector<16x1xf32> to vector<16x32xf32>
    %15 = arith.subf %0, %14 : vector<16x32xf32>
    %cst_8 = arith.constant 9.99999974E-6 : f32
    %16 = vector.broadcast %cst_8 : f32 to vector<16x1xf32>
    %17 = arith.addf %13, %16 : vector<16x1xf32>
    %18 = math.rsqrt %17 : vector<16x1xf32>
    %19 = vector.broadcast %18 : vector<16x1xf32> to vector<16x32xf32>
    %20 = arith.mulf %15, %19 : vector<16x32xf32>
    %21 = vector.broadcast %1 : vector<1x32xf32> to vector<16x32xf32>
    %22 = arith.mulf %20, %21 : vector<16x32xf32>
    %23 = vector.broadcast %2 : vector<1x32xf32> to vector<16x32xf32>
    %24 = arith.addf %22, %23 : vector<16x32xf32>
    %25 = arith.truncf %24 : vector<16x32xf32> to vector<16x32xbf16>
    %c0_9 = arith.constant 0 : index
    %c0_10 = arith.constant 0 : index
    %26 = vector.load %arg4[%c0_9, %c0_10] : memref<32x128xbf16, #tpu.memory_space<vmem>>, vector<32x128xbf16>
    %cst_11 = arith.constant dense<0.000000e+00> : vector<16x128xf32>
    %27 = tpu.matmul %25, %26, %cst_11 {dimension_numbers = #tpu.dot_dimension_numbers<[1], [0], [0], [1], [0, 0, 1, 1], [], []>} : vector<16x32xbf16>, vector<32x128xbf16>, vector<16x128xf32> -> vector<16x128xf32>
    %c0_12 = arith.constant 0 : index
    %c0_13 = arith.constant 0 : index
    %28 = vector.load %arg5[%c0_12, %c0_13] : memref<1x128xf32, #tpu.memory_space<vmem>>, vector<1x128xf32>
    %29 = vector.broadcast %28 : vector<1x128xf32> to vector<16x128xf32>
    %30 = arith.addf %27, %29 : vector<16x128xf32>
    %31 = arith.negf %30 : vector<16x128xf32>
    %32 = math.exp %31 : vector<16x128xf32>
    %cst_14 = arith.constant 1.000000e+00 : f32
    %33 = vector.broadcast %cst_14 : f32 to vector<16x128xf32>
    %34 = arith.addf %33, %32 : vector<16x128xf32>
    %35 = arith.divf %33, %34 : vector<16x128xf32>
    %36 = arith.mulf %30, %35 : vector<16x128xf32>
    %37 = arith.truncf %36 : vector<16x128xf32> to vector<16x128xbf16>
    %c0_15 = arith.constant 0 : index
    %c0_16 = arith.constant 0 : index
    %38 = vector.load %arg6[%c0_15, %c0_16] : memref<128x32xbf16, #tpu.memory_space<vmem>>, vector<128x32xbf16>
    %cst_17 = arith.constant dense<0.000000e+00> : vector<16x32xf32>
    %39 = tpu.matmul %37, %38, %cst_17 {dimension_numbers = #tpu.dot_dimension_numbers<[1], [0], [0], [1], [0, 0, 1, 1], [], []>} : vector<16x128xbf16>, vector<128x32xbf16>, vector<16x32xf32> -> vector<16x32xf32>
    %c0_18 = arith.constant 0 : index
    %c0_19 = arith.constant 0 : index
    %40 = vector.load %arg7[%c0_18, %c0_19] : memref<1x32xf32, #tpu.memory_space<vmem>>, vector<1x32xf32>
    %41 = vector.broadcast %40 : vector<1x32xf32> to vector<16x32xf32>
    %42 = arith.addf %39, %41 : vector<16x32xf32>
    %cst_20 = arith.constant 5.000000e-01 : f32
    %43 = vector.broadcast %cst_20 : f32 to vector<16x32xf32>
    %44 = arith.mulf %43, %42 : vector<16x32xf32>
    %45 = arith.addf %44, %0 : vector<16x32xf32>
    %c0_21 = arith.constant 0 : index
    %c0_22 = arith.constant 0 : index
    %46 = vector.load %arg8[%c0_21, %c0_22] : memref<1x32xf32, #tpu.memory_space<vmem>>, vector<1x32xf32>
    %c0_23 = arith.constant 0 : index
    %c0_24 = arith.constant 0 : index
    %47 = vector.load %arg9[%c0_23, %c0_24] : memref<1x32xf32, #tpu.memory_space<vmem>>, vector<1x32xf32>
    %cst_25 = arith.constant dense<0.000000e+00> : vector<16xf32>
    %48 = vector.multi_reduction <add>, %45, %cst_25 [1] : vector<16x32xf32> to vector<16xf32>
    %49 = vector.shape_cast %48 : vector<16xf32> to vector<16x1xf32>
    %cst_26 = arith.constant 3.200000e+01 : f32
    %50 = vector.broadcast %cst_26 : f32 to vector<16x1xf32>
    %51 = arith.divf %49, %50 : vector<16x1xf32>
    %52 = vector.broadcast %51 : vector<16x1xf32> to vector<16x32xf32>
    %53 = arith.subf %45, %52 : vector<16x32xf32>
    %54 = arith.mulf %53, %53 : vector<16x32xf32>
    %cst_27 = arith.constant dense<0.000000e+00> : vector<16xf32>
    %55 = vector.multi_reduction <add>, %54, %cst_27 [1] : vector<16x32xf32> to vector<16xf32>
    %56 = vector.shape_cast %55 : vector<16xf32> to vector<16x1xf32>
    %cst_28 = arith.constant 3.200000e+01 : f32
    %57 = vector.broadcast %cst_28 : f32 to vector<16x1xf32>
    %58 = arith.divf %56, %57 : vector<16x1xf32>
    %59 = vector.broadcast %51 : vector<16x1xf32> to vector<16x32xf32>
    %60 = arith.subf %45, %59 : vector<16x32xf32>
    %cst_29 = arith.constant 9.99999974E-6 : f32
    %61 = vector.broadcast %cst_29 : f32 to vector<16x1xf32>
    %62 = arith.addf %58, %61 : vector<16x1xf32>
    %63 = math.rsqrt %62 : vector<16x1xf32>
    %64 = vector.broadcast %63 : vector<16x1xf32> to vector<16x32xf32>
    %65 = arith.mulf %60, %64 : vector<16x32xf32>
    %66 = vector.broadcast %46 : vector<1x32xf32> to vector<16x32xf32>
    %67 = arith.mulf %65, %66 : vector<16x32xf32>
    %68 = vector.broadcast %47 : vector<1x32xf32> to vector<16x32xf32>
    %69 = arith.addf %67, %68 : vector<16x32xf32>
    %c0_30 = arith.constant 0 : index
    %c0_31 = arith.constant 0 : index
    %70 = vector.load %arg10[%c0_30, %c0_31] : memref<16x32xf32, #tpu.memory_space<vmem>>, vector<16x32xf32>
    tpu.vector_store %arg10[%c0_30, %c0_31], %69 {strides = array<i32>} : memref<16x32xf32, #tpu.memory_space<vmem>>, vector<16x32xf32>,
    return
  }
  func.func @transform_0(%arg0: i32) -> (i32, i32) {
    %c0_i32 = arith.constant 0 : i32
    %c0_i32_0 = arith.constant 0 : i32
    return %arg0, %c0_i32 : i32, i32
  }
  func.func @transform_1(%arg0: i32) -> (i32, i32) {
    %c0_i32 = arith.constant 0 : i32
    %c0_i32_0 = arith.constant 0 : i32
    %c0_i32_1 = arith.constant 0 : i32
    return %c0_i32, %c0_i32_0 : i32, i32
  }
  func.func @transform_2(%arg0: i32) -> (i32, i32) {
    %c0_i32 = arith.constant 0 : i32
    %c0_i32_0 = arith.constant 0 : i32
    %c0_i32_1 = arith.constant 0 : i32
    return %c0_i32, %c0_i32_0 : i32, i32
  }
  func.func @transform_3(%arg0: i32) -> (i32, i32) {
    %c0_i32 = arith.constant 0 : i32
    %c0_i32_0 = arith.constant 0 : i32
    %c0_i32_1 = arith.constant 0 : i32
    return %c0_i32, %c0_i32_0 : i32, i32
  }
  func.func @transform_4(%arg0: i32) -> (i32, i32) {
    %c0_i32 = arith.constant 0 : i32
    %c0_i32_0 = arith.constant 0 : i32
    %c0_i32_1 = arith.constant 0 : i32
    return %c0_i32, %c0_i32_0 : i32, i32
  }
  func.func @transform_5(%arg0: i32) -> (i32, i32) {
    %c0_i32 = arith.constant 0 : i32
    %c0_i32_0 = arith.constant 0 : i32
    %c0_i32_1 = arith.constant 0 : i32
    return %c0_i32, %c0_i32_0 : i32, i32
  }
  func.func @transform_6(%arg0: i32) -> (i32, i32) {
    %c0_i32 = arith.constant 0 : i32
    %c0_i32_0 = arith.constant 0 : i32
    %c0_i32_1 = arith.constant 0 : i32
    return %c0_i32, %c0_i32_0 : i32, i32
  }
  func.func @transform_7(%arg0: i32) -> (i32, i32) {
    %c0_i32 = arith.constant 0 : i32
    %c0_i32_0 = arith.constant 0 : i32
    %c0_i32_1 = arith.constant 0 : i32
    return %c0_i32, %c0_i32_0 : i32, i32
  }
  func.func @transform_8(%arg0: i32) -> (i32, i32) {
    %c0_i32 = arith.constant 0 : i32
    %c0_i32_0 = arith.constant 0 : i32
    %c0_i32_1 = arith.constant 0 : i32
    return %c0_i32, %c0_i32_0 : i32, i32
  }
  func.func @transform_9(%arg0: i32) -> (i32, i32) {
    %c0_i32 = arith.constant 0 : i32
    %c0_i32_0 = arith.constant 0 : i32
    return %arg0, %c0_i32 : i32, i32
  }
}

</mosaic_0001>

<llo_original>
// kernel: conformer_block.4
$region0: #{conformer_block.4}
  #allocation0 [shape = 'u32[]', space=smem, size = 0x4, offset = 0x4, fixed_abs, tag = 'smem constant byte address 0x4 - core index']
  #allocation1 [shape = 'u32[144,128]{1,0:T(1,128)}', space=vmem, size = 0x12000, scoped, tag = 'internal scratch']
  %s0 = inlined_call_operand.vmem [shape: f32[16,32], index: 0, kind: input, shape index: {}]
  %s1 = inlined_call_operand.vmem [shape: f32[1,32], index: 1, kind: input, shape index: {}]
  %s2 = inlined_call_operand.vmem [shape: f32[1,32], index: 2, kind: input, shape index: {}]
  %s3 = inlined_call_operand.vmem [shape: bf16[32,128], index: 3, kind: input, shape index: {}]
  %s4 = inlined_call_operand.vmem [shape: f32[1,128], index: 4, kind: input, shape index: {}]
  %s5 = inlined_call_operand.vmem [shape: bf16[128,32], index: 5, kind: input, shape index: {}]
  %s6 = inlined_call_operand.vmem [shape: f32[1,32], index: 6, kind: input, shape index: {}]
  %s7 = inlined_call_operand.vmem [shape: f32[16,32], index: 7, kind: output, shape index: {}]
  %s8 = sld [smem:[#allocation0]]
  $region38: #{conformer_block.4} parent=0
    _
  %s10 = ssub.s32 1, %s8
  %s11 = scalar_select 0, %s10, %s8
  // Predicated region
  $region2: #{conformer_block.4} parent=0 // pred_check
    _
  $region3: #{conformer_block.4} parent=0 // pred_check_branch
    %13 = sbr.rel (0) target = $region5
  $region4: #{conformer_block.4} parent=0 // pred_region
    _
  $region5: #{conformer_block.4} parent=0 // pred_fallthru
    _
  // Predicated region
  $region6: #{conformer_block.4} parent=0 // pred_check
    _
  $region7: #{conformer_block.4} parent=0 // pred_check_branch
    %15 = sbr.rel (0) target = $region9
  $region8: #{conformer_block.4} parent=0 // pred_region
    _
  $region9: #{conformer_block.4} parent=0 // pred_fallthru
    _
  // Predicated region
  $region10: #{conformer_block.4} parent=0 // pred_check
    _
  $region11: #{conformer_block.4} parent=0 // pred_check_branch
    %17 = sbr.rel (0) target = $region13
  $region12: #{conformer_block.4} parent=0 // pred_region
    _
  $region13: #{conformer_block.4} parent=0 // pred_fallthru
    _
  // Predicated region
  $region14: #{conformer_block.4} parent=0 // pred_check
    _
  $region15: #{conformer_block.4} parent=0 // pred_check_branch
    %19 = sbr.rel (0) target = $region17
  $region16: #{conformer_block.4} parent=0 // pred_region
    _
  $region17: #{conformer_block.4} parent=0 // pred_fallthru
    _
  // Predicated region
  $region18: #{conformer_block.4} parent=0 // pred_check
    _
  $region19: #{conformer_block.4} parent=0 // pred_check_branch
    %21 = sbr.rel (0) target = $region21
  $region20: #{conformer_block.4} parent=0 // pred_region
    _
  $region21: #{conformer_block.4} parent=0 // pred_fallthru
    _
  // Predicated region
  $region22: #{conformer_block.4} parent=0 // pred_check
    _
  $region23: #{conformer_block.4} parent=0 // pred_check_branch
    %23 = sbr.rel (0) target = $region25
  $region24: #{conformer_block.4} parent=0 // pred_region
    _
  $region25: #{conformer_block.4} parent=0 // pred_fallthru
    _
  // Predicated region
  $region26: #{conformer_block.4} parent=0 // pred_check
    _
  $region27: #{conformer_block.4} parent=0 // pred_check_branch
    %25 = sbr.rel (0) target = $region29
  $region28: #{conformer_block.4} parent=0 // pred_region
    _
  $region29: #{conformer_block.4} parent=0 // pred_fallthru
    _
  %v27 = vld [vmem:[%s0] sm:$0xff]
  %v28 = vld [vmem:[%s0 + $0x8] sm:$0xff]
  %v29 = vld [vmem:[%s1] sm:$0x1]
  %v30 = vld [vmem:[%s2] sm:$0x1]
  %vm31 = vcmask 261120
  %v32 = vsel %vm31, %v27, 0.0
  %33 = vadd.xlane.f32.xlu0 %v32
  %v34 = vpop.xlane.xlu0 %33
  %v35 = vsel %vm31, %v28, 0.0
  %36 = vadd.xlane.f32.xlu0 %v35
  %v37 = vpop.xlane.xlu0 %36
  %v38 = vrcp.pop 32.0
  %v39 = vmul.f32 %v34, %v38
  %v40 = vmul.f32 %v37, %v38
  %v41 = vsub.f32 %v27, %v39
  %v42 = vsub.f32 %v28, %v40
  %v43 = vmul.f32 %v41, %v41
  %v44 = vmul.f32 %v42, %v42
  %v45 = vsel %vm31, %v43, 0.0
  %46 = vadd.xlane.f32.xlu0 %v45
  %v47 = vpop.xlane.xlu0 %46
  %v48 = vsel %vm31, %v44, 0.0
  %49 = vadd.xlane.f32.xlu0 %v48
  %v50 = vpop.xlane.xlu0 %49
  %v51 = vmul.f32 %v47, %v38
  %v52 = vmul.f32 %v50, %v38
  %v53 = vadd.f32 %v51, 1e-05
  %v54 = vadd.f32 %v52, 1e-05
  %v55 = vrsqrt.pop %v53
  %v56 = vrsqrt.pop %v54
  %v57 = vmul.f32 %v41, %v55
  %v58 = vmul.f32 %v42, %v56
  %v60 = vlaneseq
  %v61 = vshrl.u32 %v60, 7
  %v62 = vsub.s32 0, %v61
  %v63 = vrot.slane %v29, %v62
  %v65 = vmul.f32 %v57, %v63
  %v66 = vmul.f32 %v58, %v63
  %v68 = vlaneseq
  %v69 = vshrl.u32 %v68, 7
  %v70 = vsub.s32 0, %v69
  %v71 = vrot.slane %v30, %v70
  %v73 = vadd.f32 %v65, %v71
  %v74 = vadd.f32 %v66, %v71
  %v75 = vpack.c.bf16 %v74, %v73
  %v76 = vld [vmem:[%s3] sm:$0xf]
  %v77 = vld [vmem:[%s3 + $0x4] sm:$0xf]
  %v78 = vld [vmem:[%s3 + $0x8] sm:$0xf]
  %v79 = vld [vmem:[%s3 + $0xc] sm:$0xf]
  %v80 = vld [vmem:[%s4] sm:$0x1]
  %v82 = vlaneseq
  %v83 = vshrl.u32 %v82, 7
  %v84 = vsub.s32 0, %v83
  %v85 = vrot.slane %v80, %v84
  %v91 = vunpack.c.l.b16 %v76
  %v92 = vunpack.c.l.b16 %v77
  %v93 = vunpack.c.l.b16 %v78
  %v94 = vunpack.c.l.b16 %v79
  %v95 = vpack.c.b16 %v92, %v91
  %v96 = vpack.c.b16 %v94, %v93
  %v100 = vsel %vm31, %v75, 0
  %102 = vmatprep.subr.bf16.mxu0 0
  %103 = vmatpush1.bf16.msra.mxu0 %v95
  %104 = vmatprep.subr.bf16.mxu0 0
  %105 = vmatpush1.bf16.msra.mxu0 %v96
  %106 = vmatprep.subr.bf16.mxu0 0
  %107 = vmatpush1.bf16.msra.mxu0 0
  %108 = vmatprep.subr.bf16.mxu0 0
  %109 = vmatpush1.bf16.msra.mxu0 0
  %110 = vmatprep.subr.bf16.mxu0 0
  %111 = vmatpush1.bf16.msra.mxu0 0
  %112 = vmatprep.subr.bf16.mxu0 0
  %113 = vmatpush1.bf16.msra.mxu0 0
  %114 = vmatprep.subr.bf16.mxu0 0
  %115 = vmatpush1.bf16.msra.mxu0 0
  %116 = vmatprep.subr.bf16.mxu0 0
  %117 = vmatpush1.bf16.msra.mxu0 0
  %118 = vmatprep.subr.bf16.mxu0 0
  %119 = vmatpush1.bf16.msra.mxu0 0
  %120 = vmatprep.subr.bf16.mxu0 0
  %121 = vmatpush1.bf16.msra.mxu0 0
  %122 = vmatprep.subr.bf16.mxu0 0
  %123 = vmatpush1.bf16.msra.mxu0 0
  %124 = vmatprep.subr.bf16.mxu0 0
  %125 = vmatpush1.bf16.msra.mxu0 0
  %126 = vmatprep.subr.bf16.mxu0 0
  %127 = vmatpush1.bf16.msra.mxu0 0
  %128 = vmatprep.subr.bf16.mxu0 0
  %129 = vmatpush1.bf16.msra.mxu0 0
  %130 = vmatprep.subr.bf16.mxu0 0
  %131 = vmatpush1.bf16.msra.mxu0 0
  %132 = vmatprep.subr.bf16.mxu0 0
  %133 = vmatpush1.bf16.msra.mxu0 0
  %134 = vmatprep.mubr.bf16.mxu0 0
  %135 = vmatmul.mubr.bf16.gmra.mrb[0].mxu0 %v100
  %v136 = vpop.f32.mrb[0].mxu0
  %v137 = vadd.f32 %v85, %v136
  %v138 = vpop.f32.mrb[0].mxu0
  %v139 = vpop.f32.mrb[0].mxu0
  %v140 = vadd.f32 %v85, %v139
  %v141 = vpop.f32.mrb[0].mxu0
  %142 = vdwg.mxu0
  %v143 = vxor.u32 %v137, 2147483648
  %v144 = vxor.u32 %v140, 2147483648
  %v145 = vmul.f32 %v143, 1.442695
  %v146 = vpow.pop %v145
  %v147 = vmul.f32 %v144, 1.442695
  %v148 = vpow.pop %v147
  %v149 = vadd.f32 %v146, 1.0
  %v150 = vadd.f32 %v148, 1.0
  %v151 = vrcp.pop %v149
  %v152 = vmul.f32 1.0, %v151
  %v153 = vrcp.pop %v150
  %v154 = vmul.f32 1.0, %v153
  %v155 = vmul.f32 %v137, %v152
  %v156 = vmul.f32 %v140, %v154
  %v157 = vpack.c.bf16 %v156, %v155
  %v158 = vld [vmem:[%s5] sm:$0xf]
  %v159 = vld [vmem:[%s5 + $0x4] sm:$0xf]
  %v160 = vld [vmem:[%s5 + $0x8] sm:$0xf]
  %v161 = vld [vmem:[%s5 + $0xc] sm:$0xf]
  %v162 = vld [vmem:[%s5 + $0x10] sm:$0xf]
  %v163 = vld [vmem:[%s5 + $0x14] sm:$0xf]
  %v164 = vld [vmem:[%s5 + $0x18] sm:$0xf]
  %v165 = vld [vmem:[%s5 + $0x1c] sm:$0xf]
  %v166 = vld [vmem:[%s5 + $0x20] sm:$0xf]
  %v167 = vld [vmem:[%s5 + $0x24] sm:$0xf]
  %v168 = vld [vmem:[%s5 + $0x28] sm:$0xf]
  %v169 = vld [vmem:[%s5 + $0x2c] sm:$0xf]
  %v170 = vld [vmem:[%s5 + $0x30] sm:$0xf]
  %v171 = vld [vmem:[%s5 + $0x34] sm:$0xf]
  %v172 = vld [vmem:[%s5 + $0x38] sm:$0xf]
  %v173 = vld [vmem:[%s5 + $0x3c] sm:$0xf]
  %v174 = vld [vmem:[%s6] sm:$0x1]
  %v176 = vlaneseq
  %v177 = vshrl.u32 %v176, 7
  %v178 = vsub.s32 0, %v177
  %v179 = vrot.slane %v174, %v178
  %v197 = vunpack.c.l.b16 %v158
  %v198 = vunpack.c.l.b16 %v159
  %v199 = vunpack.c.l.b16 %v160
  %v200 = vunpack.c.l.b16 %v161
  %v201 = vunpack.c.l.b16 %v162
  %v202 = vunpack.c.l.b16 %v163
  %v203 = vunpack.c.l.b16 %v164
  %v204 = vunpack.c.l.b16 %v165
  %v205 = vunpack.c.l.b16 %v166
  %v206 = vunpack.c.l.b16 %v167
  %v207 = vunpack.c.l.b16 %v168
  %v208 = vunpack.c.l.b16 %v169
  %v209 = vunpack.c.l.b16 %v170
  %v210 = vunpack.c.l.b16 %v171
  %v211 = vunpack.c.l.b16 %v172
  %v212 = vunpack.c.l.b16 %v173
  %v213 = vpack.c.b16 %v198, %v197
  %v214 = vpack.c.b16 %v200, %v199
  %v215 = vpack.c.b16 %v202, %v201
  %v216 = vpack.c.b16 %v204, %v203
  %v217 = vpack.c.b16 %v206, %v205
  %v218 = vpack.c.b16 %v208, %v207
  %v219 = vpack.c.b16 %v210, %v209
  %v220 = vpack.c.b16 %v212, %v211
  %229 = vmatprep.subr.bf16.mxu0 0
  %230 = vmatpush1.bf16.msra.mxu0 %v213
  %231 = vmatprep.subr.bf16.mxu0 0
  %232 = vmatpush1.bf16.msra.mxu0 %v214
  %233 = vmatprep.subr.bf16.mxu0 0
  %234 = vmatpush1.bf16.msra.mxu0 %v215
  %235 = vmatprep.subr.bf16.mxu0 0
  %236 = vmatpush1.bf16.msra.mxu0 %v216
  %237 = vmatprep.subr.bf16.mxu0 0
  %238 = vmatpush1.bf16.msra.mxu0 %v217
  %239 = vmatprep.subr.bf16.mxu0 0
  %240 = vmatpush1.bf16.msra.mxu0 %v218
  %241 = vmatprep.subr.bf16.mxu0 0
  %242 = vmatpush1.bf16.msra.mxu0 %v219
  %243 = vmatprep.subr.bf16.mxu0 0
  %244 = vmatpush1.bf16.msra.mxu0 %v220
  %245 = vmatprep.subr.bf16.mxu0 0
  %246 = vmatpush1.bf16.msra.mxu0 0
  %247 = vmatprep.subr.bf16.mxu0 0
  %248 = vmatpush1.bf16.msra.mxu0 0
  %249 = vmatprep.subr.bf16.mxu0 0
  %250 = vmatpush1.bf16.msra.mxu0 0
  %251 = vmatprep.subr.bf16.mxu0 0
  %252 = vmatpush1.bf16.msra.mxu0 0
  %253 = vmatprep.subr.bf16.mxu0 0
  %254 = vmatpush1.bf16.msra.mxu0 0
  %255 = vmatprep.subr.bf16.mxu0 0
  %256 = vmatpush1.bf16.msra.mxu0 0
  %257 = vmatprep.subr.bf16.mxu0 0
  %258 = vmatpush1.bf16.msra.mxu0 0
  %259 = vmatprep.subr.bf16.mxu0 0
  %260 = vmatpush1.bf16.msra.mxu0 0
  %261 = vmatprep.mubr.bf16.mxu0 0
  %262 = vmatmul.mubr.bf16.gmra.mrb[0].mxu0 %v157
  %v263 = vpop.f32.mrb[0].mxu0
  %v264 = vadd.f32 %v179, %v263
  %v265 = vpop.f32.mrb[0].mxu0
  %v266 = vpop.f32.mrb[0].mxu0
  %v267 = vadd.f32 %v179, %v266
  %v268 = vpop.f32.mrb[0].mxu0
  %269 = vdwg.mxu0
  %v270 = vmul.f32 %v264, 0.5
  %v271 = vmul.f32 %v267, 0.5
  %v272 = vadd.f32 %v270, %v27
  %v273 = vadd.f32 %v271, %v28
  %274 = vst.msk [vmem:[%s7] sm:$0xff] %vm31, %v272
  %275 = vst.msk [vmem:[%s7 + $0x8] sm:$0xff] %vm31, %v273
  // Predicated region
  $region30: #{conformer_block.4} parent=0 // pred_check
    _
  $region31: #{conformer_block.4} parent=0 // pred_check_branch
    %277 = sbr.rel (0) target = $region33
  $region32: #{conformer_block.4} parent=0 // pred_region
    _
  $region33: #{conformer_block.4} parent=0 // pred_fallthru
    _
  // Predicated region
  $region34: #{conformer_block.4} parent=0 // pred_check
    _
  $region35: #{conformer_block.4} parent=0 // pred_check_branch
    %279 = sbr.rel (0) target = $region37
  $region36: #{conformer_block.4} parent=0 // pred_region
    _
  $region37: #{conformer_block.4} parent=0 // pred_fallthru
    _

// kernel: conformer_block.5
$region0: #{conformer_block.5}
  #allocation0 [shape = 'u32[]', space=smem, size = 0x4, offset = 0x4, fixed_abs, tag = 'smem constant byte address 0x4 - core index']
  #allocation1 [shape = 'u32[144,128]{1,0:T(1,128)}', space=vmem, size = 0x12000, scoped, tag = 'internal scratch']
  %s0 = inlined_call_operand.vmem [shape: f32[2,8,32], index: 0, kind: input, shape index: {}]
  %s1 = inlined_call_operand.vmem [shape: bf16[32,32], index: 1, kind: input, shape index: {}]
  %s2 = inlined_call_operand.vmem [shape: bf16[32,32], index: 2, kind: input, shape index: {}]
  %s3 = inlined_call_operand.vmem [shape: bf16[32,32], index: 3, kind: input, shape index: {}]
  %s4 = inlined_call_operand.vmem [shape: f32[1,32], index: 4, kind: input, shape index: {}]
  %s5 = inlined_call_operand.vmem [shape: f32[1,32], index: 5, kind: input, shape index: {}]
  %s6 = inlined_call_operand.vmem [shape: f32[1,32], index: 6, kind: input, shape index: {}]
  %s7 = inlined_call_operand.vmem [shape: f32[8,32], index: 7, kind: input, shape index: {}]
  %s8 = inlined_call_operand.vmem [shape: bf16[32,32], index: 8, kind: input, shape index: {}]
  %s9 = inlined_call_operand.vmem [shape: f32[1,32], index: 9, kind: input, shape index: {}]
  %s10 = inlined_call_operand.vmem [shape: f32[1,32], index: 10, kind: input, shape index: {}]
  %s11 = inlined_call_operand.vmem [shape: bf16[32,32], index: 11, kind: input, shape index: {}]
  %s12 = inlined_call_operand.vmem [shape: f32[1,32], index: 12, kind: input, shape index: {}]
  %s13 = inlined_call_operand.vmem [shape: f32[2,8,32], index: 13, kind: output, shape index: {}]
  %s14 = sld [smem:[#allocation0]]
  $region85: #{conformer_block.5} parent=0
    _
  %s16 = ssub.s32 1, %s14
  %s17 = scalar_select 0, %s16, %s14
  loop: start=0, step=1, limit=4
  $region2: #{conformer_block.5} parent=0 // loop_pre_header
    _
  $region3: #{conformer_block.5} parent=0 // loop_header
    %s19 = sphi 0, %s23
    %p20 = scmp.ge.s32.totalorder %s19, 4
    %s29 = sphi 0, %s31
    %s32 = sphi 0, %s29
    %s33 = sphi 0, %s32
    %s49 = sphi 0, %s33
    %s53 = sphi 0, %s53
    %s55 = sphi 0, %s53
    %s56 = sphi 0, %s55
    %s70 = sphi 0, %s56
    %s74 = sphi 0, %s74
    %s76 = sphi 0, %s74
    %s77 = sphi 0, %s76
    %s91 = sphi 0, %s77
    %s95 = sphi 0, %s95
    %s97 = sphi 0, %s95
    %s98 = sphi 0, %s97
    %s112 = sphi 0, %s98
    %s116 = sphi 0, %s116
    %s118 = sphi 0, %s116
    %s119 = sphi 0, %s118
    %s133 = sphi 0, %s119
    %s137 = sphi 0, %s137
    %s139 = sphi 0, %s137
    %s140 = sphi 0, %s139
    %s154 = sphi 0, %s140
    %s158 = sphi 0, %s158
    %s160 = sphi 0, %s158
    %s161 = sphi 0, %s160
    %s175 = sphi 0, %s161
    %s179 = sphi 0, %s179
    %s181 = sphi 0, %s179
    %s182 = sphi 0, %s181
    %s196 = sphi 0, %s182
    %s200 = sphi 0, %s200
    %s202 = sphi 0, %s200
    %s203 = sphi 0, %s202
    %s217 = sphi 0, %s203
    %s221 = sphi 0, %s221
    %s223 = sphi 0, %s221
    %s224 = sphi 0, %s223
    %s238 = sphi 0, %s224
    %s242 = sphi 0, %s242
    %s244 = sphi 0, %s242
    %s245 = sphi 0, %s244
    %s259 = sphi 0, %s245
    %s263 = sphi 0, %s263
    %s265 = sphi 0, %s263
    %s266 = sphi 0, %s265
    %s280 = sphi 0, %s266
    %s284 = sphi 0, %s284
    %s286 = sphi 0, %s284
    %s287 = sphi 0, %s286
    %s301 = sphi 0, %s287
    %s307 = sphi 0, %s309
    %s310 = sphi 0, %s307
    %s311 = sphi 0, %s310
    %s327 = sphi 0, %s311
  $region4: #{conformer_block.5} parent=0 // loop_header_branch
    %22 = sbr.rel (%p20) target = $region8
  $region5: #{conformer_block.5} parent=0 // loop_body
    %s24 = ssub.s32 %s19, 1
    %s25 = ssub.s32 %s19, 2
    %s26 = sadd.s32 %s19, 1
    %s27 = ssub.s32 %s19, %s26
    %p28 = scmp.eq.s32.totalorder %s27, 0
    %s30 = sadd.s32 %s29, 1
    %s31 = scalar_select %p28, %s29, %s30
    %p34 = pneg %p28
    %p35 = scmp.eq.s32.totalorder %s19, 1
    %p36 = por %p34, %p35
    %p37 = scmp.ne.s32.totalorder %s29, %s32
    %p38 = scmp.eq.s32.totalorder %s19, 0
    %p39 = por %p37, %p38
    %p40 = scmp.ne.s32.totalorder %s29, %s32
    %p41 = scmp.eq.s32.totalorder %s24, 1
    %p42 = por %p40, %p41
    %p43 = scmp.ne.s32.totalorder %s32, %s33
    %p44 = scmp.eq.s32.totalorder %s24, 0
    %p45 = por %p43, %p44
    %p46 = scmp.ne.s32.totalorder %s32, %s33
    %p47 = scmp.eq.s32.totalorder %s25, 1
    %p48 = por %p46, %p47
    %p50 = scmp.ne.s32.totalorder %s33, %s49
    %p51 = scmp.eq.s32.totalorder %s25, 0
    %p52 = por %p50, %p51
    %s54 = sadd.s32 %s53, 1
    %p57 = scmp.eq.s32.totalorder %s19, 1
    %p58 = scmp.ne.s32.totalorder %s53, %s55
    %p59 = scmp.eq.s32.totalorder %s19, 0
    %p60 = por %p58, %p59
    %p61 = scmp.ne.s32.totalorder %s53, %s55
    %p62 = scmp.eq.s32.totalorder %s24, 1
    %p63 = por %p61, %p62
    %p64 = scmp.ne.s32.totalorder %s55, %s56
    %p65 = scmp.eq.s32.totalorder %s24, 0
    %p66 = por %p64, %p65
    %p67 = scmp.ne.s32.totalorder %s55, %s56
    %p68 = scmp.eq.s32.totalorder %s25, 1
    %p69 = por %p67, %p68
    %p71 = scmp.ne.s32.totalorder %s56, %s70
    %p72 = scmp.eq.s32.totalorder %s25, 0
    %p73 = por %p71, %p72
    %s75 = sadd.s32 %s74, 1
    %p78 = scmp.eq.s32.totalorder %s19, 1
    %p79 = scmp.ne.s32.totalorder %s74, %s76
    %p80 = scmp.eq.s32.totalorder %s19, 0
    %p81 = por %p79, %p80
    %p82 = scmp.ne.s32.totalorder %s74, %s76
    %p83 = scmp.eq.s32.totalorder %s24, 1
    %p84 = por %p82, %p83
    %p85 = scmp.ne.s32.totalorder %s76, %s77
    %p86 = scmp.eq.s32.totalorder %s24, 0
    %p87 = por %p85, %p86
    %p88 = scmp.ne.s32.totalorder %s76, %s77
    %p89 = scmp.eq.s32.totalorder %s25, 1
    %p90 = por %p88, %p89
    %p92 = scmp.ne.s32.totalorder %s77, %s91
    %p93 = scmp.eq.s32.totalorder %s25, 0
    %p94 = por %p92, %p93
    %s96 = sadd.s32 %s95, 1
    %p99 = scmp.eq.s32.totalorder %s19, 1
    %p100 = scmp.ne.s32.totalorder %s95, %s97
    %p101 = scmp.eq.s32.totalorder %s19, 0
    %p102 = por %p100, %p101
    %p103 = scmp.ne.s32.totalorder %s95, %s97
    %p104 = scmp.eq.s32.totalorder %s24, 1
    %p105 = por %p103, %p104
    %p106 = scmp.ne.s32.totalorder %s97, %s98
    %p107 = scmp.eq.s32.totalorder %s24, 0
    %p108 = por %p106, %p107
    %p109 = scmp.ne.s32.totalorder %s97, %s98
    %p110 = scmp.eq.s32.totalorder %s25, 1
    %p111 = por %p109, %p110
    %p113 = scmp.ne.s32.totalorder %s98, %s112
    %p114 = scmp.eq.s32.totalorder %s25, 0
    %p115 = por %p113, %p114
    %s117 = sadd.s32 %s116, 1
    %p120 = scmp.eq.s32.totalorder %s19, 1
    %p121 = scmp.ne.s32.totalorder %s116, %s118
    %p122 = scmp.eq.s32.totalorder %s19, 0
    %p123 = por %p121, %p122
    %p124 = scmp.ne.s32.totalorder %s116, %s118
    %p125 = scmp.eq.s32.totalorder %s24, 1
    %p126 = por %p124, %p125
    %p127 = scmp.ne.s32.totalorder %s118, %s119
    %p128 = scmp.eq.s32.totalorder %s24, 0
    %p129 = por %p127, %p128
    %p130 = scmp.ne.s32.totalorder %s118, %s119
    %p131 = scmp.eq.s32.totalorder %s25, 1
    %p132 = por %p130, %p131
    %p134 = scmp.ne.s32.totalorder %s119, %s133
    %p135 = scmp.eq.s32.totalorder %s25, 0
    %p136 = por %p134, %p135
    %s138 = sadd.s32 %s137, 1
    %p141 = scmp.eq.s32.totalorder %s19, 1
    %p142 = scmp.ne.s32.totalorder %s137, %s139
    %p143 = scmp.eq.s32.totalorder %s19, 0
    %p144 = por %p142, %p143
    %p145 = scmp.ne.s32.totalorder %s137, %s139
    %p146 = scmp.eq.s32.totalorder %s24, 1
    %p147 = por %p145, %p146
    %p148 = scmp.ne.s32.totalorder %s139, %s140
    %p149 = scmp.eq.s32.totalorder %s24, 0
    %p150 = por %p148, %p149
    %p151 = scmp.ne.s32.totalorder %s139, %s140
    %p152 = scmp.eq.s32.totalorder %s25, 1
    %p153 = por %p151, %p152
    %p155 = scmp.ne.s32.totalorder %s140, %s154
    %p156 = scmp.eq.s32.totalorder %s25, 0
    %p157 = por %p155, %p156
    %s159 = sadd.s32 %s158, 1
    %p162 = scmp.eq.s32.totalorder %s19, 1
    %p163 = scmp.ne.s32.totalorder %s158, %s160
    %p164 = scmp.eq.s32.totalorder %s19, 0
    %p165 = por %p163, %p164
    %p166 = scmp.ne.s32.totalorder %s158, %s160
    %p167 = scmp.eq.s32.totalorder %s24, 1
    %p168 = por %p166, %p167
    %p169 = scmp.ne.s32.totalorder %s160, %s161
    %p170 = scmp.eq.s32.totalorder %s24, 0
    %p171 = por %p169, %p170
    %p172 = scmp.ne.s32.totalorder %s160, %s161
    %p173 = scmp.eq.s32.totalorder %s25, 1
    %p174 = por %p172, %p173
    %p176 = scmp.ne.s32.totalorder %s161, %s175
    %p177 = scmp.eq.s32.totalorder %s25, 0
    %p178 = por %p176, %p177
    %s180 = sadd.s32 %s179, 1
    %p183 = scmp.eq.s32.totalorder %s19, 1
    %p184 = scmp.ne.s32.totalorder %s179, %s181
    %p185 = scmp.eq.s32.totalorder %s19, 0
    %p186 = por %p184, %p185
    %p187 = scmp.ne.s32.totalorder %s179, %s181
    %p188 = scmp.eq.s32.totalorder %s24, 1
    %p189 = por %p187, %p188
    %p190 = scmp.ne.s32.totalorder %s181, %s182
    %p191 = scmp.eq.s32.totalorder %s24, 0
    %p192 = por %p190, %p191
    %p193 = scmp.ne.s32.totalorder %s181, %s182
    %p194 = scmp.eq.s32.totalorder %s25, 1
    %p195 = por %p193, %p194
    %p197 = scmp.ne.s32.totalorder %s182, %s196
    %p198 = scmp.eq.s32.totalorder %s25, 0
    %p199 = por %p197, %p198
    %s201 = sadd.s32 %s200, 1
    %p204 = scmp.eq.s32.totalorder %s19, 1
    %p205 = scmp.ne.s32.totalorder %s200, %s202
    %p206 = scmp.eq.s32.totalorder %s19, 0
    %p207 = por %p205, %p206
    %p208 = scmp.ne.s32.totalorder %s200, %s202
    %p209 = scmp.eq.s32.totalorder %s24, 1
    %p210 = por %p208, %p209
    %p211 = scmp.ne.s32.totalorder %s202, %s203
    %p212 = scmp.eq.s32.totalorder %s24, 0
    %p213 = por %p211, %p212
    %p214 = scmp.ne.s32.totalorder %s202, %s203
    %p215 = scmp.eq.s32.totalorder %s25, 1
    %p216 = por %p214, %p215
    %p218 = scmp.ne.s32.totalorder %s203, %s217
    %p219 = scmp.eq.s32.totalorder %s25, 0
    %p220 = por %p218, %p219
    %s222 = sadd.s32 %s221, 1
    %p225 = scmp.eq.s32.totalorder %s19, 1
    %p226 = scmp.ne.s32.totalorder %s221, %s223
    %p227 = scmp.eq.s32.totalorder %s19, 0
    %p228 = por %p226, %p227
    %p229 = scmp.ne.s32.totalorder %s221, %s223
    %p230 = scmp.eq.s32.totalorder %s24, 1
    %p231 = por %p229, %p230
    %p232 = scmp.ne.s32.totalorder %s223, %s224
    %p233 = scmp.eq.s32.totalorder %s24, 0
    %p234 = por %p232, %p233
    %p235 = scmp.ne.s32.totalorder %s223, %s224
    %p236 = scmp.eq.s32.totalorder %s25, 1
    %p237 = por %p235, %p236
    %p239 = scmp.ne.s32.totalorder %s224, %s238
    %p240 = scmp.eq.s32.totalorder %s25, 0
    %p241 = por %p239, %p240
    %s243 = sadd.s32 %s242, 1
    %p246 = scmp.eq.s32.totalorder %s19, 1
    %p247 = scmp.ne.s32.totalorder %s242, %s244
    %p248 = scmp.eq.s32.totalorder %s19, 0
    %p249 = por %p247, %p248
    %p250 = scmp.ne.s32.totalorder %s242, %s244
    %p251 = scmp.eq.s32.totalorder %s24, 1
    %p252 = por %p250, %p251
    %p253 = scmp.ne.s32.totalorder %s244, %s245
    %p254 = scmp.eq.s32.totalorder %s24, 0
    %p255 = por %p253, %p254
    %p256 = scmp.ne.s32.totalorder %s244, %s245
    %p257 = scmp.eq.s32.totalorder %s25, 1
    %p258 = por %p256, %p257
    %p260 = scmp.ne.s32.totalorder %s245, %s259
    %p261 = scmp.eq.s32.totalorder %s25, 0
    %p262 = por %p260, %p261
    %s264 = sadd.s32 %s263, 1
    %p267 = scmp.eq.s32.totalorder %s19, 1
    %p268 = scmp.ne.s32.totalorder %s263, %s265
    %p269 = scmp.eq.s32.totalorder %s19, 0
    %p270 = por %p268, %p269
    %p271 = scmp.ne.s32.totalorder %s263, %s265
    %p272 = scmp.eq.s32.totalorder %s24, 1
    %p273 = por %p271, %p272
    %p274 = scmp.ne.s32.totalorder %s265, %s266
    %p275 = scmp.eq.s32.totalorder %s24, 0
    %p276 = por %p274, %p275
    %p277 = scmp.ne.s32.totalorder %s265, %s266
    %p278 = scmp.eq.s32.totalorder %s25, 1
    %p279 = por %p277, %p278
    %p281 = scmp.ne.s32.totalorder %s266, %s280
    %p282 = scmp.eq.s32.totalorder %s25, 0
    %p283 = por %p281, %p282
    %s285 = sadd.s32 %s284, 1
    %p288 = scmp.eq.s32.totalorder %s19, 1
    %p289 = scmp.ne.s32.totalorder %s284, %s286
    %p290 = scmp.eq.s32.totalorder %s19, 0
    %p291 = por %p289, %p290
    %p292 = scmp.ne.s32.totalorder %s284, %s286
    %p293 = scmp.eq.s32.totalorder %s24, 1
    %p294 = por %p292, %p293
    %p295 = scmp.ne.s32.totalorder %s286, %s287
    %p296 = scmp.eq.s32.totalorder %s24, 0
    %p297 = por %p295, %p296
    %p298 = scmp.ne.s32.totalorder %s286, %s287
    %p299 = scmp.eq.s32.totalorder %s25, 1
    %p300 = por %p298, %p299
    %p302 = scmp.ne.s32.totalorder %s287, %s301
    %p303 = scmp.eq.s32.totalorder %s25, 0
    %p304 = por %p302, %p303
    %s305 = ssub.s32 %s19, %s26
    %p306 = scmp.eq.s32.totalorder %s305, 0
    %s308 = sadd.s32 %s307, 1
    %s309 = scalar_select %p306, %s307, %s308
    %p312 = pneg %p306
    %p313 = scmp.eq.s32.totalorder %s19, 1
    %p314 = por %p312, %p313
    %p315 = scmp.ne.s32.totalorder %s307, %s310
    %p316 = scmp.eq.s32.totalorder %s19, 0
    %p317 = por %p315, %p316
    %p318 = scmp.ne.s32.totalorder %s307, %s310
    %p319 = scmp.eq.s32.totalorder %s24, 1
    %p320 = por %p318, %p319
    %p321 = scmp.ne.s32.totalorder %s310, %s311
    %p322 = scmp.eq.s32.totalorder %s24, 0
    %p323 = por %p321, %p322
    %p324 = scmp.ne.s32.totalorder %s310, %s311
    %p325 = scmp.eq.s32.totalorder %s25, 1
    %p326 = por %p324, %p325
    %p328 = scmp.ne.s32.totalorder %s311, %s327
    %p329 = scmp.eq.s32.totalorder %s25, 0
    %p330 = por %p328, %p329
    %p331 = scmp.le.s32.totalorder 1, %s19
    %p332 = scmp.lt.s32.totalorder %s19, 3
    %p333 = pnand %p331, %p332
    %p334 = pneg %p333
    // Predicated region
    $region9: #{conformer_block.5} parent=5 // pred_check
      _
    $region10: #{conformer_block.5} parent=5 // pred_check_branch
      %336 = sbr.rel (%p333) target = $region12
    $region11: #{conformer_block.5} parent=5 // pred_region
      %s337 = ssub.s32 %s19, 1
      // Predicated region
      $region13: #{conformer_block.5} parent=11 // pred_check
        %p338 = pneg %p66
      $region14: #{conformer_block.5} parent=11 // pred_check_branch
        %340 = sbr.rel (%p338) target = $region16
      $region15: #{conformer_block.5} parent=11 // pred_region
        _
      $region16: #{conformer_block.5} parent=11 // pred_fallthru
        _
      // Predicated region
      $region17: #{conformer_block.5} parent=11 // pred_check
        %p341 = pneg %p87
      $region18: #{conformer_block.5} parent=11 // pred_check_branch
        %343 = sbr.rel (%p341) target = $region20
      $region19: #{conformer_block.5} parent=11 // pred_region
        _
      $region20: #{conformer_block.5} parent=11 // pred_fallthru
        _
      // Predicated region
      $region21: #{conformer_block.5} parent=11 // pred_check
        %p344 = pneg %p108
      $region22: #{conformer_block.5} parent=11 // pred_check_branch
        %346 = sbr.rel (%p344) target = $region24
      $region23: #{conformer_block.5} parent=11 // pred_region
        _
      $region24: #{conformer_block.5} parent=11 // pred_fallthru
        _
      // Predicated region
      $region25: #{conformer_block.5} parent=11 // pred_check
        %p347 = pneg %p129
      $region26: #{conformer_block.5} parent=11 // pred_check_branch
        %349 = sbr.rel (%p347) target = $region28
      $region27: #{conformer_block.5} parent=11 // pred_region
        _
      $region28: #{conformer_block.5} parent=11 // pred_fallthru
        _
      // Predicated region
      $region29: #{conformer_block.5} parent=11 // pred_check
        %p350 = pneg %p150
      $region30: #{conformer_block.5} parent=11 // pred_check_branch
        %352 = sbr.rel (%p350) target = $region32
      $region31: #{conformer_block.5} parent=11 // pred_region
        _
      $region32: #{conformer_block.5} parent=11 // pred_fallthru
        _
      // Predicated region
      $region33: #{conformer_block.5} parent=11 // pred_check
        %p353 = pneg %p171
      $region34: #{conformer_block.5} parent=11 // pred_check_branch
        %355 = sbr.rel (%p353) target = $region36
      $region35: #{conformer_block.5} parent=11 // pred_region
        _
      $region36: #{conformer_block.5} parent=11 // pred_fallthru
        _
      // Predicated region
      $region37: #{conformer_block.5} parent=11 // pred_check
        %p356 = pneg %p192
      $region38: #{conformer_block.5} parent=11 // pred_check_branch
        %358 = sbr.rel (%p356) target = $region40
      $region39: #{conformer_block.5} parent=11 // pred_region
        _
      $region40: #{conformer_block.5} parent=11 // pred_fallthru
        _
      // Predicated region
      $region41: #{conformer_block.5} parent=11 // pred_check
        %p359 = pneg %p213
      $region42: #{conformer_block.5} parent=11 // pred_check_branch
        %361 = sbr.rel (%p359) target = $region44
      $region43: #{conformer_block.5} parent=11 // pred_region
        _
      $region44: #{conformer_block.5} parent=11 // pred_fallthru
        _
      // Predicated region
      $region45: #{conformer_block.5} parent=11 // pred_check
        %p362 = pneg %p234
      $region46: #{conformer_block.5} parent=11 // pred_check_branch
        %364 = sbr.rel (%p362) target = $region48
      $region47: #{conformer_block.5} parent=11 // pred_region
        _
      $region48: #{conformer_block.5} parent=11 // pred_fallthru
        _
      // Predicated region
      $region49: #{conformer_block.5} parent=11 // pred_check
        %p365 = pneg %p255
      $region50: #{conformer_block.5} parent=11 // pred_check_branch
        %367 = sbr.rel (%p365) target = $region52
      $region51: #{conformer_block.5} parent=11 // pred_region
        _
      $region52: #{conformer_block.5} parent=11 // pred_fallthru
        _
      // Predicated region
      $region53: #{conformer_block.5} parent=11 // pred_check
        %p368 = pneg %p276
      $region54: #{conformer_block.5} parent=11 // pred_check_branch
        %370 = sbr.rel (%p368) target = $region56
      $region55: #{conformer_block.5} parent=11 // pred_region
        _
      $region56: #{conformer_block.5} parent=11 // pred_fallthru
        _
      // Predicated region
      $region57: #{conformer_block.5} parent=11 // pred_check
        %p371 = pneg %p297
      $region58: #{conformer_block.5} parent=11 // pred_check_branch
        %373 = sbr.rel (%p371) target = $region60
      $region59: #{conformer_block.5} parent=11 // pred_region
        _
      $region60: #{conformer_block.5} parent=11 // pred_fallthru
        _
    $region12: #{conformer_block.5} parent=5 // pred_fallthru
      _
    %p374 = scmp.lt.s32.totalorder %s19, 2
    // Predicated region
    $region61: #{conformer_block.5} parent=5 // pred_check
      %p375 = pneg %p374
    $region62: #{conformer_block.5} parent=5 // pred_check_branch
      %377 = sbr.rel (%p375) target = $region64
    $region63: #{conformer_block.5} parent=5 // pred_region
      // Predicated region
      $region65: #{conformer_block.5} parent=63 // pred_check
        %p378 = pneg %p39
      $region66: #{conformer_block.5} parent=63 // pred_check_branch
        %380 = sbr.rel (%p378) target = $region68
      $region67: #{conformer_block.5} parent=63 // pred_region
        %p381 = scmp.lt.s32.totalorder %s19, 1
        %s382 = scalar_select %p381, %s19, 1
        %s383 = smul.addr %s382, 8
        %s384 = scalar_lea.vmem %s0, %s383
      $region68: #{conformer_block.5} parent=63 // pred_fallthru
        _
    $region64: #{conformer_block.5} parent=5 // pred_fallthru
      _
    %p385 = scmp.le.s32.totalorder 1, %s19
    %p386 = scmp.lt.s32.totalorder %s19, 3
    %p387 = pnand %p385, %p386
    %p388 = pneg %p387
    // Predicated region
    $region69: #{conformer_block.5} parent=5 // pred_check
      _
    $region70: #{conformer_block.5} parent=5 // pred_check_branch
      %390 = sbr.rel (%p387) target = $region72
    $region71: #{conformer_block.5} parent=5 // pred_region
      %s391 = ssub.s32 %s19, 1
      %p392 = scmp.lt.s32.totalorder %s24, 1
      %s393 = scalar_select %p392, %s24, 1
      %s394 = smul.addr %s393, 8
      %s395 = scalar_lea.vmem %s0, %s394
      %p396 = pneg %p45
      %p397 = pneg %p42
      %p398 = pneg %p66
      %p399 = pneg %p63
      %p400 = pneg %p87
      %p401 = pneg %p84
      %p402 = pneg %p108
      %p403 = pneg %p105
      %p404 = pneg %p129
      %p405 = pneg %p126
      %p406 = pneg %p150
      %p407 = pneg %p147
      %p408 = pneg %p171
      %p409 = pneg %p168
      %p410 = pneg %p192
      %p411 = pneg %p189
      %p412 = pneg %p213
      %p413 = pneg %p210
      %p414 = pneg %p234
      %p415 = pneg %p231
      %p416 = pneg %p255
      %p417 = pneg %p252
      %p418 = pneg %p276
      %p419 = pneg %p273
      %p420 = pneg %p297
      %p421 = pneg %p294
      %p422 = pneg %p323
      %p423 = pneg %p320
      %p424 = scmp.lt.s32.totalorder %s24, 1
      %s425 = scalar_select %p424, %s24, 1
      %s426 = smul.addr %s425, 8
      %s427 = scalar_lea.vmem %s13, %s426
      %p428 = scmp.lt.s32.totalorder %s24, 1
      %s429 = scalar_select %p428, %s24, 1
      %s430 = smul.addr %s429, 8
      %s431 = scalar_lea.vmem %s0, %s430
      %p432 = scmp.lt.s32.totalorder %s24, 1
      %s433 = scalar_select %p432, %s24, 1
      %s434 = smul.addr %s433, 8
      %s435 = scalar_lea.vmem %s13, %s434
      %v437 = vld [vmem:[%s431] sm:$0xff]
      %v438 = vpack.c.bf16 %v437, %v437
      %v439 = vld [vmem:[%s1] sm:$0xf]
      %v440 = vld [vmem:[%s1 + $0x4] sm:$0xf]
      %v441 = vld [vmem:[%s1 + $0x8] sm:$0xf]
      %v442 = vld [vmem:[%s1 + $0xc] sm:$0xf]
      %v443 = vld [vmem:[%s4] sm:$0x1]
      %v445 = vlaneseq
      %v446 = vshrl.u32 %v445, 7
      %v447 = vsub.s32 0, %v446
      %v448 = vrot.slane %v443, %v447
      %v454 = vunpack.c.l.b16 %v439
      %v455 = vunpack.c.l.b16 %v440
      %v456 = vunpack.c.l.b16 %v441
      %v457 = vunpack.c.l.b16 %v442
      %v458 = vpack.c.b16 %v455, %v454
      %v459 = vpack.c.b16 %v457, %v456
      %vm462 = vcmask 261120
      %v464 = vsel %vm462, %v438, 0
      %466 = vmatprep.subr.bf16.mxu0 0
      %467 = vmatpush1.bf16.msra.mxu0 %v458
      %468 = vmatprep.subr.bf16.mxu0 0
      %469 = vmatpush1.bf16.msra.mxu0 %v459
      %470 = vmatprep.subr.bf16.mxu0 0
      %471 = vmatpush1.bf16.msra.mxu0 0
      %472 = vmatprep.subr.bf16.mxu0 0
      %473 = vmatpush1.bf16.msra.mxu0 0
      %474 = vmatprep.subr.bf16.mxu0 0
      %475 = vmatpush1.bf16.msra.mxu0 0
      %476 = vmatprep.subr.bf16.mxu0 0
      %477 = vmatpush1.bf16.msra.mxu0 0
      %478 = vmatprep.subr.bf16.mxu0 0
      %479 = vmatpush1.bf16.msra.mxu0 0
      %480 = vmatprep.subr.bf16.mxu0 0
      %481 = vmatpush1.bf16.msra.mxu0 0
      %482 = vmatprep.subr.bf16.mxu0 0
      %483 = vmatpush1.bf16.msra.mxu0 0
      %484 = vmatprep.subr.bf16.mxu0 0
      %485 = vmatpush1.bf16.msra.mxu0 0
      %486 = vmatprep.subr.bf16.mxu0 0
      %487 = vmatpush1.bf16.msra.mxu0 0
      %488 = vmatprep.subr.bf16.mxu0 0
      %489 = vmatpush1.bf16.msra.mxu0 0
      %490 = vmatprep.subr.bf16.mxu0 0
      %491 = vmatpush1.bf16.msra.mxu0 0
      %492 = vmatprep.subr.bf16.mxu0 0
      %493 = vmatpush1.bf16.msra.mxu0 0
      %494 = vmatprep.subr.bf16.mxu0 0
      %495 = vmatpush1.bf16.msra.mxu0 0
      %496 = vmatprep.subr.bf16.mxu0 0
      %497 = vmatpush1.bf16.msra.mxu0 0
      %498 = vmatprep.mubr.bf16.mxu0 0
      %499 = vmatmul.mubr.bf16.gmra.mrb[0].mxu0 %v464
      %v500 = vpop.f32.mrb[0].mxu0
      %v501 = vadd.f32 %v448, %v500
      %v502 = vpop.f32.mrb[0].mxu0
      %v503 = vpop.f32.mrb[0].mxu0
      %v504 = vpop.f32.mrb[0].mxu0
      %505 = vdwg.mxu0
      %v506 = vld [vmem:[%s2] sm:$0xf]
      %v507 = vld [vmem:[%s2 + $0x4] sm:$0xf]
      %v508 = vld [vmem:[%s2 + $0x8] sm:$0xf]
      %v509 = vld [vmem:[%s2 + $0xc] sm:$0xf]
      %v510 = vld [vmem:[%s5] sm:$0x1]
      %v512 = vlaneseq
      %v513 = vshrl.u32 %v512, 7
      %v514 = vsub.s32 0, %v513
      %v515 = vrot.slane %v510, %v514
      %v521 = vunpack.c.l.b16 %v506
      %v522 = vunpack.c.l.b16 %v507
      %v523 = vunpack.c.l.b16 %v508
      %v524 = vunpack.c.l.b16 %v509
      %v525 = vpack.c.b16 %v522, %v521
      %v526 = vpack.c.b16 %v524, %v523
      %529 = vmatprep.subr.bf16.mxu0 0
      %530 = vmatpush1.bf16.msra.mxu0 %v525
      %531 = vmatprep.subr.bf16.mxu0 0
      %532 = vmatpush1.bf16.msra.mxu0 %v526
      %533 = vmatprep.subr.bf16.mxu0 0
      %534 = vmatpush1.bf16.msra.mxu0 0
      %535 = vmatprep.subr.bf16.mxu0 0
      %536 = vmatpush1.bf16.msra.mxu0 0
      %537 = vmatprep.subr.bf16.mxu0 0
      %538 = vmatpush1.bf16.msra.mxu0 0
      %539 = vmatprep.subr.bf16.mxu0 0
      %540 = vmatpush1.bf16.msra.mxu0 0
      %541 = vmatprep.subr.bf16.mxu0 0
      %542 = vmatpush1.bf16.msra.mxu0 0
      %543 = vmatprep.subr.bf16.mxu0 0
      %544 = vmatpush1.bf16.msra.mxu0 0
      %545 = vmatprep.subr.bf16.mxu0 0
      %546 = vmatpush1.bf16.msra.mxu0 0
      %547 = vmatprep.subr.bf16.mxu0 0
      %548 = vmatpush1.bf16.msra.mxu0 0
      %549 = vmatprep.subr.bf16.mxu0 0
      %550 = vmatpush1.bf16.msra.mxu0 0
      %551 = vmatprep.subr.bf16.mxu0 0
      %552 = vmatpush1.bf16.msra.mxu0 0
      %553 = vmatprep.subr.bf16.mxu0 0
      %554 = vmatpush1.bf16.msra.mxu0 0
      %555 = vmatprep.subr.bf16.mxu0 0
      %556 = vmatpush1.bf16.msra.mxu0 0
      %557 = vmatprep.subr.bf16.mxu0 0
      %558 = vmatpush1.bf16.msra.mxu0 0
      %559 = vmatprep.subr.bf16.mxu0 0
      %560 = vmatpush1.bf16.msra.mxu0 0
      %561 = vmatprep.mubr.bf16.mxu0 0
      %562 = vmatmul.mubr.bf16.gmra.mrb[0].mxu0 %v464
      %v563 = vpop.f32.mrb[0].mxu0
      %v564 = vadd.f32 %v515, %v563
      %v565 = vpop.f32.mrb[0].mxu0
      %v566 = vpop.f32.mrb[0].mxu0
      %v567 = vpop.f32.mrb[0].mxu0
      %568 = vdwg.mxu0
      %v569 = vld [vmem:[%s3] sm:$0xf]
      %v570 = vld [vmem:[%s3 + $0x4] sm:$0xf]
      %v571 = vld [vmem:[%s3 + $0x8] sm:$0xf]
      %v572 = vld [vmem:[%s3 + $0xc] sm:$0xf]
      %v573 = vld [vmem:[%s6] sm:$0x1]
      %v575 = vlaneseq
      %v576 = vshrl.u32 %v575, 7
      %v577 = vsub.s32 0, %v576
      %v578 = vrot.slane %v573, %v577
      %v584 = vunpack.c.l.b16 %v569
      %v585 = vunpack.c.l.b16 %v570
      %v586 = vunpack.c.l.b16 %v571
      %v587 = vunpack.c.l.b16 %v572
      %v588 = vpack.c.b16 %v585, %v584
      %v589 = vpack.c.b16 %v587, %v586
      %592 = vmatprep.subr.bf16.mxu0 0
      %593 = vmatpush1.bf16.msra.mxu0 %v588
      %594 = vmatprep.subr.bf16.mxu0 0
      %595 = vmatpush1.bf16.msra.mxu0 %v589
      %596 = vmatprep.subr.bf16.mxu0 0
      %597 = vmatpush1.bf16.msra.mxu0 0
      %598 = vmatprep.subr.bf16.mxu0 0
      %599 = vmatpush1.bf16.msra.mxu0 0
      %600 = vmatprep.subr.bf16.mxu0 0
      %601 = vmatpush1.bf16.msra.mxu0 0
      %602 = vmatprep.subr.bf16.mxu0 0
      %603 = vmatpush1.bf16.msra.mxu0 0
      %604 = vmatprep.subr.bf16.mxu0 0
      %605 = vmatpush1.bf16.msra.mxu0 0
      %606 = vmatprep.subr.bf16.mxu0 0
      %607 = vmatpush1.bf16.msra.mxu0 0
      %608 = vmatprep.subr.bf16.mxu0 0
      %609 = vmatpush1.bf16.msra.mxu0 0
      %610 = vmatprep.subr.bf16.mxu0 0
      %611 = vmatpush1.bf16.msra.mxu0 0
      %612 = vmatprep.subr.bf16.mxu0 0
      %613 = vmatpush1.bf16.msra.mxu0 0
      %614 = vmatprep.subr.bf16.mxu0 0
      %615 = vmatpush1.bf16.msra.mxu0 0
      %616 = vmatprep.subr.bf16.mxu0 0
      %617 = vmatpush1.bf16.msra.mxu0 0
      %618 = vmatprep.subr.bf16.mxu0 0
      %619 = vmatpush1.bf16.msra.mxu0 0
      %620 = vmatprep.subr.bf16.mxu0 0
      %621 = vmatpush1.bf16.msra.mxu0 0
      %622 = vmatprep.subr.bf16.mxu0 0
      %623 = vmatpush1.bf16.msra.mxu0 0
      %624 = vmatprep.mubr.bf16.mxu0 0
      %625 = vmatmul.mubr.bf16.gmra.mrb[0].mxu0 %v464
      %v626 = vpop.f32.mrb[0].mxu0
      %v627 = vadd.f32 %v578, %v626
      %v628 = vpop.f32.mrb[0].mxu0
      %v629 = vpop.f32.mrb[0].mxu0
      %v630 = vpop.f32.mrb[0].mxu0
      %631 = vdwg.mxu0
      %v632 = vld [vmem:[%s7] sm:$0xff]
      %v633 = vpack.c.bf16 %v632, %v632
      %v634 = vld [vmem:[%s8] sm:$0xf]
      %v635 = vld [vmem:[%s8 + $0x4] sm:$0xf]
      %v636 = vld [vmem:[%s8 + $0x8] sm:$0xf]
      %v637 = vld [vmem:[%s8 + $0xc] sm:$0xf]
      %v642 = vunpack.c.l.b16 %v634
      %v643 = vunpack.c.l.b16 %v635
      %v644 = vunpack.c.l.b16 %v636
      %v645 = vunpack.c.l.b16 %v637
      %v646 = vpack.c.b16 %v643, %v642
      %v647 = vpack.c.b16 %v645, %v644
      %v651 = vsel %vm462, %v633, 0
      %653 = vmatprep.subr.bf16.mxu0 0
      %654 = vmatpush1.bf16.msra.mxu0 %v646
      %655 = vmatprep.subr.bf16.mxu0 0
      %656 = vmatpush1.bf16.msra.mxu0 %v647
      %657 = vmatprep.subr.bf16.mxu0 0
      %658 = vmatpush1.bf16.msra.mxu0 0
      %659 = vmatprep.subr.bf16.mxu0 0
      %660 = vmatpush1.bf16.msra.mxu0 0
      %661 = vmatprep.subr.bf16.mxu0 0
      %662 = vmatpush1.bf16.msra.mxu0 0
      %663 = vmatprep.subr.bf16.mxu0 0
      %664 = vmatpush1.bf16.msra.mxu0 0
      %665 = vmatprep.subr.bf16.mxu0 0
      %666 = vmatpush1.bf16.msra.mxu0 0
      %667 = vmatprep.subr.bf16.mxu0 0
      %668 = vmatpush1.bf16.msra.mxu0 0
      %669 = vmatprep.subr.bf16.mxu0 0
      %670 = vmatpush1.bf16.msra.mxu0 0
      %671 = vmatprep.subr.bf16.mxu0 0
      %672 = vmatpush1.bf16.msra.mxu0 0
      %673 = vmatprep.subr.bf16.mxu0 0
      %674 = vmatpush1.bf16.msra.mxu0 0
      %675 = vmatprep.subr.bf16.mxu0 0
      %676 = vmatpush1.bf16.msra.mxu0 0
      %677 = vmatprep.subr.bf16.mxu0 0
      %678 = vmatpush1.bf16.msra.mxu0 0
      %679 = vmatprep.subr.bf16.mxu0 0
      %680 = vmatpush1.bf16.msra.mxu0 0
      %681 = vmatprep.subr.bf16.mxu0 0
      %682 = vmatpush1.bf16.msra.mxu0 0
      %683 = vmatprep.subr.bf16.mxu0 0
      %684 = vmatpush1.bf16.msra.mxu0 0
      %685 = vmatprep.mubr.bf16.mxu0 0
      %686 = vmatmul.mubr.bf16.gmra.mrb[0].mxu0 %v651
      %v687 = vpop.f32.mrb[0].mxu0
      %v688 = vadd.f32 0.0, %v687
      %v689 = vpop.f32.mrb[0].mxu0
      %v690 = vpop.f32.mrb[0].mxu0
      %v691 = vpop.f32.mrb[0].mxu0
      %692 = vdwg.mxu0
      %v693 = vld [vmem:[%s9] sm:$0x1]
      %v695 = vlaneseq
      %v696 = vshrl.u32 %v695, 7
      %v697 = vsub.s32 0, %v696
      %v698 = vrot.slane %v693, %v697
      %v700 = vadd.f32 %v501, %v698
      %v701 = vpack.c.bf16 %v700, %v700
      %v702 = vld [vmem:[%s10] sm:$0x1]
      %v704 = vlaneseq
      %v705 = vshrl.u32 %v704, 7
      %v706 = vsub.s32 0, %v705
      %v707 = vrot.slane %v702, %v706
      %v709 = vadd.f32 %v501, %v707
      %v710 = vpack.c.bf16 %v709, %v709
      %v711 = vpack.c.bf16 %v564, %v564
      %v712 = vpack.c.bf16 %v627, %v627
      %v713 = vpack.c.bf16 %v688, %v688
      %vm714 = vcmask 64512
      %v716 = vsel %vm714, %v710, 0
      %v719 = vsel %vm714, %v713, 0
      %721 = vmatprep.subr.bf16.mxu0 0
      %722 = vmatpush1.bf16.xpose.msra.mxu0 %v719
      %723 = vmatprep.subr.bf16.mxu0 0
      %724 = vmatpush1.bf16.xpose.msra.mxu0 0
      %725 = vmatprep.subr.bf16.mxu0 0
      %726 = vmatpush1.bf16.xpose.msra.mxu0 0
      %727 = vmatprep.subr.bf16.mxu0 0
      %728 = vmatpush1.bf16.xpose.msra.mxu0 0
      %729 = vmatprep.subr.bf16.mxu0 0
      %730 = vmatpush1.bf16.xpose.msra.mxu0 0
      %731 = vmatprep.subr.bf16.mxu0 0
      %732 = vmatpush1.bf16.xpose.msra.mxu0 0
      %733 = vmatprep.subr.bf16.mxu0 0
      %734 = vmatpush1.bf16.xpose.msra.mxu0 0
      %735 = vmatprep.subr.bf16.mxu0 0
      %736 = vmatpush1.bf16.xpose.msra.mxu0 0
      %737 = vmatprep.subr.bf16.mxu0 0
      %738 = vmatpush1.bf16.xpose.msra.mxu0 0
      %739 = vmatprep.subr.bf16.mxu0 0
      %740 = vmatpush1.bf16.xpose.msra.mxu0 0
      %741 = vmatprep.subr.bf16.mxu0 0
      %742 = vmatpush1.bf16.xpose.msra.mxu0 0
      %743 = vmatprep.subr.bf16.mxu0 0
      %744 = vmatpush1.bf16.xpose.msra.mxu0 0
      %745 = vmatprep.subr.bf16.mxu0 0
      %746 = vmatpush1.bf16.xpose.msra.mxu0 0
      %747 = vmatprep.subr.bf16.mxu0 0
      %748 = vmatpush1.bf16.xpose.msra.mxu0 0
      %749 = vmatprep.subr.bf16.mxu0 0
      %750 = vmatpush1.bf16.xpose.msra.mxu0 0
      %751 = vmatprep.subr.bf16.mxu0 0
      %752 = vmatpush1.bf16.xpose.msra.mxu0 0
      %753 = vmatprep.mubr.bf16.mxu0 0
      %754 = vmatmul.mubr.bf16.gmra.mrb[0].mxu0 %v716
      %v755 = vpop.f32.mrb[0].mxu0
      %v756 = vadd.f32 0.0, %v755
      %v757 = vpop.f32.mrb[0].mxu0
      %v758 = vpop.f32.mrb[0].mxu0
      %v759 = vpop.f32.mrb[0].mxu0
      %760 = vdwg.mxu0
      %v762 = vrot.slane %v756, 1
      %vm764 = vcmask 1046528
      %v765 = vsel %vm764, %v762, 0.0
      %767 = vrot.lane.b32.xlu0 %v765, 9
      %v768 = vpop.permute.xlu0 %767
      %v770 = vsel %vm714, %v756, 0.0
      %vm771 = vcmask 72704
      %v772 = vsel %vm771, %v770, %v768
      %v773 = vlaneseq
      %v774 = vshrl.u32 %v773, 7
      %v775 = vsub.s32 7, %v774
      %777 = vrot.lane.b32.xlu0 %v772, 127
      %v778 = vpop.permute.xlu0 %777
      %780 = vrot.lane.b32.xlu0 %v772, 16
      %v781 = vpop.permute.xlu0 %780
      %vm783 = vcmask 130048
      %v784 = vsel %vm783, %v778, %v781
      %v785 = vand.u32 %v775, 1
      %vm786 = vcmp.ne.s32.totalorder %v785, 0
      %v787 = vsel %vm786, 1, 0
      %vm788 = vcmp.eq.s32.totalorder %v787, 1
      %v789 = vsel %vm788, %v784, %v772
      %791 = vrot.lane.b32.xlu0 %v789, 126
      %v792 = vpop.permute.xlu0 %791
      %794 = vrot.lane.b32.xlu0 %v789, 15
      %v795 = vpop.permute.xlu0 %794
      %vm797 = vcmask 121856
      %v798 = vsel %vm797, %v792, %v795
      %v799 = vand.u32 %v775, 2
      %vm800 = vcmp.ne.s32.totalorder %v799, 0
      %v801 = vsel %vm800, 1, 0
      %vm802 = vcmp.eq.s32.totalorder %v801, 1
      %v803 = vsel %vm802, %v798, %v789
      %805 = vrot.lane.b32.xlu0 %v803, 124
      %v806 = vpop.permute.xlu0 %805
      %808 = vrot.lane.b32.xlu0 %v803, 13
      %v809 = vpop.permute.xlu0 %808
      %vm811 = vcmask 105472
      %v812 = vsel %vm811, %v806, %v809
      %v813 = vand.u32 %v775, 4
      %vm814 = vcmp.ne.s32.totalorder %v813, 0
      %v815 = vsel %vm814, 1, 0
      %vm816 = vcmp.eq.s32.totalorder %v815, 1
      %v817 = vsel %vm816, %v812, %v803
      %v819 = vsel %vm714, %v701, 0
      %v822 = vsel %vm714, %v711, 0
      %824 = vmatprep.subr.bf16.mxu0 0
      %825 = vmatpush1.bf16.xpose.msra.mxu0 %v822
      %826 = vmatprep.subr.bf16.mxu0 0
      %827 = vmatpush1.bf16.xpose.msra.mxu0 0
      %828 = vmatprep.subr.bf16.mxu0 0
      %829 = vmatpush1.bf16.xpose.msra.mxu0 0
      %830 = vmatprep.subr.bf16.mxu0 0
      %831 = vmatpush1.bf16.xpose.msra.mxu0 0
      %832 = vmatprep.subr.bf16.mxu0 0
      %833 = vmatpush1.bf16.xpose.msra.mxu0 0
      %834 = vmatprep.subr.bf16.mxu0 0
      %835 = vmatpush1.bf16.xpose.msra.mxu0 0
      %836 = vmatprep.subr.bf16.mxu0 0
      %837 = vmatpush1.bf16.xpose.msra.mxu0 0
      %838 = vmatprep.subr.bf16.mxu0 0
      %839 = vmatpush1.bf16.xpose.msra.mxu0 0
      %840 = vmatprep.subr.bf16.mxu0 0
      %841 = vmatpush1.bf16.xpose.msra.mxu0 0
      %842 = vmatprep.subr.bf16.mxu0 0
      %843 = vmatpush1.bf16.xpose.msra.mxu0 0
      %844 = vmatprep.subr.bf16.mxu0 0
      %845 = vmatpush1.bf16.xpose.msra.mxu0 0
      %846 = vmatprep.subr.bf16.mxu0 0
      %847 = vmatpush1.bf16.xpose.msra.mxu0 0
      %848 = vmatprep.subr.bf16.mxu0 0
      %849 = vmatpush1.bf16.xpose.msra.mxu0 0
      %850 = vmatprep.subr.bf16.mxu0 0
      %851 = vmatpush1.bf16.xpose.msra.mxu0 0
      %852 = vmatprep.subr.bf16.mxu0 0
      %853 = vmatpush1.bf16.xpose.msra.mxu0 0
      %854 = vmatprep.subr.bf16.mxu0 0
      %855 = vmatpush1.bf16.xpose.msra.mxu0 0
      %856 = vmatprep.mubr.bf16.mxu0 0
      %857 = vmatmul.mubr.bf16.gmra.mrb[0].mxu0 %v819
      %v858 = vpop.f32.mrb[0].mxu0
      %v859 = vadd.f32 %v817, %v858
      %v860 = vpop.f32.mrb[0].mxu0
      %v861 = vpop.f32.mrb[0].mxu0
      %v862 = vpop.f32.mrb[0].mxu0
      %863 = vdwg.mxu0
      %v864 = vmul.f32 %v859, 0.17677669
      %v865 = vsel %vm714, %v864, -inf
      %866 = vmax.xlane.f32.xlu0 %v865
      %v867 = vpop.xlane.xlu0 %866
      %v868 = vsub.f32 %v864, %v867
      %v869 = vmul.f32 %v868, 1.442695
      %v870 = vpow.pop %v869
      %v871 = vsel %vm714, %v870, 0.0
      %872 = vadd.xlane.f32.xlu0 %v871
      %v873 = vpop.xlane.xlu0 %872
      %v874 = vrcp.pop %v873
      %v875 = vmul.f32 %v870, %v874
      %v876 = vpack.c.bf16 %v875, %v875
      %v878 = vsel %vm714, %v876, 0
      %vm880 = vcmask 1043456
      %v882 = vsel %vm880, %v712, 0
      %884 = vmatprep.subr.bf16.mxu0 0
      %885 = vmatpush1.bf16.msra.mxu0 %v882
      %886 = vmatprep.subr.bf16.mxu0 0
      %887 = vmatpush1.bf16.msra.mxu0 0
      %888 = vmatprep.subr.bf16.mxu0 0
      %889 = vmatpush1.bf16.msra.mxu0 0
      %890 = vmatprep.subr.bf16.mxu0 0
      %891 = vmatpush1.bf16.msra.mxu0 0
      %892 = vmatprep.subr.bf16.mxu0 0
      %893 = vmatpush1.bf16.msra.mxu0 0
      %894 = vmatprep.subr.bf16.mxu0 0
      %895 = vmatpush1.bf16.msra.mxu0 0
      %896 = vmatprep.subr.bf16.mxu0 0
      %897 = vmatpush1.bf16.msra.mxu0 0
      %898 = vmatprep.subr.bf16.mxu0 0
      %899 = vmatpush1.bf16.msra.mxu0 0
      %900 = vmatprep.subr.bf16.mxu0 0
      %901 = vmatpush1.bf16.msra.mxu0 0
      %902 = vmatprep.subr.bf16.mxu0 0
      %903 = vmatpush1.bf16.msra.mxu0 0
      %904 = vmatprep.subr.bf16.mxu0 0
      %905 = vmatpush1.bf16.msra.mxu0 0
      %906 = vmatprep.subr.bf16.mxu0 0
      %907 = vmatpush1.bf16.msra.mxu0 0
      %908 = vmatprep.subr.bf16.mxu0 0
      %909 = vmatpush1.bf16.msra.mxu0 0
      %910 = vmatprep.subr.bf16.mxu0 0
      %911 = vmatpush1.bf16.msra.mxu0 0
      %912 = vmatprep.subr.bf16.mxu0 0
      %913 = vmatpush1.bf16.msra.mxu0 0
      %914 = vmatprep.subr.bf16.mxu0 0
      %915 = vmatpush1.bf16.msra.mxu0 0
      %916 = vmatprep.mubr.bf16.mxu0 0
      %917 = vmatmul.mubr.bf16.gmra.mrb[0].mxu0 %v878
      %v918 = vpop.f32.mrb[0].mxu0
      %v919 = vadd.f32 0.0, %v918
      %v920 = vpop.f32.mrb[0].mxu0
      %v921 = vpop.f32.mrb[0].mxu0
      %v922 = vpop.f32.mrb[0].mxu0
      %923 = vdwg.mxu0
      %925 = vrot.lane.b32.xlu0 %v710, 120
      %v926 = vpop.permute.xlu0 %925
      %928 = vrot.lane.b32.xlu0 %v713, 120
      %v929 = vpop.permute.xlu0 %928
      %v931 = vsel %vm714, %v926, 0
      %v934 = vsel %vm714, %v929, 0
      %936 = vmatprep.subr.bf16.mxu0 0
      %937 = vmatpush1.bf16.xpose.msra.mxu0 %v934
      %938 = vmatprep.subr.bf16.mxu0 0
      %939 = vmatpush1.bf16.xpose.msra.mxu0 0
      %940 = vmatprep.subr.bf16.mxu0 0
      %941 = vmatpush1.bf16.xpose.msra.mxu0 0
      %942 = vmatprep.subr.bf16.mxu0 0
      %943 = vmatpush1.bf16.xpose.msra.mxu0 0
      %944 = vmatprep.subr.bf16.mxu0 0
      %945 = vmatpush1.bf16.xpose.msra.mxu0 0
      %946 = vmatprep.subr.bf16.mxu0 0
      %947 = vmatpush1.bf16.xpose.msra.mxu0 0
      %948 = vmatprep.subr.bf16.mxu0 0
      %949 = vmatpush1.bf16.xpose.msra.mxu0 0
      %950 = vmatprep.subr.bf16.mxu0 0
      %951 = vmatpush1.bf16.xpose.msra.mxu0 0
      %952 = vmatprep.subr.bf16.mxu0 0
      %953 = vmatpush1.bf16.xpose.msra.mxu0 0
      %954 = vmatprep.subr.bf16.mxu0 0
      %955 = vmatpush1.bf16.xpose.msra.mxu0 0
      %956 = vmatprep.subr.bf16.mxu0 0
      %957 = vmatpush1.bf16.xpose.msra.mxu0 0
      %958 = vmatprep.subr.bf16.mxu0 0
      %959 = vmatpush1.bf16.xpose.msra.mxu0 0
      %960 = vmatprep.subr.bf16.mxu0 0
      %961 = vmatpush1.bf16.xpose.msra.mxu0 0
      %962 = vmatprep.subr.bf16.mxu0 0
      %963 = vmatpush1.bf16.xpose.msra.mxu0 0
      %964 = vmatprep.subr.bf16.mxu0 0
      %965 = vmatpush1.bf16.xpose.msra.mxu0 0
      %966 = vmatprep.subr.bf16.mxu0 0
      %967 = vmatpush1.bf16.xpose.msra.mxu0 0
      %968 = vmatprep.mubr.bf16.mxu0 0
      %969 = vmatmul.mubr.bf16.gmra.mrb[0].mxu0 %v931
      %v970 = vpop.f32.mrb[0].mxu0
      %v971 = vadd.f32 0.0, %v970
      %v972 = vpop.f32.mrb[0].mxu0
      %v973 = vpop.f32.mrb[0].mxu0
      %v974 = vpop.f32.mrb[0].mxu0
      %975 = vdwg.mxu0
      %v977 = vrot.slane %v971, 1
      %v979 = vsel %vm764, %v977, 0.0
      %981 = vrot.lane.b32.xlu0 %v979, 9
      %v982 = vpop.permute.xlu0 %981
      %v984 = vsel %vm714, %v971, 0.0
      %v985 = vsel %vm771, %v984, %v982
      %987 = vrot.lane.b32.xlu0 %v985, 127
      %v988 = vpop.permute.xlu0 %987
      %990 = vrot.lane.b32.xlu0 %v985, 16
      %v991 = vpop.permute.xlu0 %990
      %v993 = vsel %vm783, %v988, %v991
      %v994 = vsel %vm788, %v993, %v985
      %996 = vrot.lane.b32.xlu0 %v994, 126
      %v997 = vpop.permute.xlu0 %996
      %999 = vrot.lane.b32.xlu0 %v994, 15
      %v1000 = vpop.permute.xlu0 %999
      %v1002 = vsel %vm797, %v997, %v1000
      %v1003 = vsel %vm802, %v1002, %v994
      %1005 = vrot.lane.b32.xlu0 %v1003, 124
      %v1006 = vpop.permute.xlu0 %1005
      %1008 = vrot.lane.b32.xlu0 %v1003, 13
      %v1009 = vpop.permute.xlu0 %1008
      %v1011 = vsel %vm811, %v1006, %v1009
      %v1012 = vsel %vm816, %v1011, %v1003
      %1014 = vrot.lane.b32.xlu0 %v701, 120
      %v1015 = vpop.permute.xlu0 %1014
      %1017 = vrot.lane.b32.xlu0 %v711, 120
      %v1018 = vpop.permute.xlu0 %1017
      %v1020 = vsel %vm714, %v1015, 0
      %v1023 = vsel %vm714, %v1018, 0
      %1025 = vmatprep.subr.bf16.mxu0 0
      %1026 = vmatpush1.bf16.xpose.msra.mxu0 %v1023
      %1027 = vmatprep.subr.bf16.mxu0 0
      %1028 = vmatpush1.bf16.xpose.msra.mxu0 0
      %1029 = vmatprep.subr.bf16.mxu0 0
      %1030 = vmatpush1.bf16.xpose.msra.mxu0 0
      %1031 = vmatprep.subr.bf16.mxu0 0
      %1032 = vmatpush1.bf16.xpose.msra.mxu0 0
      %1033 = vmatprep.subr.bf16.mxu0 0
      %1034 = vmatpush1.bf16.xpose.msra.mxu0 0
      %1035 = vmatprep.subr.bf16.mxu0 0
      %1036 = vmatpush1.bf16.xpose.msra.mxu0 0
      %1037 = vmatprep.subr.bf16.mxu0 0
      %1038 = vmatpush1.bf16.xpose.msra.mxu0 0
      %1039 = vmatprep.subr.bf16.mxu0 0
      %1040 = vmatpush1.bf16.xpose.msra.mxu0 0
      %1041 = vmatprep.subr.bf16.mxu0 0
      %1042 = vmatpush1.bf16.xpose.msra.mxu0 0
      %1043 = vmatprep.subr.bf16.mxu0 0
      %1044 = vmatpush1.bf16.xpose.msra.mxu0 0
      %1045 = vmatprep.subr.bf16.mxu0 0
      %1046 = vmatpush1.bf16.xpose.msra.mxu0 0
      %1047 = vmatprep.subr.bf16.mxu0 0
      %1048 = vmatpush1.bf16.xpose.msra.mxu0 0
      %1049 = vmatprep.subr.bf16.mxu0 0
      %1050 = vmatpush1.bf16.xpose.msra.mxu0 0
      %1051 = vmatprep.subr.bf16.mxu0 0
      %1052 = vmatpush1.bf16.xpose.msra.mxu0 0
      %1053 = vmatprep.subr.bf16.mxu0 0
      %1054 = vmatpush1.bf16.xpose.msra.mxu0 0
      %1055 = vmatprep.subr.bf16.mxu0 0
      %1056 = vmatpush1.bf16.xpose.msra.mxu0 0
      %1057 = vmatprep.mubr.bf16.mxu0 0
      %1058 = vmatmul.mubr.bf16.gmra.mrb[0].mxu0 %v1020
      %v1059 = vpop.f32.mrb[0].mxu0
      %v1060 = vadd.f32 %v1012, %v1059
      %v1061 = vpop.f32.mrb[0].mxu0
      %v1062 = vpop.f32.mrb[0].mxu0
      %v1063 = vpop.f32.mrb[0].mxu0
      %1064 = vdwg.mxu0
      %v1065 = vmul.f32 %v1060, 0.17677669
      %v1066 = vsel %vm714, %v1065, -inf
      %1067 = vmax.xlane.f32.xlu0 %v1066
      %v1068 = vpop.xlane.xlu0 %1067
      %v1069 = vsub.f32 %v1065, %v1068
      %v1070 = vmul.f32 %v1069, 1.442695
      %v1071 = vpow.pop %v1070
      %v1072 = vsel %vm714, %v1071, 0.0
      %1073 = vadd.xlane.f32.xlu0 %v1072
      %v1074 = vpop.xlane.xlu0 %1073
      %v1075 = vrcp.pop %v1074
      %v1076 = vmul.f32 %v1071, %v1075
      %v1077 = vpack.c.bf16 %v1076, %v1076
      %1079 = vrot.lane.b32.xlu0 %v712, 120
      %v1080 = vpop.permute.xlu0 %1079
      %v1082 = vsel %vm714, %v1077, 0
      %v1085 = vsel %vm880, %v1080, 0
      %1087 = vmatprep.subr.bf16.mxu0 0
      %1088 = vmatpush1.bf16.msra.mxu0 %v1085
      %1089 = vmatprep.subr.bf16.mxu0 0
      %1090 = vmatpush1.bf16.msra.mxu0 0
      %1091 = vmatprep.subr.bf16.mxu0 0
      %1092 = vmatpush1.bf16.msra.mxu0 0
      %1093 = vmatprep.subr.bf16.mxu0 0
      %1094 = vmatpush1.bf16.msra.mxu0 0
      %1095 = vmatprep.subr.bf16.mxu0 0
      %1096 = vmatpush1.bf16.msra.mxu0 0
      %1097 = vmatprep.subr.bf16.mxu0 0
      %1098 = vmatpush1.bf16.msra.mxu0 0
      %1099 = vmatprep.subr.bf16.mxu0 0
      %1100 = vmatpush1.bf16.msra.mxu0 0
      %1101 = vmatprep.subr.bf16.mxu0 0
      %1102 = vmatpush1.bf16.msra.mxu0 0
      %1103 = vmatprep.subr.bf16.mxu0 0
      %1104 = vmatpush1.bf16.msra.mxu0 0
      %1105 = vmatprep.subr.bf16.mxu0 0
      %1106 = vmatpush1.bf16.msra.mxu0 0
      %1107 = vmatprep.subr.bf16.mxu0 0
      %1108 = vmatpush1.bf16.msra.mxu0 0
      %1109 = vmatprep.subr.bf16.mxu0 0
      %1110 = vmatpush1.bf16.msra.mxu0 0
      %1111 = vmatprep.subr.bf16.mxu0 0
      %1112 = vmatpush1.bf16.msra.mxu0 0
      %1113 = vmatprep.subr.bf16.mxu0 0
      %1114 = vmatpush1.bf16.msra.mxu0 0
      %1115 = vmatprep.subr.bf16.mxu0 0
      %1116 = vmatpush1.bf16.msra.mxu0 0
      %1117 = vmatprep.subr.bf16.mxu0 0
      %1118 = vmatpush1.bf16.msra.mxu0 0
      %1119 = vmatprep.mubr.bf16.mxu0 0
      %1120 = vmatmul.mubr.bf16.gmra.mrb[0].mxu0 %v1082
      %v1121 = vpop.f32.mrb[0].mxu0
      %v1122 = vadd.f32 0.0, %v1121
      %v1123 = vpop.f32.mrb[0].mxu0
      %v1124 = vpop.f32.mrb[0].mxu0
      %v1125 = vpop.f32.mrb[0].mxu0
      %1126 = vdwg.mxu0
      %1127 = vrot.lane.b32.xlu0 %v710, 112
      %v1128 = vpop.permute.xlu0 %1127
      %1129 = vrot.lane.b32.xlu0 %v713, 112
      %v1130 = vpop.permute.xlu0 %1129
      %v1132 = vsel %vm714, %v1128, 0
      %v1135 = vsel %vm714, %v1130, 0
      %1137 = vmatprep.subr.bf16.mxu0 0
      %1138 = vmatpush1.bf16.xpose.msra.mxu0 %v1135
      %1139 = vmatprep.subr.bf16.mxu0 0
      %1140 = vmatpush1.bf16.xpose.msra.mxu0 0
      %1141 = vmatprep.subr.bf16.mxu0 0
      %1142 = vmatpush1.bf16.xpose.msra.mxu0 0
      %1143 = vmatprep.subr.bf16.mxu0 0
      %1144 = vmatpush1.bf16.xpose.msra.mxu0 0
      %1145 = vmatprep.subr.bf16.mxu0 0
      %1146 = vmatpush1.bf16.xpose.msra.mxu0 0
      %1147 = vmatprep.subr.bf16.mxu0 0
      %1148 = vmatpush1.bf16.xpose.msra.mxu0 0
      %1149 = vmatprep.subr.bf16.mxu0 0
      %1150 = vmatpush1.bf16.xpose.msra.mxu0 0
      %1151 = vmatprep.subr.bf16.mxu0 0
      %1152 = vmatpush1.bf16.xpose.msra.mxu0 0
      %1153 = vmatprep.subr.bf16.mxu0 0
      %1154 = vmatpush1.bf16.xpose.msra.mxu0 0
      %1155 = vmatprep.subr.bf16.mxu0 0
      %1156 = vmatpush1.bf16.xpose.msra.mxu0 0
      %1157 = vmatprep.subr.bf16.mxu0 0
      %1158 = vmatpush1.bf16.xpose.msra.mxu0 0
      %1159 = vmatprep.subr.bf16.mxu0 0
      %1160 = vmatpush1.bf16.xpose.msra.mxu0 0
      %1161 = vmatprep.subr.bf16.mxu0 0
      %1162 = vmatpush1.bf16.xpose.msra.mxu0 0
      %1163 = vmatprep.subr.bf16.mxu0 0
      %1164 = vmatpush1.bf16.xpose.msra.mxu0 0
      %1165 = vmatprep.subr.bf16.mxu0 0
      %1166 = vmatpush1.bf16.xpose.msra.mxu0 0
      %1167 = vmatprep.subr.bf16.mxu0 0
      %1168 = vmatpush1.bf16.xpose.msra.mxu0 0
      %1169 = vmatprep.mubr.bf16.mxu0 0
      %1170 = vmatmul.mubr.bf16.gmra.mrb[0].mxu0 %v1132
      %v1171 = vpop.f32.mrb[0].mxu0
      %v1172 = vadd.f32 0.0, %v1171
      %v1173 = vpop.f32.mrb[0].mxu0
      %v1174 = vpop.f32.mrb[0].mxu0
      %v1175 = vpop.f32.mrb[0].mxu0
      %1176 = vdwg.mxu0
      %v1178 = vrot.slane %v1172, 1
      %v1180 = vsel %vm764, %v1178, 0.0
      %1182 = vrot.lane.b32.xlu0 %v1180, 9
      %v1183 = vpop.permute.xlu0 %1182
      %v1185 = vsel %vm714, %v1172, 0.0
      %v1186 = vsel %vm771, %v1185, %v1183
      %1188 = vrot.lane.b32.xlu0 %v1186, 127
      %v1189 = vpop.permute.xlu0 %1188
      %1191 = vrot.lane.b32.xlu0 %v1186, 16
      %v1192 = vpop.permute.xlu0 %1191
      %v1194 = vsel %vm783, %v1189, %v1192
      %v1195 = vsel %vm788, %v1194, %v1186
      %1197 = vrot.lane.b32.xlu0 %v1195, 126
      %v1198 = vpop.permute.xlu0 %1197
      %1200 = vrot.lane.b32.xlu0 %v1195, 15
      %v1201 = vpop.permute.xlu0 %1200
      %v1203 = vsel %vm797, %v1198, %v1201
      %v1204 = vsel %vm802, %v1203, %v1195
      %1206 = vrot.lane.b32.xlu0 %v1204, 124
      %v1207 = vpop.permute.xlu0 %1206
      %1209 = vrot.lane.b32.xlu0 %v1204, 13
      %v1210 = vpop.permute.xlu0 %1209
      %v1212 = vsel %vm811, %v1207, %v1210
      %v1213 = vsel %vm816, %v1212, %v1204
      %1214 = vrot.lane.b32.xlu0 %v701, 112
      %v1215 = vpop.permute.xlu0 %1214
      %1216 = vrot.lane.b32.xlu0 %v711, 112
      %v1217 = vpop.permute.xlu0 %1216
      %v1219 = vsel %vm714, %v1215, 0
      %v1222 = vsel %vm714, %v1217, 0
      %1224 = vmatprep.subr.bf16.mxu0 0
      %1225 = vmatpush1.bf16.xpose.msra.mxu0 %v1222
      %1226 = vmatprep.subr.bf16.mxu0 0
      %1227 = vmatpush1.bf16.xpose.msra.mxu0 0
      %1228 = vmatprep.subr.bf16.mxu0 0
      %1229 = vmatpush1.bf16.xpose.msra.mxu0 0
      %1230 = vmatprep.subr.bf16.mxu0 0
      %1231 = vmatpush1.bf16.xpose.msra.mxu0 0
      %1232 = vmatprep.subr.bf16.mxu0 0
      %1233 = vmatpush1.bf16.xpose.msra.mxu0 0
      %1234 = vmatprep.subr.bf16.mxu0 0
      %1235 = vmatpush1.bf16.xpose.msra.mxu0 0
      %1236 = vmatprep.subr.bf16.mxu0 0
      %1237 = vmatpush1.bf16.xpose.msra.mxu0 0
      %1238 = vmatprep.subr.bf16.mxu0 0
      %1239 = vmatpush1.bf16.xpose.msra.mxu0 0
      %1240 = vmatprep.subr.bf16.mxu0 0
      %1241 = vmatpush1.bf16.xpose.msra.mxu0 0
      %1242 = vmatprep.subr.bf16.mxu0 0
      %1243 = vmatpush1.bf16.xpose.msra.mxu0 0
      %1244 = vmatprep.subr.bf16.mxu0 0
      %1245 = vmatpush1.bf16.xpose.msra.mxu0 0
      %1246 = vmatprep.subr.bf16.mxu0 0
      %1247 = vmatpush1.bf16.xpose.msra.mxu0 0
      %1248 = vmatprep.subr.bf16.mxu0 0
      %1249 = vmatpush1.bf16.xpose.msra.mxu0 0
      %1250 = vmatprep.subr.bf16.mxu0 0
      %1251 = vmatpush1.bf16.xpose.msra.mxu0 0
      %1252 = vmatprep.subr.bf16.mxu0 0
      %1253 = vmatpush1.bf16.xpose.msra.mxu0 0
      %1254 = vmatprep.subr.bf16.mxu0 0
      %1255 = vmatpush1.bf16.xpose.msra.mxu0 0
      %1256 = vmatprep.mubr.bf16.mxu0 0
      %1257 = vmatmul.mubr.bf16.gmra.mrb[0].mxu0 %v1219
      %v1258 = vpop.f32.mrb[0].mxu0
      %v1259 = vadd.f32 %v1213, %v1258
      %v1260 = vpop.f32.mrb[0].mxu0
      %v1261 = vpop.f32.mrb[0].mxu0
      %v1262 = vpop.f32.mrb[0].mxu0
      %1263 = vdwg.mxu0
      %v1264 = vmul.f32 %v1259, 0.17677669
      %v1265 = vsel %vm714, %v1264, -inf
      %1266 = vmax.xlane.f32.xlu0 %v1265
      %v1267 = vpop.xlane.xlu0 %1266
      %v1268 = vsub.f32 %v1264, %v1267
      %v1269 = vmul.f32 %v1268, 1.442695
      %v1270 = vpow.pop %v1269
      %v1271 = vsel %vm714, %v1270, 0.0
      %1272 = vadd.xlane.f32.xlu0 %v1271
      %v1273 = vpop.xlane.xlu0 %1272
      %v1274 = vrcp.pop %v1273
      %v1275 = vmul.f32 %v1270, %v1274
      %v1276 = vpack.c.bf16 %v1275, %v1275
      %1277 = vrot.lane.b32.xlu0 %v712, 112
      %v1278 = vpop.permute.xlu0 %1277
      %v1280 = vsel %vm714, %v1276, 0
      %v1283 = vsel %vm880, %v1278, 0
      %1285 = vmatprep.subr.bf16.mxu0 0
      %1286 = vmatpush1.bf16.msra.mxu0 %v1283
      %1287 = vmatprep.subr.bf16.mxu0 0
      %1288 = vmatpush1.bf16.msra.mxu0 0
      %1289 = vmatprep.subr.bf16.mxu0 0
      %1290 = vmatpush1.bf16.msra.mxu0 0
      %1291 = vmatprep.subr.bf16.mxu0 0
      %1292 = vmatpush1.bf16.msra.mxu0 0
      %1293 = vmatprep.subr.bf16.mxu0 0
      %1294 = vmatpush1.bf16.msra.mxu0 0
      %1295 = vmatprep.subr.bf16.mxu0 0
      %1296 = vmatpush1.bf16.msra.mxu0 0
      %1297 = vmatprep.subr.bf16.mxu0 0
      %1298 = vmatpush1.bf16.msra.mxu0 0
      %1299 = vmatprep.subr.bf16.mxu0 0
      %1300 = vmatpush1.bf16.msra.mxu0 0
      %1301 = vmatprep.subr.bf16.mxu0 0
      %1302 = vmatpush1.bf16.msra.mxu0 0
      %1303 = vmatprep.subr.bf16.mxu0 0
      %1304 = vmatpush1.bf16.msra.mxu0 0
      %1305 = vmatprep.subr.bf16.mxu0 0
      %1306 = vmatpush1.bf16.msra.mxu0 0
      %1307 = vmatprep.subr.bf16.mxu0 0
      %1308 = vmatpush1.bf16.msra.mxu0 0
      %1309 = vmatprep.subr.bf16.mxu0 0
      %1310 = vmatpush1.bf16.msra.mxu0 0
      %1311 = vmatprep.subr.bf16.mxu0 0
      %1312 = vmatpush1.bf16.msra.mxu0 0
      %1313 = vmatprep.subr.bf16.mxu0 0
      %1314 = vmatpush1.bf16.msra.mxu0 0
      %1315 = vmatprep.subr.bf16.mxu0 0
      %1316 = vmatpush1.bf16.msra.mxu0 0
      %1317 = vmatprep.mubr.bf16.mxu0 0
      %1318 = vmatmul.mubr.bf16.gmra.mrb[0].mxu0 %v1280
      %v1319 = vpop.f32.mrb[0].mxu0
      %v1320 = vadd.f32 0.0, %v1319
      %v1321 = vpop.f32.mrb[0].mxu0
      %v1322 = vpop.f32.mrb[0].mxu0
      %v1323 = vpop.f32.mrb[0].mxu0
      %1324 = vdwg.mxu0
      %1325 = vrot.lane.b32.xlu0 %v710, 104
      %v1326 = vpop.permute.xlu0 %1325
      %1327 = vrot.lane.b32.xlu0 %v713, 104
      %v1328 = vpop.permute.xlu0 %1327
      %v1330 = vsel %vm714, %v1326, 0
      %v1333 = vsel %vm714, %v1328, 0
      %1335 = vmatprep.subr.bf16.mxu0 0
      %1336 = vmatpush1.bf16.xpose.msra.mxu0 %v1333
      %1337 = vmatprep.subr.bf16.mxu0 0
      %1338 = vmatpush1.bf16.xpose.msra.mxu0 0
      %1339 = vmatprep.subr.bf16.mxu0 0
      %1340 = vmatpush1.bf16.xpose.msra.mxu0 0
      %1341 = vmatprep.subr.bf16.mxu0 0
      %1342 = vmatpush1.bf16.xpose.msra.mxu0 0
      %1343 = vmatprep.subr.bf16.mxu0 0
      %1344 = vmatpush1.bf16.xpose.msra.mxu0 0
      %1345 = vmatprep.subr.bf16.mxu0 0
      %1346 = vmatpush1.bf16.xpose.msra.mxu0 0
      %1347 = vmatprep.subr.bf16.mxu0 0
      %1348 = vmatpush1.bf16.xpose.msra.mxu0 0
      %1349 = vmatprep.subr.bf16.mxu0 0
      %1350 = vmatpush1.bf16.xpose.msra.mxu0 0
      %1351 = vmatprep.subr.bf16.mxu0 0
      %1352 = vmatpush1.bf16.xpose.msra.mxu0 0
      %1353 = vmatprep.subr.bf16.mxu0 0
      %1354 = vmatpush1.bf16.xpose.msra.mxu0 0
      %1355 = vmatprep.subr.bf16.mxu0 0
      %1356 = vmatpush1.bf16.xpose.msra.mxu0 0
      %1357 = vmatprep.subr.bf16.mxu0 0
      %1358 = vmatpush1.bf16.xpose.msra.mxu0 0
      %1359 = vmatprep.subr.bf16.mxu0 0
      %1360 = vmatpush1.bf16.xpose.msra.mxu0 0
      %1361 = vmatprep.subr.bf16.mxu0 0
      %1362 = vmatpush1.bf16.xpose.msra.mxu0 0
      %1363 = vmatprep.subr.bf16.mxu0 0
      %1364 = vmatpush1.bf16.xpose.msra.mxu0 0
      %1365 = vmatprep.subr.bf16.mxu0 0
      %1366 = vmatpush1.bf16.xpose.msra.mxu0 0
      %1367 = vmatprep.mubr.bf16.mxu0 0
      %1368 = vmatmul.mubr.bf16.gmra.mrb[0].mxu0 %v1330
      %v1369 = vpop.f32.mrb[0].mxu0
      %v1370 = vadd.f32 0.0, %v1369
      %v1371 = vpop.f32.mrb[0].mxu0
      %v1372 = vpop.f32.mrb[0].mxu0
      %v1373 = vpop.f32.mrb[0].mxu0
      %1374 = vdwg.mxu0
      %v1376 = vrot.slane %v1370, 1
      %v1378 = vsel %vm764, %v1376, 0.0
      %1380 = vrot.lane.b32.xlu0 %v1378, 9
      %v1381 = vpop.permute.xlu0 %1380
      %v1383 = vsel %vm714, %v1370, 0.0
      %v1384 = vsel %vm771, %v1383, %v1381
      %1386 = vrot.lane.b32.xlu0 %v1384, 127
      %v1387 = vpop.permute.xlu0 %1386
      %1389 = vrot.lane.b32.xlu0 %v1384, 16
      %v1390 = vpop.permute.xlu0 %1389
      %v1392 = vsel %vm783, %v1387, %v1390
      %v1393 = vsel %vm788, %v1392, %v1384
      %1395 = vrot.lane.b32.xlu0 %v1393, 126
      %v1396 = vpop.permute.xlu0 %1395
      %1398 = vrot.lane.b32.xlu0 %v1393, 15
      %v1399 = vpop.permute.xlu0 %1398
      %v1401 = vsel %vm797, %v1396, %v1399
      %v1402 = vsel %vm802, %v1401, %v1393
      %1404 = vrot.lane.b32.xlu0 %v1402, 124
      %v1405 = vpop.permute.xlu0 %1404
      %1407 = vrot.lane.b32.xlu0 %v1402, 13
      %v1408 = vpop.permute.xlu0 %1407
      %v1410 = vsel %vm811, %v1405, %v1408
      %v1411 = vsel %vm816, %v1410, %v1402
      %1412 = vrot.lane.b32.xlu0 %v701, 104
      %v1413 = vpop.permute.xlu0 %1412
      %1414 = vrot.lane.b32.xlu0 %v711, 104
      %v1415 = vpop.permute.xlu0 %1414
      %v1417 = vsel %vm714, %v1413, 0
      %v1420 = vsel %vm714, %v1415, 0
      %1422 = vmatprep.subr.bf16.mxu0 0
      %1423 = vmatpush1.bf16.xpose.msra.mxu0 %v1420
      %1424 = vmatprep.subr.bf16.mxu0 0
      %1425 = vmatpush1.bf16.xpose.msra.mxu0 0
      %1426 = vmatprep.subr.bf16.mxu0 0
      %1427 = vmatpush1.bf16.xpose.msra.mxu0 0
      %1428 = vmatprep.subr.bf16.mxu0 0
      %1429 = vmatpush1.bf16.xpose.msra.mxu0 0
      %1430 = vmatprep.subr.bf16.mxu0 0
      %1431 = vmatpush1.bf16.xpose.msra.mxu0 0
      %1432 = vmatprep.subr.bf16.mxu0 0
      %1433 = vmatpush1.bf16.xpose.msra.mxu0 0
      %1434 = vmatprep.subr.bf16.mxu0 0
      %1435 = vmatpush1.bf16.xpose.msra.mxu0 0
      %1436 = vmatprep.subr.bf16.mxu0 0
      %1437 = vmatpush1.bf16.xpose.msra.mxu0 0
      %1438 = vmatprep.subr.bf16.mxu0 0
      %1439 = vmatpush1.bf16.xpose.msra.mxu0 0
      %1440 = vmatprep.subr.bf16.mxu0 0
      %1441 = vmatpush1.bf16.xpose.msra.mxu0 0
      %1442 = vmatprep.subr.bf16.mxu0 0
      %1443 = vmatpush1.bf16.xpose.msra.mxu0 0
      %1444 = vmatprep.subr.bf16.mxu0 0
      %1445 = vmatpush1.bf16.xpose.msra.mxu0 0
      %1446 = vmatprep.subr.bf16.mxu0 0
      %1447 = vmatpush1.bf16.xpose.msra.mxu0 0
      %1448 = vmatprep.subr.bf16.mxu0 0
      %1449 = vmatpush1.bf16.xpose.msra.mxu0 0
      %1450 = vmatprep.subr.bf16.mxu0 0
      %1451 = vmatpush1.bf16.xpose.msra.mxu0 0
      %1452 = vmatprep.subr.bf16.mxu0 0
      %1453 = vmatpush1.bf16.xpose.msra.mxu0 0
      %1454 = vmatprep.mubr.bf16.mxu0 0
      %1455 = vmatmul.mubr.bf16.gmra.mrb[0].mxu0 %v1417
      %v1456 = vpop.f32.mrb[0].mxu0
      %v1457 = vadd.f32 %v1411, %v1456
      %v1458 = vpop.f32.mrb[0].mxu0
      %v1459 = vpop.f32.mrb[0].mxu0
      %v1460 = vpop.f32.mrb[0].mxu0
      %1461 = vdwg.mxu0
      %v1462 = vmul.f32 %v1457, 0.17677669
      %v1463 = vsel %vm714, %v1462, -inf
      %1464 = vmax.xlane.f32.xlu0 %v1463
      %v1465 = vpop.xlane.xlu0 %1464
      %v1466 = vsub.f32 %v1462, %v1465
      %v1467 = vmul.f32 %v1466, 1.442695
      %v1468 = vpow.pop %v1467
      %v1469 = vsel %vm714, %v1468, 0.0
      %1470 = vadd.xlane.f32.xlu0 %v1469
      %v1471 = vpop.xlane.xlu0 %1470
      %v1472 = vrcp.pop %v1471
      %v1473 = vmul.f32 %v1468, %v1472
      %v1474 = vpack.c.bf16 %v1473, %v1473
      %1475 = vrot.lane.b32.xlu0 %v712, 104
      %v1476 = vpop.permute.xlu0 %1475
      %v1478 = vsel %vm714, %v1474, 0
      %v1481 = vsel %vm880, %v1476, 0
      %1483 = vmatprep.subr.bf16.mxu0 0
      %1484 = vmatpush1.bf16.msra.mxu0 %v1481
      %1485 = vmatprep.subr.bf16.mxu0 0
      %1486 = vmatpush1.bf16.msra.mxu0 0
      %1487 = vmatprep.subr.bf16.mxu0 0
      %1488 = vmatpush1.bf16.msra.mxu0 0
      %1489 = vmatprep.subr.bf16.mxu0 0
      %1490 = vmatpush1.bf16.msra.mxu0 0
      %1491 = vmatprep.subr.bf16.mxu0 0
      %1492 = vmatpush1.bf16.msra.mxu0 0
      %1493 = vmatprep.subr.bf16.mxu0 0
      %1494 = vmatpush1.bf16.msra.mxu0 0
      %1495 = vmatprep.subr.bf16.mxu0 0
      %1496 = vmatpush1.bf16.msra.mxu0 0
      %1497 = vmatprep.subr.bf16.mxu0 0
      %1498 = vmatpush1.bf16.msra.mxu0 0
      %1499 = vmatprep.subr.bf16.mxu0 0
      %1500 = vmatpush1.bf16.msra.mxu0 0
      %1501 = vmatprep.subr.bf16.mxu0 0
      %1502 = vmatpush1.bf16.msra.mxu0 0
      %1503 = vmatprep.subr.bf16.mxu0 0
      %1504 = vmatpush1.bf16.msra.mxu0 0
      %1505 = vmatprep.subr.bf16.mxu0 0
      %1506 = vmatpush1.bf16.msra.mxu0 0
      %1507 = vmatprep.subr.bf16.mxu0 0
      %1508 = vmatpush1.bf16.msra.mxu0 0
      %1509 = vmatprep.subr.bf16.mxu0 0
      %1510 = vmatpush1.bf16.msra.mxu0 0
      %1511 = vmatprep.subr.bf16.mxu0 0
      %1512 = vmatpush1.bf16.msra.mxu0 0
      %1513 = vmatprep.subr.bf16.mxu0 0
      %1514 = vmatpush1.bf16.msra.mxu0 0
      %1515 = vmatprep.mubr.bf16.mxu0 0
      %1516 = vmatmul.mubr.bf16.gmra.mrb[0].mxu0 %v1478
      %v1517 = vpop.f32.mrb[0].mxu0
      %v1518 = vadd.f32 0.0, %v1517
      %v1519 = vpop.f32.mrb[0].mxu0
      %v1520 = vpop.f32.mrb[0].mxu0
      %v1521 = vpop.f32.mrb[0].mxu0
      %1522 = vdwg.mxu0
      %1524 = vrot.lane.b32.xlu0 %v1122, 8
      %v1525 = vpop.permute.xlu0 %1524
      %1528 = vrot.lane.b32.xlu0 %v1320, 16
      %v1529 = vpop.permute.xlu0 %1528
      %1532 = vrot.lane.b32.xlu0 %v1518, 24
      %v1533 = vpop.permute.xlu0 %1532
      %v1535 = vsel %vm714, %v919, %v1525
      %v1536 = vsel %vm783, %v1535, %v1529
      %vm1537 = vcmask 195584
      %v1538 = vsel %vm1537, %v1536, %v1533
      %v1539 = vpack.c.bf16 %v1538, %v1538
      %v1540 = vld [vmem:[%s11] sm:$0xf]
      %v1541 = vld [vmem:[%s11 + $0x4] sm:$0xf]
      %v1542 = vld [vmem:[%s11 + $0x8] sm:$0xf]
      %v1543 = vld [vmem:[%s11 + $0xc] sm:$0xf]
      %v1544 = vld [vmem:[%s12] sm:$0x1]
      %v1546 = vlaneseq
      %v1547 = vshrl.u32 %v1546, 7
      %v1548 = vsub.s32 0, %v1547
      %v1549 = vrot.slane %v1544, %v1548
      %v1555 = vunpack.c.l.b16 %v1540
      %v1556 = vunpack.c.l.b16 %v1541
      %v1557 = vunpack.c.l.b16 %v1542
      %v1558 = vunpack.c.l.b16 %v1543
      %v1559 = vpack.c.b16 %v1556, %v1555
      %v1560 = vpack.c.b16 %v1558, %v1557
      %v1564 = vsel %vm462, %v1539, 0
      %1566 = vmatprep.subr.bf16.mxu0 0
      %1567 = vmatpush1.bf16.msra.mxu0 %v1559
      %1568 = vmatprep.subr.bf16.mxu0 0
      %1569 = vmatpush1.bf16.msra.mxu0 %v1560
      %1570 = vmatprep.subr.bf16.mxu0 0
      %1571 = vmatpush1.bf16.msra.mxu0 0
      %1572 = vmatprep.subr.bf16.mxu0 0
      %1573 = vmatpush1.bf16.msra.mxu0 0
      %1574 = vmatprep.subr.bf16.mxu0 0
      %1575 = vmatpush1.bf16.msra.mxu0 0
      %1576 = vmatprep.subr.bf16.mxu0 0
      %1577 = vmatpush1.bf16.msra.mxu0 0
      %1578 = vmatprep.subr.bf16.mxu0 0
      %1579 = vmatpush1.bf16.msra.mxu0 0
      %1580 = vmatprep.subr.bf16.mxu0 0
      %1581 = vmatpush1.bf16.msra.mxu0 0
      %1582 = vmatprep.subr.bf16.mxu0 0
      %1583 = vmatpush1.bf16.msra.mxu0 0
      %1584 = vmatprep.subr.bf16.mxu0 0
      %1585 = vmatpush1.bf16.msra.mxu0 0
      %1586 = vmatprep.subr.bf16.mxu0 0
      %1587 = vmatpush1.bf16.msra.mxu0 0
      %1588 = vmatprep.subr.bf16.mxu0 0
      %1589 = vmatpush1.bf16.msra.mxu0 0
      %1590 = vmatprep.subr.bf16.mxu0 0
      %1591 = vmatpush1.bf16.msra.mxu0 0
      %1592 = vmatprep.subr.bf16.mxu0 0
      %1593 = vmatpush1.bf16.msra.mxu0 0
      %1594 = vmatprep.subr.bf16.mxu0 0
      %1595 = vmatpush1.bf16.msra.mxu0 0
      %1596 = vmatprep.subr.bf16.mxu0 0
      %1597 = vmatpush1.bf16.msra.mxu0 0
      %1598 = vmatprep.mubr.bf16.mxu0 0
      %1599 = vmatmul.mubr.bf16.gmra.mrb[0].mxu0 %v1564
      %v1600 = vpop.f32.mrb[0].mxu0
      %v1601 = vadd.f32 %v1549, %v1600
      %v1602 = vpop.f32.mrb[0].mxu0
      %v1603 = vpop.f32.mrb[0].mxu0
      %v1604 = vpop.f32.mrb[0].mxu0
      %1605 = vdwg.mxu0
      %v1606 = vadd.f32 %v1601, %v437
      %1607 = vst.msk [vmem:[%s435] sm:$0xff] %vm462, %v1606
      %p1608 = scmp.lt.s32.totalorder %s24, 1
      %s1609 = scalar_select %p1608, %s24, 1
      %s1610 = smul.addr %s1609, 8
      %s1611 = scalar_lea.vmem %s13, %s1610
      // Predicated region
      $region73: #{conformer_block.5} parent=71 // pred_check
        %p1612 = pneg %p320
      $region74: #{conformer_block.5} parent=71 // pred_check_branch
        %1614 = sbr.rel (%p1612) target = $region76
      $region75: #{conformer_block.5} parent=71 // pred_region
        _
      $region76: #{conformer_block.5} parent=71 // pred_fallthru
        _
    $region72: #{conformer_block.5} parent=5 // pred_fallthru
      _
    %p1615 = scmp.le.s32.totalorder 2, %s19
    // Predicated region
    $region77: #{conformer_block.5} parent=5 // pred_check
      %p1616 = pneg %p1615
    $region78: #{conformer_block.5} parent=5 // pred_check_branch
      %1618 = sbr.rel (%p1616) target = $region80
    $region79: #{conformer_block.5} parent=5 // pred_region
      %s1619 = ssub.s32 %s19, 2
      // Predicated region
      $region81: #{conformer_block.5} parent=79 // pred_check
        %p1620 = pneg %p326
      $region82: #{conformer_block.5} parent=79 // pred_check_branch
        %1622 = sbr.rel (%p1620) target = $region84
      $region83: #{conformer_block.5} parent=79 // pred_region
        %p1623 = scmp.lt.s32.totalorder %s25, 1
        %s1624 = scalar_select %p1623, %s25, 1
        %s1625 = smul.addr %s1624, 8
        %s1626 = scalar_lea.vmem %s13, %s1625
      $region84: #{conformer_block.5} parent=79 // pred_fallthru
        _
    $region80: #{conformer_block.5} parent=5 // pred_fallthru
      _
  $region6: #{conformer_block.5} parent=0 // loop_footer
    %s23 = sadd.s32 1, %s19
  $region7: #{conformer_block.5} parent=0 // loop_footer_branch
    %18 = sbr.rel target = $region3
  $region8: #{conformer_block.5} parent=0 // loop_exit
    _

// kernel: conformer_block.7
$region0: #{conformer_block.7}
  #allocation0 [shape = 'u32[]', space=smem, size = 0x4, offset = 0x4, fixed_abs, tag = 'smem constant byte address 0x4 - core index']
  #allocation1 [shape = 'u32[144,128]{1,0:T(1,128)}', space=vmem, size = 0x12000, scoped, tag = 'internal scratch']
  %s0 = inlined_call_operand.vmem [shape: f32[16,32], index: 0, kind: input, shape index: {}]
  %s1 = inlined_call_operand.vmem [shape: f32[1,32], index: 1, kind: input, shape index: {}]
  %s2 = inlined_call_operand.vmem [shape: f32[1,32], index: 2, kind: input, shape index: {}]
  %s3 = inlined_call_operand.vmem [shape: bf16[32,128], index: 3, kind: input, shape index: {}]
  %s4 = inlined_call_operand.vmem [shape: f32[1,128], index: 4, kind: input, shape index: {}]
  %s5 = inlined_call_operand.vmem [shape: bf16[128,32], index: 5, kind: input, shape index: {}]
  %s6 = inlined_call_operand.vmem [shape: f32[1,32], index: 6, kind: input, shape index: {}]
  %s7 = inlined_call_operand.vmem [shape: f32[1,32], index: 7, kind: input, shape index: {}]
  %s8 = inlined_call_operand.vmem [shape: f32[1,32], index: 8, kind: input, shape index: {}]
  %s9 = inlined_call_operand.hbm [shape: f32[16,32], index: 9, kind: output, shape index: {}]
  %s10 = sld [smem:[#allocation0]]
  $region46: #{conformer_block.7} parent=0
    _
  %s12 = ssub.s32 1, %s10
  %s13 = scalar_select 0, %s12, %s10
  $region1: #{conformer_block.7} parent=0
    #allocation2 [shape = 'u8[8192]{0}', space=vmem, size = 0x2000, scoped, tag = 'output window, operand 0, single buffered']
    #allocation3 [shape = 's32[1]{0}', space=sflag, size = 0x4, scoped, tag = 'scoped memory for conformer_block.7']
    %14 = vsyncpa [#allocation3], 0
    // Predicated region
    $region2: #{conformer_block.7} parent=1 // pred_check
      _
    $region3: #{conformer_block.7} parent=1 // pred_check_branch
      %16 = sbr.rel (0) target = $region5
    $region4: #{conformer_block.7} parent=1 // pred_region
      _
    $region5: #{conformer_block.7} parent=1 // pred_fallthru
      _
    // Predicated region
    $region6: #{conformer_block.7} parent=1 // pred_check
      _
    $region7: #{conformer_block.7} parent=1 // pred_check_branch
      %18 = sbr.rel (0) target = $region9
    $region8: #{conformer_block.7} parent=1 // pred_region
      _
    $region9: #{conformer_block.7} parent=1 // pred_fallthru
      _
    // Predicated region
    $region10: #{conformer_block.7} parent=1 // pred_check
      _
    $region11: #{conformer_block.7} parent=1 // pred_check_branch
      %20 = sbr.rel (0) target = $region13
    $region12: #{conformer_block.7} parent=1 // pred_region
      _
    $region13: #{conformer_block.7} parent=1 // pred_fallthru
      _
    // Predicated region
    $region14: #{conformer_block.7} parent=1 // pred_check
      _
    $region15: #{conformer_block.7} parent=1 // pred_check_branch
      %22 = sbr.rel (0) target = $region17
    $region16: #{conformer_block.7} parent=1 // pred_region
      _
    $region17: #{conformer_block.7} parent=1 // pred_fallthru
      _
    // Predicated region
    $region18: #{conformer_block.7} parent=1 // pred_check
      _
    $region19: #{conformer_block.7} parent=1 // pred_check_branch
      %24 = sbr.rel (0) target = $region21
    $region20: #{conformer_block.7} parent=1 // pred_region
      _
    $region21: #{conformer_block.7} parent=1 // pred_fallthru
      _
    // Predicated region
    $region22: #{conformer_block.7} parent=1 // pred_check
      _
    $region23: #{conformer_block.7} parent=1 // pred_check_branch
      %26 = sbr.rel (0) target = $region25
    $region24: #{conformer_block.7} parent=1 // pred_region
      _
    $region25: #{conformer_block.7} parent=1 // pred_fallthru
      _
    // Predicated region
    $region26: #{conformer_block.7} parent=1 // pred_check
      _
    $region27: #{conformer_block.7} parent=1 // pred_check_branch
      %28 = sbr.rel (0) target = $region29
    $region28: #{conformer_block.7} parent=1 // pred_region
      _
    $region29: #{conformer_block.7} parent=1 // pred_fallthru
      _
    // Predicated region
    $region30: #{conformer_block.7} parent=1 // pred_check
      _
    $region31: #{conformer_block.7} parent=1 // pred_check_branch
      %30 = sbr.rel (0) target = $region33
    $region32: #{conformer_block.7} parent=1 // pred_region
      _
    $region33: #{conformer_block.7} parent=1 // pred_fallthru
      _
    // Predicated region
    $region34: #{conformer_block.7} parent=1 // pred_check
      _
    $region35: #{conformer_block.7} parent=1 // pred_check_branch
      %32 = sbr.rel (0) target = $region37
    $region36: #{conformer_block.7} parent=1 // pred_region
      _
    $region37: #{conformer_block.7} parent=1 // pred_fallthru
      _
    %v34 = vld [vmem:[%s0] sm:$0xff]
    %v35 = vld [vmem:[%s0 + $0x8] sm:$0xff]
    %v36 = vld [vmem:[%s1] sm:$0x1]
    %v37 = vld [vmem:[%s2] sm:$0x1]
    %vm38 = vcmask 261120
    %v39 = vsel %vm38, %v34, 0.0
    %40 = vadd.xlane.f32.xlu0 %v39
    %v41 = vpop.xlane.xlu0 %40
    %v42 = vsel %vm38, %v35, 0.0
    %43 = vadd.xlane.f32.xlu0 %v42
    %v44 = vpop.xlane.xlu0 %43
    %v45 = vrcp.pop 32.0
    %v46 = vmul.f32 %v41, %v45
    %v47 = vmul.f32 %v44, %v45
    %v48 = vsub.f32 %v34, %v46
    %v49 = vsub.f32 %v35, %v47
    %v50 = vmul.f32 %v48, %v48
    %v51 = vmul.f32 %v49, %v49
    %v52 = vsel %vm38, %v50, 0.0
    %53 = vadd.xlane.f32.xlu0 %v52
    %v54 = vpop.xlane.xlu0 %53
    %v55 = vsel %vm38, %v51, 0.0
    %56 = vadd.xlane.f32.xlu0 %v55
    %v57 = vpop.xlane.xlu0 %56
    %v58 = vmul.f32 %v54, %v45
    %v59 = vmul.f32 %v57, %v45
    %v60 = vadd.f32 %v58, 1e-05
    %v61 = vadd.f32 %v59, 1e-05
    %v62 = vrsqrt.pop %v60
    %v63 = vrsqrt.pop %v61
    %v64 = vmul.f32 %v48, %v62
    %v65 = vmul.f32 %v49, %v63
    %v67 = vlaneseq
    %v68 = vshrl.u32 %v67, 7
    %v69 = vsub.s32 0, %v68
    %v70 = vrot.slane %v36, %v69
    %v72 = vmul.f32 %v64, %v70
    %v73 = vmul.f32 %v65, %v70
    %v75 = vlaneseq
    %v76 = vshrl.u32 %v75, 7
    %v77 = vsub.s32 0, %v76
    %v78 = vrot.slane %v37, %v77
    %v80 = vadd.f32 %v72, %v78
    %v81 = vadd.f32 %v73, %v78
    %v82 = vpack.c.bf16 %v81, %v80
    %v83 = vld [vmem:[%s3] sm:$0xf]
    %v84 = vld [vmem:[%s3 + $0x4] sm:$0xf]
    %v85 = vld [vmem:[%s3 + $0x8] sm:$0xf]
    %v86 = vld [vmem:[%s3 + $0xc] sm:$0xf]
    %v87 = vld [vmem:[%s4] sm:$0x1]
    %v89 = vlaneseq
    %v90 = vshrl.u32 %v89, 7
    %v91 = vsub.s32 0, %v90
    %v92 = vrot.slane %v87, %v91
    %v98 = vunpack.c.l.b16 %v83
    %v99 = vunpack.c.l.b16 %v84
    %v100 = vunpack.c.l.b16 %v85
    %v101 = vunpack.c.l.b16 %v86
    %v102 = vpack.c.b16 %v99, %v98
    %v103 = vpack.c.b16 %v101, %v100
    %v107 = vsel %vm38, %v82, 0
    %109 = vmatprep.subr.bf16.mxu0 0
    %110 = vmatpush1.bf16.msra.mxu0 %v102
    %111 = vmatprep.subr.bf16.mxu0 0
    %112 = vmatpush1.bf16.msra.mxu0 %v103
    %113 = vmatprep.subr.bf16.mxu0 0
    %114 = vmatpush1.bf16.msra.mxu0 0
    %115 = vmatprep.subr.bf16.mxu0 0
    %116 = vmatpush1.bf16.msra.mxu0 0
    %117 = vmatprep.subr.bf16.mxu0 0
    %118 = vmatpush1.bf16.msra.mxu0 0
    %119 = vmatprep.subr.bf16.mxu0 0
    %120 = vmatpush1.bf16.msra.mxu0 0
    %121 = vmatprep.subr.bf16.mxu0 0
    %122 = vmatpush1.bf16.msra.mxu0 0
    %123 = vmatprep.subr.bf16.mxu0 0
    %124 = vmatpush1.bf16.msra.mxu0 0
    %125 = vmatprep.subr.bf16.mxu0 0
    %126 = vmatpush1.bf16.msra.mxu0 0
    %127 = vmatprep.subr.bf16.mxu0 0
    %128 = vmatpush1.bf16.msra.mxu0 0
    %129 = vmatprep.subr.bf16.mxu0 0
    %130 = vmatpush1.bf16.msra.mxu0 0
    %131 = vmatprep.subr.bf16.mxu0 0
    %132 = vmatpush1.bf16.msra.mxu0 0
    %133 = vmatprep.subr.bf16.mxu0 0
    %134 = vmatpush1.bf16.msra.mxu0 0
    %135 = vmatprep.subr.bf16.mxu0 0
    %136 = vmatpush1.bf16.msra.mxu0 0
    %137 = vmatprep.subr.bf16.mxu0 0
    %138 = vmatpush1.bf16.msra.mxu0 0
    %139 = vmatprep.subr.bf16.mxu0 0
    %140 = vmatpush1.bf16.msra.mxu0 0
    %141 = vmatprep.mubr.bf16.mxu0 0
    %142 = vmatmul.mubr.bf16.gmra.mrb[0].mxu0 %v107
    %v143 = vpop.f32.mrb[0].mxu0
    %v144 = vadd.f32 %v92, %v143
    %v145 = vpop.f32.mrb[0].mxu0
    %v146 = vpop.f32.mrb[0].mxu0
    %v147 = vadd.f32 %v92, %v146
    %v148 = vpop.f32.mrb[0].mxu0
    %149 = vdwg.mxu0
    %v150 = vxor.u32 %v144, 2147483648
    %v151 = vxor.u32 %v147, 2147483648
    %v152 = vmul.f32 %v150, 1.442695
    %v153 = vpow.pop %v152
    %v154 = vmul.f32 %v151, 1.442695
    %v155 = vpow.pop %v154
    %v156 = vadd.f32 %v153, 1.0
    %v157 = vadd.f32 %v155, 1.0
    %v158 = vrcp.pop %v156
    %v159 = vmul.f32 1.0, %v158
    %v160 = vrcp.pop %v157
    %v161 = vmul.f32 1.0, %v160
    %v162 = vmul.f32 %v144, %v159
    %v163 = vmul.f32 %v147, %v161
    %v164 = vpack.c.bf16 %v163, %v162
    %v165 = vld [vmem:[%s5] sm:$0xf]
    %v166 = vld [vmem:[%s5 + $0x4] sm:$0xf]
    %v167 = vld [vmem:[%s5 + $0x8] sm:$0xf]
    %v168 = vld [vmem:[%s5 + $0xc] sm:$0xf]
    %v169 = vld [vmem:[%s5 + $0x10] sm:$0xf]
    %v170 = vld [vmem:[%s5 + $0x14] sm:$0xf]
    %v171 = vld [vmem:[%s5 + $0x18] sm:$0xf]
    %v172 = vld [vmem:[%s5 + $0x1c] sm:$0xf]
    %v173 = vld [vmem:[%s5 + $0x20] sm:$0xf]
    %v174 = vld [vmem:[%s5 + $0x24] sm:$0xf]
    %v175 = vld [vmem:[%s5 + $0x28] sm:$0xf]
    %v176 = vld [vmem:[%s5 + $0x2c] sm:$0xf]
    %v177 = vld [vmem:[%s5 + $0x30] sm:$0xf]
    %v178 = vld [vmem:[%s5 + $0x34] sm:$0xf]
    %v179 = vld [vmem:[%s5 + $0x38] sm:$0xf]
    %v180 = vld [vmem:[%s5 + $0x3c] sm:$0xf]
    %v181 = vld [vmem:[%s6] sm:$0x1]
    %v183 = vlaneseq
    %v184 = vshrl.u32 %v183, 7
    %v185 = vsub.s32 0, %v184
    %v186 = vrot.slane %v181, %v185
    %v204 = vunpack.c.l.b16 %v165
    %v205 = vunpack.c.l.b16 %v166
    %v206 = vunpack.c.l.b16 %v167
    %v207 = vunpack.c.l.b16 %v168
    %v208 = vunpack.c.l.b16 %v169
    %v209 = vunpack.c.l.b16 %v170
    %v210 = vunpack.c.l.b16 %v171
    %v211 = vunpack.c.l.b16 %v172
    %v212 = vunpack.c.l.b16 %v173
    %v213 = vunpack.c.l.b16 %v174
    %v214 = vunpack.c.l.b16 %v175
    %v215 = vunpack.c.l.b16 %v176
    %v216 = vunpack.c.l.b16 %v177
    %v217 = vunpack.c.l.b16 %v178
    %v218 = vunpack.c.l.b16 %v179
    %v219 = vunpack.c.l.b16 %v180
    %v220 = vpack.c.b16 %v205, %v204
    %v221 = vpack.c.b16 %v207, %v206
    %v222 = vpack.c.b16 %v209, %v208
    %v223 = vpack.c.b16 %v211, %v210
    %v224 = vpack.c.b16 %v213, %v212
    %v225 = vpack.c.b16 %v215, %v214
    %v226 = vpack.c.b16 %v217, %v216
    %v227 = vpack.c.b16 %v219, %v218
    %236 = vmatprep.subr.bf16.mxu0 0
    %237 = vmatpush1.bf16.msra.mxu0 %v220
    %238 = vmatprep.subr.bf16.mxu0 0
    %239 = vmatpush1.bf16.msra.mxu0 %v221
    %240 = vmatprep.subr.bf16.mxu0 0
    %241 = vmatpush1.bf16.msra.mxu0 %v222
    %242 = vmatprep.subr.bf16.mxu0 0
    %243 = vmatpush1.bf16.msra.mxu0 %v223
    %244 = vmatprep.subr.bf16.mxu0 0
    %245 = vmatpush1.bf16.msra.mxu0 %v224
    %246 = vmatprep.subr.bf16.mxu0 0
    %247 = vmatpush1.bf16.msra.mxu0 %v225
    %248 = vmatprep.subr.bf16.mxu0 0
    %249 = vmatpush1.bf16.msra.mxu0 %v226
    %250 = vmatprep.subr.bf16.mxu0 0
    %251 = vmatpush1.bf16.msra.mxu0 %v227
    %252 = vmatprep.subr.bf16.mxu0 0
    %253 = vmatpush1.bf16.msra.mxu0 0
    %254 = vmatprep.subr.bf16.mxu0 0
    %255 = vmatpush1.bf16.msra.mxu0 0
    %256 = vmatprep.subr.bf16.mxu0 0
    %257 = vmatpush1.bf16.msra.mxu0 0
    %258 = vmatprep.subr.bf16.mxu0 0
    %259 = vmatpush1.bf16.msra.mxu0 0
    %260 = vmatprep.subr.bf16.mxu0 0
    %261 = vmatpush1.bf16.msra.mxu0 0
    %262 = vmatprep.subr.bf16.mxu0 0
    %263 = vmatpush1.bf16.msra.mxu0 0
    %264 = vmatprep.subr.bf16.mxu0 0
    %265 = vmatpush1.bf16.msra.mxu0 0
    %266 = vmatprep.subr.bf16.mxu0 0
    %267 = vmatpush1.bf16.msra.mxu0 0
    %268 = vmatprep.mubr.bf16.mxu0 0
    %269 = vmatmul.mubr.bf16.gmra.mrb[0].mxu0 %v164
    %v270 = vpop.f32.mrb[0].mxu0
    %v271 = vadd.f32 %v186, %v270
    %v272 = vpop.f32.mrb[0].mxu0
    %v273 = vpop.f32.mrb[0].mxu0
    %v274 = vadd.f32 %v186, %v273
    %v275 = vpop.f32.mrb[0].mxu0
    %276 = vdwg.mxu0
    %v277 = vmul.f32 %v271, 0.5
    %v278 = vmul.f32 %v274, 0.5
    %v279 = vadd.f32 %v277, %v34
    %v280 = vadd.f32 %v278, %v35
    %v281 = vld [vmem:[%s7] sm:$0x1]
    %v282 = vld [vmem:[%s8] sm:$0x1]
    %v283 = vsel %vm38, %v279, 0.0
    %284 = vadd.xlane.f32.xlu0 %v283
    %v285 = vpop.xlane.xlu0 %284
    %v286 = vsel %vm38, %v280, 0.0
    %287 = vadd.xlane.f32.xlu0 %v286
    %v288 = vpop.xlane.xlu0 %287
    %v289 = vmul.f32 %v285, %v45
    %v290 = vmul.f32 %v288, %v45
    %v291 = vsub.f32 %v279, %v289
    %v292 = vsub.f32 %v280, %v290
    %v293 = vmul.f32 %v291, %v291
    %v294 = vmul.f32 %v292, %v292
    %v295 = vsel %vm38, %v293, 0.0
    %296 = vadd.xlane.f32.xlu0 %v295
    %v297 = vpop.xlane.xlu0 %296
    %v298 = vsel %vm38, %v294, 0.0
    %299 = vadd.xlane.f32.xlu0 %v298
    %v300 = vpop.xlane.xlu0 %299
    %v301 = vmul.f32 %v297, %v45
    %v302 = vmul.f32 %v300, %v45
    %v303 = vadd.f32 %v301, 1e-05
    %v304 = vadd.f32 %v302, 1e-05
    %v305 = vrsqrt.pop %v303
    %v306 = vrsqrt.pop %v304
    %v307 = vmul.f32 %v291, %v305
    %v308 = vmul.f32 %v292, %v306
    %v310 = vlaneseq
    %v311 = vshrl.u32 %v310, 7
    %v312 = vsub.s32 0, %v311
    %v313 = vrot.slane %v281, %v312
    %v315 = vmul.f32 %v307, %v313
    %v316 = vmul.f32 %v308, %v313
    %v318 = vlaneseq
    %v319 = vshrl.u32 %v318, 7
    %v320 = vsub.s32 0, %v319
    %v321 = vrot.slane %v282, %v320
    %v323 = vadd.f32 %v315, %v321
    %v324 = vadd.f32 %v316, %v321
    %325 = vst.msk [vmem:[#allocation2] sm:$0xff] %vm38, %v323
    %326 = vst.msk [vmem:[#allocation2 + $0x8] sm:$0xff] %vm38, %v324
    // Predicated region
    $region38: #{conformer_block.7} parent=1 // pred_check
      _
    $region39: #{conformer_block.7} parent=1 // pred_check_branch
      %328 = sbr.rel (0) target = $region41
    $region40: #{conformer_block.7} parent=1 // pred_region
      %s330 = ssub.s32 256, 256
      %331 = vsyncadd [#allocation3], %s330
      %s332 = sshll.u32 [#allocation2], 4
      %s333 = int_to_ptr.vmem [resolvable:$true] %s332
      %338 = dma.vmem_to_hbm [thread:$0]  %s333, 256, %s9, [#allocation3], 128, 128, 8
    $region41: #{conformer_block.7} parent=1 // pred_fallthru
      _
    // Predicated region
    $region42: #{conformer_block.7} parent=1 // pred_check
      _
    $region43: #{conformer_block.7} parent=1 // pred_check_branch
      %340 = sbr.rel (0) target = $region45
    $region44: #{conformer_block.7} parent=1 // pred_region
      %341 = dma.done [#allocation3], 256
    $region45: #{conformer_block.7} parent=1 // pred_fallthru
      _
    %342 = vsyncpa [#allocation3], 1

// kernel: conformer_block.6
$region0: #{conformer_block.6}
  #allocation0 [shape = 'u32[]', space=smem, size = 0x4, offset = 0x4, fixed_abs, tag = 'smem constant byte address 0x4 - core index']
  #allocation1 [shape = 'u32[144,128]{1,0:T(1,128)}', space=vmem, size = 0x12000, scoped, tag = 'internal scratch']
  %s0 = inlined_call_operand.vmem [shape: f32[2,8,32], index: 0, kind: input, shape index: {}]
  %s1 = inlined_call_operand.vmem [shape: f32[1,32], index: 1, kind: input, shape index: {}]
  %s2 = inlined_call_operand.vmem [shape: f32[1,32], index: 2, kind: input, shape index: {}]
  %s3 = inlined_call_operand.vmem [shape: bf16[32,64], index: 3, kind: input, shape index: {}]
  %s4 = inlined_call_operand.vmem [shape: f32[1,64], index: 4, kind: input, shape index: {}]
  %s5 = inlined_call_operand.vmem [shape: f32[3,64], index: 5, kind: input, shape index: {}]
  %s6 = inlined_call_operand.vmem [shape: f32[1,64], index: 6, kind: input, shape index: {}]
  %s7 = inlined_call_operand.vmem [shape: f32[1,64], index: 7, kind: input, shape index: {}]
  %s8 = inlined_call_operand.vmem [shape: f32[1,64], index: 8, kind: input, shape index: {}]
  %s9 = inlined_call_operand.vmem [shape: f32[1,64], index: 9, kind: input, shape index: {}]
  %s10 = inlined_call_operand.vmem [shape: f32[1,64], index: 10, kind: input, shape index: {}]
  %s11 = inlined_call_operand.vmem [shape: bf16[64,32], index: 11, kind: input, shape index: {}]
  %s12 = inlined_call_operand.vmem [shape: f32[1,32], index: 12, kind: input, shape index: {}]
  %s13 = inlined_call_operand.vmem [shape: f32[2,8,32], index: 13, kind: output, shape index: {}]
  %s14 = sld [smem:[#allocation0]]
  $region85: #{conformer_block.6} parent=0
    _
  %s16 = ssub.s32 1, %s14
  %s17 = scalar_select 0, %s16, %s14
  loop: start=0, step=1, limit=4
  $region2: #{conformer_block.6} parent=0 // loop_pre_header
    _
  $region3: #{conformer_block.6} parent=0 // loop_header
    %s19 = sphi 0, %s23
    %p20 = scmp.ge.s32.totalorder %s19, 4
    %s29 = sphi 0, %s31
    %s32 = sphi 0, %s29
    %s33 = sphi 0, %s32
    %s49 = sphi 0, %s33
    %s53 = sphi 0, %s53
    %s55 = sphi 0, %s53
    %s56 = sphi 0, %s55
    %s70 = sphi 0, %s56
    %s74 = sphi 0, %s74
    %s76 = sphi 0, %s74
    %s77 = sphi 0, %s76
    %s91 = sphi 0, %s77
    %s95 = sphi 0, %s95
    %s97 = sphi 0, %s95
    %s98 = sphi 0, %s97
    %s112 = sphi 0, %s98
    %s116 = sphi 0, %s116
    %s118 = sphi 0, %s116
    %s119 = sphi 0, %s118
    %s133 = sphi 0, %s119
    %s137 = sphi 0, %s137
    %s139 = sphi 0, %s137
    %s140 = sphi 0, %s139
    %s154 = sphi 0, %s140
    %s158 = sphi 0, %s158
    %s160 = sphi 0, %s158
    %s161 = sphi 0, %s160
    %s175 = sphi 0, %s161
    %s179 = sphi 0, %s179
    %s181 = sphi 0, %s179
    %s182 = sphi 0, %s181
    %s196 = sphi 0, %s182
    %s200 = sphi 0, %s200
    %s202 = sphi 0, %s200
    %s203 = sphi 0, %s202
    %s217 = sphi 0, %s203
    %s221 = sphi 0, %s221
    %s223 = sphi 0, %s221
    %s224 = sphi 0, %s223
    %s238 = sphi 0, %s224
    %s242 = sphi 0, %s242
    %s244 = sphi 0, %s242
    %s245 = sphi 0, %s244
    %s259 = sphi 0, %s245
    %s263 = sphi 0, %s263
    %s265 = sphi 0, %s263
    %s266 = sphi 0, %s265
    %s280 = sphi 0, %s266
    %s284 = sphi 0, %s284
    %s286 = sphi 0, %s284
    %s287 = sphi 0, %s286
    %s301 = sphi 0, %s287
    %s307 = sphi 0, %s309
    %s310 = sphi 0, %s307
    %s311 = sphi 0, %s310
    %s327 = sphi 0, %s311
  $region4: #{conformer_block.6} parent=0 // loop_header_branch
    %22 = sbr.rel (%p20) target = $region8
  $region5: #{conformer_block.6} parent=0 // loop_body
    %s24 = ssub.s32 %s19, 1
    %s25 = ssub.s32 %s19, 2
    %s26 = sadd.s32 %s19, 1
    %s27 = ssub.s32 %s19, %s26
    %p28 = scmp.eq.s32.totalorder %s27, 0
    %s30 = sadd.s32 %s29, 1
    %s31 = scalar_select %p28, %s29, %s30
    %p34 = pneg %p28
    %p35 = scmp.eq.s32.totalorder %s19, 1
    %p36 = por %p34, %p35
    %p37 = scmp.ne.s32.totalorder %s29, %s32
    %p38 = scmp.eq.s32.totalorder %s19, 0
    %p39 = por %p37, %p38
    %p40 = scmp.ne.s32.totalorder %s29, %s32
    %p41 = scmp.eq.s32.totalorder %s24, 1
    %p42 = por %p40, %p41
    %p43 = scmp.ne.s32.totalorder %s32, %s33
    %p44 = scmp.eq.s32.totalorder %s24, 0
    %p45 = por %p43, %p44
    %p46 = scmp.ne.s32.totalorder %s32, %s33
    %p47 = scmp.eq.s32.totalorder %s25, 1
    %p48 = por %p46, %p47
    %p50 = scmp.ne.s32.totalorder %s33, %s49
    %p51 = scmp.eq.s32.totalorder %s25, 0
    %p52 = por %p50, %p51
    %s54 = sadd.s32 %s53, 1
    %p57 = scmp.eq.s32.totalorder %s19, 1
    %p58 = scmp.ne.s32.totalorder %s53, %s55
    %p59 = scmp.eq.s32.totalorder %s19, 0
    %p60 = por %p58, %p59
    %p61 = scmp.ne.s32.totalorder %s53, %s55
    %p62 = scmp.eq.s32.totalorder %s24, 1
    %p63 = por %p61, %p62
    %p64 = scmp.ne.s32.totalorder %s55, %s56
    %p65 = scmp.eq.s32.totalorder %s24, 0
    %p66 = por %p64, %p65
    %p67 = scmp.ne.s32.totalorder %s55, %s56
    %p68 = scmp.eq.s32.totalorder %s25, 1
    %p69 = por %p67, %p68
    %p71 = scmp.ne.s32.totalorder %s56, %s70
    %p72 = scmp.eq.s32.totalorder %s25, 0
    %p73 = por %p71, %p72
    %s75 = sadd.s32 %s74, 1
    %p78 = scmp.eq.s32.totalorder %s19, 1
    %p79 = scmp.ne.s32.totalorder %s74, %s76
    %p80 = scmp.eq.s32.totalorder %s19, 0
    %p81 = por %p79, %p80
    %p82 = scmp.ne.s32.totalorder %s74, %s76
    %p83 = scmp.eq.s32.totalorder %s24, 1
    %p84 = por %p82, %p83
    %p85 = scmp.ne.s32.totalorder %s76, %s77
    %p86 = scmp.eq.s32.totalorder %s24, 0
    %p87 = por %p85, %p86
    %p88 = scmp.ne.s32.totalorder %s76, %s77
    %p89 = scmp.eq.s32.totalorder %s25, 1
    %p90 = por %p88, %p89
    %p92 = scmp.ne.s32.totalorder %s77, %s91
    %p93 = scmp.eq.s32.totalorder %s25, 0
    %p94 = por %p92, %p93
    %s96 = sadd.s32 %s95, 1
    %p99 = scmp.eq.s32.totalorder %s19, 1
    %p100 = scmp.ne.s32.totalorder %s95, %s97
    %p101 = scmp.eq.s32.totalorder %s19, 0
    %p102 = por %p100, %p101
    %p103 = scmp.ne.s32.totalorder %s95, %s97
    %p104 = scmp.eq.s32.totalorder %s24, 1
    %p105 = por %p103, %p104
    %p106 = scmp.ne.s32.totalorder %s97, %s98
    %p107 = scmp.eq.s32.totalorder %s24, 0
    %p108 = por %p106, %p107
    %p109 = scmp.ne.s32.totalorder %s97, %s98
    %p110 = scmp.eq.s32.totalorder %s25, 1
    %p111 = por %p109, %p110
    %p113 = scmp.ne.s32.totalorder %s98, %s112
    %p114 = scmp.eq.s32.totalorder %s25, 0
    %p115 = por %p113, %p114
    %s117 = sadd.s32 %s116, 1
    %p120 = scmp.eq.s32.totalorder %s19, 1
    %p121 = scmp.ne.s32.totalorder %s116, %s118
    %p122 = scmp.eq.s32.totalorder %s19, 0
    %p123 = por %p121, %p122
    %p124 = scmp.ne.s32.totalorder %s116, %s118
    %p125 = scmp.eq.s32.totalorder %s24, 1
    %p126 = por %p124, %p125
    %p127 = scmp.ne.s32.totalorder %s118, %s119
    %p128 = scmp.eq.s32.totalorder %s24, 0
    %p129 = por %p127, %p128
    %p130 = scmp.ne.s32.totalorder %s118, %s119
    %p131 = scmp.eq.s32.totalorder %s25, 1
    %p132 = por %p130, %p131
    %p134 = scmp.ne.s32.totalorder %s119, %s133
    %p135 = scmp.eq.s32.totalorder %s25, 0
    %p136 = por %p134, %p135
    %s138 = sadd.s32 %s137, 1
    %p141 = scmp.eq.s32.totalorder %s19, 1
    %p142 = scmp.ne.s32.totalorder %s137, %s139
    %p143 = scmp.eq.s32.totalorder %s19, 0
    %p144 = por %p142, %p143
    %p145 = scmp.ne.s32.totalorder %s137, %s139
    %p146 = scmp.eq.s32.totalorder %s24, 1
    %p147 = por %p145, %p146
    %p148 = scmp.ne.s32.totalorder %s139, %s140
    %p149 = scmp.eq.s32.totalorder %s24, 0
    %p150 = por %p148, %p149
    %p151 = scmp.ne.s32.totalorder %s139, %s140
    %p152 = scmp.eq.s32.totalorder %s25, 1
    %p153 = por %p151, %p152
    %p155 = scmp.ne.s32.totalorder %s140, %s154
    %p156 = scmp.eq.s32.totalorder %s25, 0
    %p157 = por %p155, %p156
    %s159 = sadd.s32 %s158, 1
    %p162 = scmp.eq.s32.totalorder %s19, 1
    %p163 = scmp.ne.s32.totalorder %s158, %s160
    %p164 = scmp.eq.s32.totalorder %s19, 0
    %p165 = por %p163, %p164
    %p166 = scmp.ne.s32.totalorder %s158, %s160
    %p167 = scmp.eq.s32.totalorder %s24, 1
    %p168 = por %p166, %p167
    %p169 = scmp.ne.s32.totalorder %s160, %s161
    %p170 = scmp.eq.s32.totalorder %s24, 0
    %p171 = por %p169, %p170
    %p172 = scmp.ne.s32.totalorder %s160, %s161
    %p173 = scmp.eq.s32.totalorder %s25, 1
    %p174 = por %p172, %p173
    %p176 = scmp.ne.s32.totalorder %s161, %s175
    %p177 = scmp.eq.s32.totalorder %s25, 0
    %p178 = por %p176, %p177
    %s180 = sadd.s32 %s179, 1
    %p183 = scmp.eq.s32.totalorder %s19, 1
    %p184 = scmp.ne.s32.totalorder %s179, %s181
    %p185 = scmp.eq.s32.totalorder %s19, 0
    %p186 = por %p184, %p185
    %p187 = scmp.ne.s32.totalorder %s179, %s181
    %p188 = scmp.eq.s32.totalorder %s24, 1
    %p189 = por %p187, %p188
    %p190 = scmp.ne.s32.totalorder %s181, %s182
    %p191 = scmp.eq.s32.totalorder %s24, 0
    %p192 = por %p190, %p191
    %p193 = scmp.ne.s32.totalorder %s181, %s182
    %p194 = scmp.eq.s32.totalorder %s25, 1
    %p195 = por %p193, %p194
    %p197 = scmp.ne.s32.totalorder %s182, %s196
    %p198 = scmp.eq.s32.totalorder %s25, 0
    %p199 = por %p197, %p198
    %s201 = sadd.s32 %s200, 1
    %p204 = scmp.eq.s32.totalorder %s19, 1
    %p205 = scmp.ne.s32.totalorder %s200, %s202
    %p206 = scmp.eq.s32.totalorder %s19, 0
    %p207 = por %p205, %p206
    %p208 = scmp.ne.s32.totalorder %s200, %s202
    %p209 = scmp.eq.s32.totalorder %s24, 1
    %p210 = por %p208, %p209
    %p211 = scmp.ne.s32.totalorder %s202, %s203
    %p212 = scmp.eq.s32.totalorder %s24, 0
    %p213 = por %p211, %p212
    %p214 = scmp.ne.s32.totalorder %s202, %s203
    %p215 = scmp.eq.s32.totalorder %s25, 1
    %p216 = por %p214, %p215
    %p218 = scmp.ne.s32.totalorder %s203, %s217
    %p219 = scmp.eq.s32.totalorder %s25, 0
    %p220 = por %p218, %p219
    %s222 = sadd.s32 %s221, 1
    %p225 = scmp.eq.s32.totalorder %s19, 1
    %p226 = scmp.ne.s32.totalorder %s221, %s223
    %p227 = scmp.eq.s32.totalorder %s19, 0
    %p228 = por %p226, %p227
    %p229 = scmp.ne.s32.totalorder %s221, %s223
    %p230 = scmp.eq.s32.totalorder %s24, 1
    %p231 = por %p229, %p230
    %p232 = scmp.ne.s32.totalorder %s223, %s224
    %p233 = scmp.eq.s32.totalorder %s24, 0
    %p234 = por %p232, %p233
    %p235 = scmp.ne.s32.totalorder %s223, %s224
    %p236 = scmp.eq.s32.totalorder %s25, 1
    %p237 = por %p235, %p236
    %p239 = scmp.ne.s32.totalorder %s224, %s238
    %p240 = scmp.eq.s32.totalorder %s25, 0
    %p241 = por %p239, %p240
    %s243 = sadd.s32 %s242, 1
    %p246 = scmp.eq.s32.totalorder %s19, 1
    %p247 = scmp.ne.s32.totalorder %s242, %s244
    %p248 = scmp.eq.s32.totalorder %s19, 0
    %p249 = por %p247, %p248
    %p250 = scmp.ne.s32.totalorder %s242, %s244
    %p251 = scmp.eq.s32.totalorder %s24, 1
    %p252 = por %p250, %p251
    %p253 = scmp.ne.s32.totalorder %s244, %s245
    %p254 = scmp.eq.s32.totalorder %s24, 0
    %p255 = por %p253, %p254
    %p256 = scmp.ne.s32.totalorder %s244, %s245
    %p257 = scmp.eq.s32.totalorder %s25, 1
    %p258 = por %p256, %p257
    %p260 = scmp.ne.s32.totalorder %s245, %s259
    %p261 = scmp.eq.s32.totalorder %s25, 0
    %p262 = por %p260, %p261
    %s264 = sadd.s32 %s263, 1
    %p267 = scmp.eq.s32.totalorder %s19, 1
    %p268 = scmp.ne.s32.totalorder %s263, %s265
    %p269 = scmp.eq.s32.totalorder %s19, 0
    %p270 = por %p268, %p269
    %p271 = scmp.ne.s32.totalorder %s263, %s265
    %p272 = scmp.eq.s32.totalorder %s24, 1
    %p273 = por %p271, %p272
    %p274 = scmp.ne.s32.totalorder %s265, %s266
    %p275 = scmp.eq.s32.totalorder %s24, 0
    %p276 = por %p274, %p275
    %p277 = scmp.ne.s32.totalorder %s265, %s266
    %p278 = scmp.eq.s32.totalorder %s25, 1
    %p279 = por %p277, %p278
    %p281 = scmp.ne.s32.totalorder %s266, %s280
    %p282 = scmp.eq.s32.totalorder %s25, 0
    %p283 = por %p281, %p282
    %s285 = sadd.s32 %s284, 1
    %p288 = scmp.eq.s32.totalorder %s19, 1
    %p289 = scmp.ne.s32.totalorder %s284, %s286
    %p290 = scmp.eq.s32.totalorder %s19, 0
    %p291 = por %p289, %p290
    %p292 = scmp.ne.s32.totalorder %s284, %s286
    %p293 = scmp.eq.s32.totalorder %s24, 1
    %p294 = por %p292, %p293
    %p295 = scmp.ne.s32.totalorder %s286, %s287
    %p296 = scmp.eq.s32.totalorder %s24, 0
    %p297 = por %p295, %p296
    %p298 = scmp.ne.s32.totalorder %s286, %s287
    %p299 = scmp.eq.s32.totalorder %s25, 1
    %p300 = por %p298, %p299
    %p302 = scmp.ne.s32.totalorder %s287, %s301
    %p303 = scmp.eq.s32.totalorder %s25, 0
    %p304 = por %p302, %p303
    %s305 = ssub.s32 %s19, %s26
    %p306 = scmp.eq.s32.totalorder %s305, 0
    %s308 = sadd.s32 %s307, 1
    %s309 = scalar_select %p306, %s307, %s308
    %p312 = pneg %p306
    %p313 = scmp.eq.s32.totalorder %s19, 1
    %p314 = por %p312, %p313
    %p315 = scmp.ne.s32.totalorder %s307, %s310
    %p316 = scmp.eq.s32.totalorder %s19, 0
    %p317 = por %p315, %p316
    %p318 = scmp.ne.s32.totalorder %s307, %s310
    %p319 = scmp.eq.s32.totalorder %s24, 1
    %p320 = por %p318, %p319
    %p321 = scmp.ne.s32.totalorder %s310, %s311
    %p322 = scmp.eq.s32.totalorder %s24, 0
    %p323 = por %p321, %p322
    %p324 = scmp.ne.s32.totalorder %s310, %s311
    %p325 = scmp.eq.s32.totalorder %s25, 1
    %p326 = por %p324, %p325
    %p328 = scmp.ne.s32.totalorder %s311, %s327
    %p329 = scmp.eq.s32.totalorder %s25, 0
    %p330 = por %p328, %p329
    %p331 = scmp.le.s32.totalorder 1, %s19
    %p332 = scmp.lt.s32.totalorder %s19, 3
    %p333 = pnand %p331, %p332
    %p334 = pneg %p333
    // Predicated region
    $region9: #{conformer_block.6} parent=5 // pred_check
      _
    $region10: #{conformer_block.6} parent=5 // pred_check_branch
      %336 = sbr.rel (%p333) target = $region12
    $region11: #{conformer_block.6} parent=5 // pred_region
      %s337 = ssub.s32 %s19, 1
      // Predicated region
      $region13: #{conformer_block.6} parent=11 // pred_check
        %p338 = pneg %p66
      $region14: #{conformer_block.6} parent=11 // pred_check_branch
        %340 = sbr.rel (%p338) target = $region16
      $region15: #{conformer_block.6} parent=11 // pred_region
        _
      $region16: #{conformer_block.6} parent=11 // pred_fallthru
        _
      // Predicated region
      $region17: #{conformer_block.6} parent=11 // pred_check
        %p341 = pneg %p87
      $region18: #{conformer_block.6} parent=11 // pred_check_branch
        %343 = sbr.rel (%p341) target = $region20
      $region19: #{conformer_block.6} parent=11 // pred_region
        _
      $region20: #{conformer_block.6} parent=11 // pred_fallthru
        _
      // Predicated region
      $region21: #{conformer_block.6} parent=11 // pred_check
        %p344 = pneg %p108
      $region22: #{conformer_block.6} parent=11 // pred_check_branch
        %346 = sbr.rel (%p344) target = $region24
      $region23: #{conformer_block.6} parent=11 // pred_region
        _
      $region24: #{conformer_block.6} parent=11 // pred_fallthru
        _
      // Predicated region
      $region25: #{conformer_block.6} parent=11 // pred_check
        %p347 = pneg %p129
      $region26: #{conformer_block.6} parent=11 // pred_check_branch
        %349 = sbr.rel (%p347) target = $region28
      $region27: #{conformer_block.6} parent=11 // pred_region
        _
      $region28: #{conformer_block.6} parent=11 // pred_fallthru
        _
      // Predicated region
      $region29: #{conformer_block.6} parent=11 // pred_check
        %p350 = pneg %p150
      $region30: #{conformer_block.6} parent=11 // pred_check_branch
        %352 = sbr.rel (%p350) target = $region32
      $region31: #{conformer_block.6} parent=11 // pred_region
        _
      $region32: #{conformer_block.6} parent=11 // pred_fallthru
        _
      // Predicated region
      $region33: #{conformer_block.6} parent=11 // pred_check
        %p353 = pneg %p171
      $region34: #{conformer_block.6} parent=11 // pred_check_branch
        %355 = sbr.rel (%p353) target = $region36
      $region35: #{conformer_block.6} parent=11 // pred_region
        _
      $region36: #{conformer_block.6} parent=11 // pred_fallthru
        _
      // Predicated region
      $region37: #{conformer_block.6} parent=11 // pred_check
        %p356 = pneg %p192
      $region38: #{conformer_block.6} parent=11 // pred_check_branch
        %358 = sbr.rel (%p356) target = $region40
      $region39: #{conformer_block.6} parent=11 // pred_region
        _
      $region40: #{conformer_block.6} parent=11 // pred_fallthru
        _
      // Predicated region
      $region41: #{conformer_block.6} parent=11 // pred_check
        %p359 = pneg %p213
      $region42: #{conformer_block.6} parent=11 // pred_check_branch
        %361 = sbr.rel (%p359) target = $region44
      $region43: #{conformer_block.6} parent=11 // pred_region
        _
      $region44: #{conformer_block.6} parent=11 // pred_fallthru
        _
      // Predicated region
      $region45: #{conformer_block.6} parent=11 // pred_check
        %p362 = pneg %p234
      $region46: #{conformer_block.6} parent=11 // pred_check_branch
        %364 = sbr.rel (%p362) target = $region48
      $region47: #{conformer_block.6} parent=11 // pred_region
        _
      $region48: #{conformer_block.6} parent=11 // pred_fallthru
        _
      // Predicated region
      $region49: #{conformer_block.6} parent=11 // pred_check
        %p365 = pneg %p255
      $region50: #{conformer_block.6} parent=11 // pred_check_branch
        %367 = sbr.rel (%p365) target = $region52
      $region51: #{conformer_block.6} parent=11 // pred_region
        _
      $region52: #{conformer_block.6} parent=11 // pred_fallthru
        _
      // Predicated region
      $region53: #{conformer_block.6} parent=11 // pred_check
        %p368 = pneg %p276
      $region54: #{conformer_block.6} parent=11 // pred_check_branch
        %370 = sbr.rel (%p368) target = $region56
      $region55: #{conformer_block.6} parent=11 // pred_region
        _
      $region56: #{conformer_block.6} parent=11 // pred_fallthru
        _
      // Predicated region
      $region57: #{conformer_block.6} parent=11 // pred_check
        %p371 = pneg %p297
      $region58: #{conformer_block.6} parent=11 // pred_check_branch
        %373 = sbr.rel (%p371) target = $region60
      $region59: #{conformer_block.6} parent=11 // pred_region
        _
      $region60: #{conformer_block.6} parent=11 // pred_fallthru
        _
    $region12: #{conformer_block.6} parent=5 // pred_fallthru
      _
    %p374 = scmp.lt.s32.totalorder %s19, 2
    // Predicated region
    $region61: #{conformer_block.6} parent=5 // pred_check
      %p375 = pneg %p374
    $region62: #{conformer_block.6} parent=5 // pred_check_branch
      %377 = sbr.rel (%p375) target = $region64
    $region63: #{conformer_block.6} parent=5 // pred_region
      // Predicated region
      $region65: #{conformer_block.6} parent=63 // pred_check
        %p378 = pneg %p39
      $region66: #{conformer_block.6} parent=63 // pred_check_branch
        %380 = sbr.rel (%p378) target = $region68
      $region67: #{conformer_block.6} parent=63 // pred_region
        %p381 = scmp.lt.s32.totalorder %s19, 1
        %s382 = scalar_select %p381, %s19, 1
        %s383 = smul.addr %s382, 8
        %s384 = scalar_lea.vmem %s0, %s383
      $region68: #{conformer_block.6} parent=63 // pred_fallthru
        _
    $region64: #{conformer_block.6} parent=5 // pred_fallthru
      _
    %p385 = scmp.le.s32.totalorder 1, %s19
    %p386 = scmp.lt.s32.totalorder %s19, 3
    %p387 = pnand %p385, %p386
    %p388 = pneg %p387
    // Predicated region
    $region69: #{conformer_block.6} parent=5 // pred_check
      _
    $region70: #{conformer_block.6} parent=5 // pred_check_branch
      %390 = sbr.rel (%p387) target = $region72
    $region71: #{conformer_block.6} parent=5 // pred_region
      %s391 = ssub.s32 %s19, 1
      %p392 = scmp.lt.s32.totalorder %s24, 1
      %s393 = scalar_select %p392, %s24, 1
      %s394 = smul.addr %s393, 8
      %s395 = scalar_lea.vmem %s0, %s394
      %p396 = pneg %p45
      %p397 = pneg %p42
      %p398 = pneg %p66
      %p399 = pneg %p63
      %p400 = pneg %p87
      %p401 = pneg %p84
      %p402 = pneg %p108
      %p403 = pneg %p105
      %p404 = pneg %p129
      %p405 = pneg %p126
      %p406 = pneg %p150
      %p407 = pneg %p147
      %p408 = pneg %p171
      %p409 = pneg %p168
      %p410 = pneg %p192
      %p411 = pneg %p189
      %p412 = pneg %p213
      %p413 = pneg %p210
      %p414 = pneg %p234
      %p415 = pneg %p231
      %p416 = pneg %p255
      %p417 = pneg %p252
      %p418 = pneg %p276
      %p419 = pneg %p273
      %p420 = pneg %p297
      %p421 = pneg %p294
      %p422 = pneg %p323
      %p423 = pneg %p320
      %p424 = scmp.lt.s32.totalorder %s24, 1
      %s425 = scalar_select %p424, %s24, 1
      %s426 = smul.addr %s425, 8
      %s427 = scalar_lea.vmem %s13, %s426
      %p428 = scmp.lt.s32.totalorder %s24, 1
      %s429 = scalar_select %p428, %s24, 1
      %s430 = smul.addr %s429, 8
      %s431 = scalar_lea.vmem %s0, %s430
      %p432 = scmp.lt.s32.totalorder %s24, 1
      %s433 = scalar_select %p432, %s24, 1
      %s434 = smul.addr %s433, 8
      %s435 = scalar_lea.vmem %s13, %s434
      %v437 = vld [vmem:[%s431] sm:$0xff]
      %v438 = vld [vmem:[%s1] sm:$0x1]
      %v439 = vld [vmem:[%s2] sm:$0x1]
      %vm440 = vcmask 261120
      %v441 = vsel %vm440, %v437, 0.0
      %442 = vadd.xlane.f32.xlu0 %v441
      %v443 = vpop.xlane.xlu0 %442
      %v444 = vrcp.pop 32.0
      %v445 = vmul.f32 %v443, %v444
      %v446 = vsub.f32 %v437, %v445
      %v447 = vmul.f32 %v446, %v446
      %v448 = vsel %vm440, %v447, 0.0
      %449 = vadd.xlane.f32.xlu0 %v448
      %v450 = vpop.xlane.xlu0 %449
      %v451 = vmul.f32 %v450, %v444
      %v452 = vadd.f32 %v451, 1e-05
      %v453 = vrsqrt.pop %v452
      %v454 = vmul.f32 %v446, %v453
      %v456 = vlaneseq
      %v457 = vshrl.u32 %v456, 7
      %v458 = vsub.s32 0, %v457
      %v459 = vrot.slane %v438, %v458
      %v461 = vmul.f32 %v454, %v459
      %v463 = vlaneseq
      %v464 = vshrl.u32 %v463, 7
      %v465 = vsub.s32 0, %v464
      %v466 = vrot.slane %v439, %v465
      %v468 = vadd.f32 %v461, %v466
      %v469 = vpack.c.bf16 %v468, %v468
      %v470 = vld [vmem:[%s3] sm:$0xf]
      %v471 = vld [vmem:[%s3 + $0x4] sm:$0xf]
      %v472 = vld [vmem:[%s3 + $0x8] sm:$0xf]
      %v473 = vld [vmem:[%s3 + $0xc] sm:$0xf]
      %v474 = vld [vmem:[%s4] sm:$0x1]
      %v476 = vlaneseq
      %v477 = vshrl.u32 %v476, 7
      %v478 = vsub.s32 0, %v477
      %v479 = vrot.slane %v474, %v478
      %v485 = vunpack.c.l.b16 %v470
      %v486 = vunpack.c.l.b16 %v471
      %v487 = vunpack.c.l.b16 %v472
      %v488 = vunpack.c.l.b16 %v473
      %v489 = vpack.c.b16 %v486, %v485
      %v490 = vpack.c.b16 %v488, %v487
      %v494 = vsel %vm440, %v469, 0
      %496 = vmatprep.subr.bf16.mxu0 0
      %497 = vmatpush1.bf16.msra.mxu0 %v489
      %498 = vmatprep.subr.bf16.mxu0 0
      %499 = vmatpush1.bf16.msra.mxu0 %v490
      %500 = vmatprep.subr.bf16.mxu0 0
      %501 = vmatpush1.bf16.msra.mxu0 0
      %502 = vmatprep.subr.bf16.mxu0 0
      %503 = vmatpush1.bf16.msra.mxu0 0
      %504 = vmatprep.subr.bf16.mxu0 0
      %505 = vmatpush1.bf16.msra.mxu0 0
      %506 = vmatprep.subr.bf16.mxu0 0
      %507 = vmatpush1.bf16.msra.mxu0 0
      %508 = vmatprep.subr.bf16.mxu0 0
      %509 = vmatpush1.bf16.msra.mxu0 0
      %510 = vmatprep.subr.bf16.mxu0 0
      %511 = vmatpush1.bf16.msra.mxu0 0
      %512 = vmatprep.subr.bf16.mxu0 0
      %513 = vmatpush1.bf16.msra.mxu0 0
      %514 = vmatprep.subr.bf16.mxu0 0
      %515 = vmatpush1.bf16.msra.mxu0 0
      %516 = vmatprep.subr.bf16.mxu0 0
      %517 = vmatpush1.bf16.msra.mxu0 0
      %518 = vmatprep.subr.bf16.mxu0 0
      %519 = vmatpush1.bf16.msra.mxu0 0
      %520 = vmatprep.subr.bf16.mxu0 0
      %521 = vmatpush1.bf16.msra.mxu0 0
      %522 = vmatprep.subr.bf16.mxu0 0
      %523 = vmatpush1.bf16.msra.mxu0 0
      %524 = vmatprep.subr.bf16.mxu0 0
      %525 = vmatpush1.bf16.msra.mxu0 0
      %526 = vmatprep.subr.bf16.mxu0 0
      %527 = vmatpush1.bf16.msra.mxu0 0
      %528 = vmatprep.mubr.bf16.mxu0 0
      %529 = vmatmul.mubr.bf16.gmra.mrb[0].mxu0 %v494
      %v530 = vpop.f32.mrb[0].mxu0
      %v531 = vadd.f32 %v479, %v530
      %v532 = vpop.f32.mrb[0].mxu0
      %v533 = vpop.f32.mrb[0].mxu0
      %v534 = vpop.f32.mrb[0].mxu0
      %535 = vdwg.mxu0
      %v536 = vmul.f32 %v531, 0.5
      %v537 = vmul.f32 %v531, 0.70710677
      %v538 = vand.u32 2147483647, %v537
      %v539 = vmul.f32 %v538, 0.3275911
      %v540 = vadd.f32 %v539, 1.0
      %v541 = vrcp.pop %v540
      %v542 = vmul.f32 1.0, %v541
      %v543 = vmul.f32 %v542, 1.0614054
      %v544 = vadd.f32 %v543, -1.4531521
      %v545 = vmul.f32 %v544, %v542
      %v546 = vadd.f32 %v545, 1.4214138
      %v547 = vmul.f32 %v546, %v542
      %v548 = vadd.f32 %v547, -0.28449672
      %v549 = vmul.f32 %v548, %v542
      %v550 = vadd.f32 %v549, 0.2548296
      %v551 = vmul.f32 %v550, %v542
      %v552 = vsub.f32 0.0, %v538
      %v553 = vmul.f32 %v552, %v538
      %v554 = vmul.f32 %v553, 1.442695
      %v555 = vpow.pop %v554
      %v556 = vmul.f32 %v551, %v555
      %v557 = vsub.f32 1.0, %v556
      %vm558 = vcmp.ge.f32.partialorder %v537, 0.0
      %v559 = vsub.f32 0.0, %v557
      %v560 = vsel %vm558, %v557, %v559
      %v561 = vadd.f32 %v560, 1.0
      %v562 = vmul.f32 %v536, %v561
      %v563 = vld [vmem:[%s5] sm:$0x7]
      %v565 = vrot.slane %v562, 7
      %vm567 = vcmask 1040384
      %v568 = vsel %vm567, 0.0, %v565
      %v569 = vlaneseq
      %v570 = vshrl.u32 %v569, 7
      %v571 = vsub.s32 0, %v570
      %v572 = vrot.slane %v563, %v571
      %v573 = vmul.f32 %v568, %v572
      %v574 = vadd.f32 %v573, 0.0
      %v575 = vlaneseq
      %v576 = vshrl.u32 %v575, 7
      %v577 = vsub.s32 1, %v576
      %v578 = vrot.slane %v563, %v577
      %v579 = vmul.f32 %v562, %v578
      %v580 = vadd.f32 %v574, %v579
      %v581 = vrot.slane %v562, 1
      %vm583 = vcmask 1046528
      %v584 = vsel %vm583, %v581, 0.0
      %v585 = vlaneseq
      %v586 = vshrl.u32 %v585, 7
      %v587 = vsub.s32 2, %v586
      %v588 = vrot.slane %v563, %v587
      %v589 = vmul.f32 %v584, %v588
      %v590 = vadd.f32 %v580, %v589
      %v591 = vld [vmem:[%s6] sm:$0x1]
      %v593 = vlaneseq
      %v594 = vshrl.u32 %v593, 7
      %v595 = vsub.s32 0, %v594
      %v596 = vrot.slane %v591, %v595
      %v598 = vadd.f32 %v590, %v596
      %v599 = vld [vmem:[%s9] sm:$0x1]
      %v601 = vlaneseq
      %v602 = vshrl.u32 %v601, 7
      %v603 = vsub.s32 0, %v602
      %v604 = vrot.slane %v599, %v603
      %v606 = vsub.f32 %v598, %v604
      %v607 = vld [vmem:[%s10] sm:$0x1]
      %v608 = vadd.f32 %v607, 1e-05
      %v609 = vrsqrt.pop %v608
      %v611 = vlaneseq
      %v612 = vshrl.u32 %v611, 7
      %v613 = vsub.s32 0, %v612
      %v614 = vrot.slane %v609, %v613
      %v616 = vmul.f32 %v606, %v614
      %v617 = vld [vmem:[%s7] sm:$0x1]
      %v619 = vlaneseq
      %v620 = vshrl.u32 %v619, 7
      %v621 = vsub.s32 0, %v620
      %v622 = vrot.slane %v617, %v621
      %v624 = vmul.f32 %v616, %v622
      %v625 = vld [vmem:[%s8] sm:$0x1]
      %v627 = vlaneseq
      %v628 = vshrl.u32 %v627, 7
      %v629 = vsub.s32 0, %v628
      %v630 = vrot.slane %v625, %v629
      %v632 = vadd.f32 %v624, %v630
      %v633 = vxor.u32 %v632, 2147483648
      %v634 = vmul.f32 %v633, 1.442695
      %v635 = vpow.pop %v634
      %v636 = vadd.f32 %v635, 1.0
      %v637 = vrcp.pop %v636
      %v638 = vmul.f32 1.0, %v637
      %v639 = vmul.f32 %v632, %v638
      %v640 = vpack.c.bf16 %v639, %v639
      %v641 = vld [vmem:[%s11] sm:$0xf]
      %v642 = vld [vmem:[%s11 + $0x4] sm:$0xf]
      %v643 = vld [vmem:[%s11 + $0x8] sm:$0xf]
      %v644 = vld [vmem:[%s11 + $0xc] sm:$0xf]
      %v645 = vld [vmem:[%s11 + $0x10] sm:$0xf]
      %v646 = vld [vmem:[%s11 + $0x14] sm:$0xf]
      %v647 = vld [vmem:[%s11 + $0x18] sm:$0xf]
      %v648 = vld [vmem:[%s11 + $0x1c] sm:$0xf]
      %v649 = vld [vmem:[%s12] sm:$0x1]
      %v651 = vlaneseq
      %v652 = vshrl.u32 %v651, 7
      %v653 = vsub.s32 0, %v652
      %v654 = vrot.slane %v649, %v653
      %v664 = vunpack.c.l.b16 %v641
      %v665 = vunpack.c.l.b16 %v642
      %v666 = vunpack.c.l.b16 %v643
      %v667 = vunpack.c.l.b16 %v644
      %v668 = vunpack.c.l.b16 %v645
      %v669 = vunpack.c.l.b16 %v646
      %v670 = vunpack.c.l.b16 %v647
      %v671 = vunpack.c.l.b16 %v648
      %v672 = vpack.c.b16 %v665, %v664
      %v673 = vpack.c.b16 %v667, %v666
      %v674 = vpack.c.b16 %v669, %v668
      %v675 = vpack.c.b16 %v671, %v670
      %vm680 = vcmask 523264
      %v682 = vsel %vm680, %v640, 0
      %684 = vmatprep.subr.bf16.mxu0 0
      %685 = vmatpush1.bf16.msra.mxu0 %v672
      %686 = vmatprep.subr.bf16.mxu0 0
      %687 = vmatpush1.bf16.msra.mxu0 %v673
      %688 = vmatprep.subr.bf16.mxu0 0
      %689 = vmatpush1.bf16.msra.mxu0 %v674
      %690 = vmatprep.subr.bf16.mxu0 0
      %691 = vmatpush1.bf16.msra.mxu0 %v675
      %692 = vmatprep.subr.bf16.mxu0 0
      %693 = vmatpush1.bf16.msra.mxu0 0
      %694 = vmatprep.subr.bf16.mxu0 0
      %695 = vmatpush1.bf16.msra.mxu0 0
      %696 = vmatprep.subr.bf16.mxu0 0
      %697 = vmatpush1.bf16.msra.mxu0 0
      %698 = vmatprep.subr.bf16.mxu0 0
      %699 = vmatpush1.bf16.msra.mxu0 0
      %700 = vmatprep.subr.bf16.mxu0 0
      %701 = vmatpush1.bf16.msra.mxu0 0
      %702 = vmatprep.subr.bf16.mxu0 0
      %703 = vmatpush1.bf16.msra.mxu0 0
      %704 = vmatprep.subr.bf16.mxu0 0
      %705 = vmatpush1.bf16.msra.mxu0 0
      %706 = vmatprep.subr.bf16.mxu0 0
      %707 = vmatpush1.bf16.msra.mxu0 0
      %708 = vmatprep.subr.bf16.mxu0 0
      %709 = vmatpush1.bf16.msra.mxu0 0
      %710 = vmatprep.subr.bf16.mxu0 0
      %711 = vmatpush1.bf16.msra.mxu0 0
      %712 = vmatprep.subr.bf16.mxu0 0
      %713 = vmatpush1.bf16.msra.mxu0 0
      %714 = vmatprep.subr.bf16.mxu0 0
      %715 = vmatpush1.bf16.msra.mxu0 0
      %716 = vmatprep.mubr.bf16.mxu0 0
      %717 = vmatmul.mubr.bf16.gmra.mrb[0].mxu0 %v682
      %v718 = vpop.f32.mrb[0].mxu0
      %v719 = vadd.f32 %v654, %v718
      %v720 = vpop.f32.mrb[0].mxu0
      %v721 = vpop.f32.mrb[0].mxu0
      %v722 = vpop.f32.mrb[0].mxu0
      %723 = vdwg.mxu0
      %v724 = vadd.f32 %v719, %v437
      %725 = vst.msk [vmem:[%s435] sm:$0xff] %vm440, %v724
      %p726 = scmp.lt.s32.totalorder %s24, 1
      %s727 = scalar_select %p726, %s24, 1
      %s728 = smul.addr %s727, 8
      %s729 = scalar_lea.vmem %s13, %s728
      // Predicated region
      $region73: #{conformer_block.6} parent=71 // pred_check
        %p730 = pneg %p320
      $region74: #{conformer_block.6} parent=71 // pred_check_branch
        %732 = sbr.rel (%p730) target = $region76
      $region75: #{conformer_block.6} parent=71 // pred_region
        _
      $region76: #{conformer_block.6} parent=71 // pred_fallthru
        _
    $region72: #{conformer_block.6} parent=5 // pred_fallthru
      _
    %p733 = scmp.le.s32.totalorder 2, %s19
    // Predicated region
    $region77: #{conformer_block.6} parent=5 // pred_check
      %p734 = pneg %p733
    $region78: #{conformer_block.6} parent=5 // pred_check_branch
      %736 = sbr.rel (%p734) target = $region80
    $region79: #{conformer_block.6} parent=5 // pred_region
      %s737 = ssub.s32 %s19, 2
      // Predicated region
      $region81: #{conformer_block.6} parent=79 // pred_check
        %p738 = pneg %p326
      $region82: #{conformer_block.6} parent=79 // pred_check_branch
        %740 = sbr.rel (%p738) target = $region84
      $region83: #{conformer_block.6} parent=79 // pred_region
        %p741 = scmp.lt.s32.totalorder %s25, 1
        %s742 = scalar_select %p741, %s25, 1
        %s743 = smul.addr %s742, 8
        %s744 = scalar_lea.vmem %s13, %s743
      $region84: #{conformer_block.6} parent=79 // pred_fallthru
        _
    $region80: #{conformer_block.6} parent=5 // pred_fallthru
      _
  $region6: #{conformer_block.6} parent=0 // loop_footer
    %s23 = sadd.s32 1, %s19
  $region7: #{conformer_block.6} parent=0 // loop_footer_branch
    %18 = sbr.rel target = $region3
  $region8: #{conformer_block.6} parent=0 // loop_exit
    _

</llo_original>
